<compile_context>
chip_gen: v7x
topology: tpu7x:2x2x1
jax: 0.10.0
libtpu: 0.0.40
codegen_flags: <defaults>
</compile_context>

<pallas_src>
import functools

import jax
import jax.numpy as jnp
from jax.experimental import pallas as pl
from jax.experimental.pallas import tpu as pltpu

INPUT_NODE = 4
NEURONS = 512
NSTEPS = 801
OUTPUT_NODE = NSTEPS - 1          # 800
OUT_PADDED = 896                  # 7 * 128: lane-dense fc4 / output tile


def _round_up(n, m):
    return ((n + m - 1) // m) * m


def _mlp_kernel(x_ref, w1_ref, b1_ref, w2_ref, b2_ref,
                w3_ref, b3_ref, w4_ref, b4_ref, o_ref):
    """Fused 4-layer MLP: VPU fc1 + three bf16 MXU matmuls, all in VMEM."""
    x = x_ref[...]                       # (block_b, 4)   f32
    w1 = w1_ref[...]                     # (4, 512)       f32

    # fc1: K=4 would waste the MXU contraction depth and lanes, so do it as
    # four broadcast-FMAs on the VPU (outer-product accumulation), in f32.
    h = b1_ref[...]
    h = h + x[:, 0:1] * w1[0:1, :]
    h = h + x[:, 1:2] * w1[1:2, :]
    h = h + x[:, 2:3] * w1[2:3, :]
    h = h + x[:, 3:4] * w1[3:4, :]
    h = jnp.maximum(h, 0.0)                                    # f32 ReLU

    # fc2 / fc3 / fc4: bf16 operands on the MXU, f32 accumulation.
    # Bias-add + ReLU kept in f32; cast to bf16 only at the dot inputs.
    h = jnp.dot(h.astype(jnp.bfloat16), w2_ref[...],
                preferred_element_type=jnp.float32) + b2_ref[...]
    h = jnp.maximum(h, 0.0)
    h = jnp.dot(h.astype(jnp.bfloat16), w3_ref[...],
                preferred_element_type=jnp.float32) + b3_ref[...]
    h = jnp.maximum(h, 0.0)
    out = jnp.dot(h.astype(jnp.bfloat16), w4_ref[...],
                  preferred_element_type=jnp.float32) + b4_ref[...]
    o_ref[...] = out.astype(o_ref.dtype)


@functools.partial(jax.jit, static_argnames=("block_b",))
def mlp_forward(x, params, block_b=256):
    """x: (B, INPUT_NODE) float32.  params: dict of weights/biases.

    block_b=256 fills the v6e/v7x MXU M dimension; 128 is a fine choice on
    v5e. Small batches are handled by clamping the tile and zero-padding.
    """
    B = x.shape[0]
    block = min(block_b, _round_up(max(B, 1), 8))
    b_pad = _round_up(B, block)
    if b_pad != B:
        x = jnp.pad(x, ((0, b_pad - B), (0, 0)))

    w1, b1 = params["w1"], params["b1"]
    w2, b2 = params["w2"], params["b2"]
    w3, b3 = params["w3"], params["b3"]
    w4, b4 = params["w4"], params["b4"]

    # Pad fc4's N dim (800 = 6*128 + 32) up to 896 = 7*128 for unmasked,
    # lane-dense stores and full MXU N tiles; sliced back below.
    w4p = jnp.pad(w4, ((0, 0), (0, OUT_PADDED - OUTPUT_NODE)))
    b4p = jnp.pad(b4, ((0, 0), (0, OUT_PADDED - OUTPUT_NODE)))

    grid = (b_pad // block,)
    full = lambda i: (0, 0)   # weights/biases fully VMEM-resident, DMA'd once

    flops = 2 * b_pad * (INPUT_NODE * NEURONS
                         + 2 * NEURONS * NEURONS
                         + NEURONS * OUT_PADDED)
    bytes_accessed = (x.size * 4 + b_pad * OUT_PADDED * 4
                      + w1.size * 4 + b1.size * 4
                      + w2.size * 2 + b2.size * 4
                      + w3.size * 2 + b3.size * 4
                      + w4p.size * 2 + b4p.size * 4)

    out = pl.pallas_call(
        _mlp_kernel,
        out_shape=jax.ShapeDtypeStruct((b_pad, OUT_PADDED), jnp.float32),
        grid_spec=pltpu.PrefetchScalarGridSpec(
            num_scalar_prefetch=0,
            grid=grid,
            in_specs=[
                pl.BlockSpec((block, INPUT_NODE), lambda i: (i, 0)),  # x tile
                pl.BlockSpec((INPUT_NODE, NEURONS), full),            # w1 (f32)
                pl.BlockSpec((1, NEURONS), full),                     # b1 (f32)
                pl.BlockSpec((NEURONS, NEURONS), full),               # w2 (bf16)
                pl.BlockSpec((1, NEURONS), full),                     # b2 (f32)
                pl.BlockSpec((NEURONS, NEURONS), full),               # w3 (bf16)
                pl.BlockSpec((1, NEURONS), full),                     # b3 (f32)
                pl.BlockSpec((NEURONS, OUT_PADDED), full),            # w4 (bf16)
                pl.BlockSpec((1, OUT_PADDED), full),                  # b4 (f32)
            ],
            out_specs=pl.BlockSpec((block, OUT_PADDED), lambda i: (i, 0)),
        ),
        compiler_params=pltpu.CompilerParams(
            dimension_semantics=("parallel",),           # megacore-shardable
            vmem_limit_bytes=32 * 1024 * 1024,           # fits v7x's 64 MiB/TC
        ),
        cost_estimate=pl.CostEstimate(
            flops=flops, transcendentals=0, bytes_accessed=bytes_accessed),
    )(x, w1, b1, w2, b2, w3, b3, w4p, b4p)

    return out[:B, :OUTPUT_NODE]


def init_params(key):
    """PyTorch nn.Linear-style init: U(-k, k), k = 1/sqrt(fan_in).

    Large weights (fc2/fc3/fc4) are stored in bf16 (MXU-native); the tiny fc1
    weight and all biases stay f32.
    """
    def linear(key, fan_in, fan_out, w_dtype):
        kw, kb = jax.random.split(key)
        bound = 1.0 / jnp.sqrt(jnp.float32(fan_in))
        w = jax.random.uniform(kw, (fan_in, fan_out), jnp.float32, -bound, bound)
        b = jax.random.uniform(kb, (1, fan_out), jnp.float32, -bound, bound)
        return w.astype(w_dtype), b

    k1, k2, k3, k4 = jax.random.split(key, 4)
    w1, b1 = linear(k1, INPUT_NODE, NEURONS, jnp.float32)
    w2, b2 = linear(k2, NEURONS, NEURONS, jnp.bfloat16)
    w3, b3 = linear(k3, NEURONS, NEURONS, jnp.bfloat16)
    w4, b4 = linear(k4, NEURONS, OUTPUT_NODE, jnp.bfloat16)
    return dict(w1=w1, b1=b1, w2=w2, b2=b2, w3=w3, b3=b3, w4=w4, b4=b4)


def mlp_reference(x, p):
    """Pure-JAX reference matching the kernel's quantization points exactly
    (bf16 weights / dot inputs, f32 accumulation and elementwise)."""
    f32 = jnp.float32
    h = p["b1"] + sum(x[:, k:k + 1] * p["w1"][k:k + 1, :]
                      for k in range(INPUT_NODE))
    h = jnp.maximum(h, 0.0)
    h = jnp.maximum(
        jnp.dot(h.astype(jnp.bfloat16).astype(f32), p["w2"].astype(f32))
        + p["b2"], 0.0)
    h = jnp.maximum(
        jnp.dot(h.astype(jnp.bfloat16).astype(f32), p["w3"].astype(f32))
        + p["b3"], 0.0)
    return (jnp.dot(h.astype(jnp.bfloat16).astype(f32), p["w4"].astype(f32))
            + p["b4"])


if __name__ == "__main__":
    key = jax.random.PRNGKey(0)
    kp, kx = jax.random.split(key)
    params = init_params(kp)

    batch = 5   # deliberately not a multiple of 8: exercises wrapper padding
    x = jax.random.normal(kx, (batch, INPUT_NODE), jnp.float32)

    out = mlp_forward(x, params)
    out = jax.block_until_ready(out)

    ref = mlp_reference(x, params)
    assert out.shape == (batch, OUTPUT_NODE), out.shape
    max_err = float(jnp.max(jnp.abs(out - ref)))
    assert jnp.allclose(out, ref, atol=2e-3, rtol=2e-3), max_err

    print("KERNEL_OK")
</pallas_src>

<mosaic_0001>
module attributes {stable_mosaic.version = 11 : i64} {
  func.func @_mlp_kernel(%arg0: i32, %arg1: memref<8x4xf32, #tpu.memory_space<vmem>>, %arg2: memref<4x512xf32, #tpu.memory_space<vmem>>, %arg3: memref<1x512xf32, #tpu.memory_space<vmem>>, %arg4: memref<512x512xbf16, #tpu.memory_space<vmem>>, %arg5: memref<1x512xf32, #tpu.memory_space<vmem>>, %arg6: memref<512x512xbf16, #tpu.memory_space<vmem>>, %arg7: memref<1x512xf32, #tpu.memory_space<vmem>>, %arg8: memref<512x896xbf16, #tpu.memory_space<vmem>>, %arg9: memref<1x896xf32, #tpu.memory_space<vmem>>, %arg10: memref<8x896xf32, #tpu.memory_space<vmem>>) attributes {dimension_semantics = [#tpu.dimension_semantics<parallel>], iteration_bounds = array<i64: 1>, scalar_prefetch = 0 : i64, scratch_operands = 0 : i64, tpu.core_type = #tpu.core_type<tc>, window_params = [{transform_indices = @transform_0, window_bounds = array<i64: 8, 4>}, {pipeline_mode = #tpu.pipeline_mode<synchronous>, transform_indices = @transform_1, window_bounds = array<i64: 4, 512>}, {pipeline_mode = #tpu.pipeline_mode<synchronous>, transform_indices = @transform_2, window_bounds = array<i64: 1, 512>}, {pipeline_mode = #tpu.pipeline_mode<synchronous>, transform_indices = @transform_3, window_bounds = array<i64: 512, 512>}, {pipeline_mode = #tpu.pipeline_mode<synchronous>, transform_indices = @transform_4, window_bounds = array<i64: 1, 512>}, {pipeline_mode = #tpu.pipeline_mode<synchronous>, transform_indices = @transform_5, window_bounds = array<i64: 512, 512>}, {pipeline_mode = #tpu.pipeline_mode<synchronous>, transform_indices = @transform_6, window_bounds = array<i64: 1, 512>}, {pipeline_mode = #tpu.pipeline_mode<synchronous>, transform_indices = @transform_7, window_bounds = array<i64: 512, 896>}, {pipeline_mode = #tpu.pipeline_mode<synchronous>, transform_indices = @transform_8, window_bounds = array<i64: 1, 896>}, {transform_indices = @transform_9, window_bounds = array<i64: 8, 896>}]} {
    %c0 = arith.constant 0 : index
    %c0_0 = arith.constant 0 : index
    %0 = vector.load %arg1[%c0, %c0_0] : memref<8x4xf32, #tpu.memory_space<vmem>>, vector<8x4xf32>
    %c0_1 = arith.constant 0 : index
    %c0_2 = arith.constant 0 : index
    %1 = vector.load %arg2[%c0_1, %c0_2] : memref<4x512xf32, #tpu.memory_space<vmem>>, vector<4x512xf32>
    %c0_3 = arith.constant 0 : index
    %c0_4 = arith.constant 0 : index
    %2 = vector.load %arg3[%c0_3, %c0_4] : memref<1x512xf32, #tpu.memory_space<vmem>>, vector<1x512xf32>
    %3 = vector.extract_strided_slice %0 {offsets = [0, 0], sizes = [8, 1], strides = [1, 1]} : vector<8x4xf32> to vector<8x1xf32>
    %4 = vector.extract_strided_slice %1 {offsets = [0, 0], sizes = [1, 512], strides = [1, 1]} : vector<4x512xf32> to vector<1x512xf32>
    %5 = vector.broadcast %3 : vector<8x1xf32> to vector<8x512xf32>
    %6 = vector.broadcast %4 : vector<1x512xf32> to vector<8x512xf32>
    %7 = arith.mulf %5, %6 : vector<8x512xf32>
    %8 = vector.broadcast %2 : vector<1x512xf32> to vector<8x512xf32>
    %9 = arith.addf %8, %7 : vector<8x512xf32>
    %10 = vector.extract_strided_slice %0 {offsets = [0, 1], sizes = [8, 1], strides = [1, 1]} : vector<8x4xf32> to vector<8x1xf32>
    %11 = vector.extract_strided_slice %1 {offsets = [1, 0], sizes = [1, 512], strides = [1, 1]} : vector<4x512xf32> to vector<1x512xf32>
    %12 = vector.broadcast %10 : vector<8x1xf32> to vector<8x512xf32>
    %13 = vector.broadcast %11 : vector<1x512xf32> to vector<8x512xf32>
    %14 = arith.mulf %12, %13 : vector<8x512xf32>
    %15 = arith.addf %9, %14 : vector<8x512xf32>
    %16 = vector.extract_strided_slice %0 {offsets = [0, 2], sizes = [8, 1], strides = [1, 1]} : vector<8x4xf32> to vector<8x1xf32>
    %17 = vector.extract_strided_slice %1 {offsets = [2, 0], sizes = [1, 512], strides = [1, 1]} : vector<4x512xf32> to vector<1x512xf32>
    %18 = vector.broadcast %16 : vector<8x1xf32> to vector<8x512xf32>
    %19 = vector.broadcast %17 : vector<1x512xf32> to vector<8x512xf32>
    %20 = arith.mulf %18, %19 : vector<8x512xf32>
    %21 = arith.addf %15, %20 : vector<8x512xf32>
    %22 = vector.extract_strided_slice %0 {offsets = [0, 3], sizes = [8, 1], strides = [1, 1]} : vector<8x4xf32> to vector<8x1xf32>
    %23 = vector.extract_strided_slice %1 {offsets = [3, 0], sizes = [1, 512], strides = [1, 1]} : vector<4x512xf32> to vector<1x512xf32>
    %24 = vector.broadcast %22 : vector<8x1xf32> to vector<8x512xf32>
    %25 = vector.broadcast %23 : vector<1x512xf32> to vector<8x512xf32>
    %26 = arith.mulf %24, %25 : vector<8x512xf32>
    %27 = arith.addf %21, %26 : vector<8x512xf32>
    %cst = arith.constant 0.000000e+00 : f32
    %28 = vector.broadcast %cst : f32 to vector<8x512xf32>
    %29 = arith.maximumf %27, %28 : vector<8x512xf32>
    %30 = arith.truncf %29 : vector<8x512xf32> to vector<8x512xbf16>
    %c0_5 = arith.constant 0 : index
    %c0_6 = arith.constant 0 : index
    %31 = vector.load %arg4[%c0_5, %c0_6] : memref<512x512xbf16, #tpu.memory_space<vmem>>, vector<512x512xbf16>
    %cst_7 = arith.constant dense<0.000000e+00> : vector<8x512xf32>
    %32 = tpu.matmul %30, %31, %cst_7 {dimension_numbers = #tpu.dot_dimension_numbers<[1], [0], [0], [1], [0, 0, 1, 1], [], []>} : vector<8x512xbf16>, vector<512x512xbf16>, vector<8x512xf32> -> vector<8x512xf32>
    %c0_8 = arith.constant 0 : index
    %c0_9 = arith.constant 0 : index
    %33 = vector.load %arg5[%c0_8, %c0_9] : memref<1x512xf32, #tpu.memory_space<vmem>>, vector<1x512xf32>
    %34 = vector.broadcast %33 : vector<1x512xf32> to vector<8x512xf32>
    %35 = arith.addf %32, %34 : vector<8x512xf32>
    %cst_10 = arith.constant 0.000000e+00 : f32
    %36 = vector.broadcast %cst_10 : f32 to vector<8x512xf32>
    %37 = arith.maximumf %35, %36 : vector<8x512xf32>
    %38 = arith.truncf %37 : vector<8x512xf32> to vector<8x512xbf16>
    %c0_11 = arith.constant 0 : index
    %c0_12 = arith.constant 0 : index
    %39 = vector.load %arg6[%c0_11, %c0_12] : memref<512x512xbf16, #tpu.memory_space<vmem>>, vector<512x512xbf16>
    %cst_13 = arith.constant dense<0.000000e+00> : vector<8x512xf32>
    %40 = tpu.matmul %38, %39, %cst_13 {dimension_numbers = #tpu.dot_dimension_numbers<[1], [0], [0], [1], [0, 0, 1, 1], [], []>} : vector<8x512xbf16>, vector<512x512xbf16>, vector<8x512xf32> -> vector<8x512xf32>
    %c0_14 = arith.constant 0 : index
    %c0_15 = arith.constant 0 : index
    %41 = vector.load %arg7[%c0_14, %c0_15] : memref<1x512xf32, #tpu.memory_space<vmem>>, vector<1x512xf32>
    %42 = vector.broadcast %41 : vector<1x512xf32> to vector<8x512xf32>
    %43 = arith.addf %40, %42 : vector<8x512xf32>
    %cst_16 = arith.constant 0.000000e+00 : f32
    %44 = vector.broadcast %cst_16 : f32 to vector<8x512xf32>
    %45 = arith.maximumf %43, %44 : vector<8x512xf32>
    %46 = arith.truncf %45 : vector<8x512xf32> to vector<8x512xbf16>
    %c0_17 = arith.constant 0 : index
    %c0_18 = arith.constant 0 : index
    %47 = vector.load %arg8[%c0_17, %c0_18] : memref<512x896xbf16, #tpu.memory_space<vmem>>, vector<512x896xbf16>
    %cst_19 = arith.constant dense<0.000000e+00> : vector<8x896xf32>
    %48 = tpu.matmul %46, %47, %cst_19 {dimension_numbers = #tpu.dot_dimension_numbers<[1], [0], [0], [1], [0, 0, 1, 1], [], []>} : vector<8x512xbf16>, vector<512x896xbf16>, vector<8x896xf32> -> vector<8x896xf32>
    %c0_20 = arith.constant 0 : index
    %c0_21 = arith.constant 0 : index
    %49 = vector.load %arg9[%c0_20, %c0_21] : memref<1x896xf32, #tpu.memory_space<vmem>>, vector<1x896xf32>
    %50 = vector.broadcast %49 : vector<1x896xf32> to vector<8x896xf32>
    %51 = arith.addf %48, %50 : vector<8x896xf32>
    %c0_22 = arith.constant 0 : index
    %c0_23 = arith.constant 0 : index
    %52 = vector.load %arg10[%c0_22, %c0_23] : memref<8x896xf32, #tpu.memory_space<vmem>>, vector<8x896xf32>
    tpu.vector_store %arg10[%c0_22, %c0_23], %51 {strides = array<i32>} : memref<8x896xf32, #tpu.memory_space<vmem>>, vector<8x896xf32>,
    return
  }
  func.func @transform_0(%arg0: i32) -> (i32, i32) {
    %c0_i32 = arith.constant 0 : i32
    %c0_i32_0 = arith.constant 0 : i32
    return %arg0, %c0_i32 : i32, i32
  }
  func.func @transform_1(%arg0: i32) -> (i32, i32) {
    %c0_i32 = arith.constant 0 : i32
    %c0_i32_0 = arith.constant 0 : i32
    %c0_i32_1 = arith.constant 0 : i32
    return %c0_i32, %c0_i32_0 : i32, i32
  }
  func.func @transform_2(%arg0: i32) -> (i32, i32) {
    %c0_i32 = arith.constant 0 : i32
    %c0_i32_0 = arith.constant 0 : i32
    %c0_i32_1 = arith.constant 0 : i32
    return %c0_i32, %c0_i32_0 : i32, i32
  }
  func.func @transform_3(%arg0: i32) -> (i32, i32) {
    %c0_i32 = arith.constant 0 : i32
    %c0_i32_0 = arith.constant 0 : i32
    %c0_i32_1 = arith.constant 0 : i32
    return %c0_i32, %c0_i32_0 : i32, i32
  }
  func.func @transform_4(%arg0: i32) -> (i32, i32) {
    %c0_i32 = arith.constant 0 : i32
    %c0_i32_0 = arith.constant 0 : i32
    %c0_i32_1 = arith.constant 0 : i32
    return %c0_i32, %c0_i32_0 : i32, i32
  }
  func.func @transform_5(%arg0: i32) -> (i32, i32) {
    %c0_i32 = arith.constant 0 : i32
    %c0_i32_0 = arith.constant 0 : i32
    %c0_i32_1 = arith.constant 0 : i32
    return %c0_i32, %c0_i32_0 : i32, i32
  }
  func.func @transform_6(%arg0: i32) -> (i32, i32) {
    %c0_i32 = arith.constant 0 : i32
    %c0_i32_0 = arith.constant 0 : i32
    %c0_i32_1 = arith.constant 0 : i32
    return %c0_i32, %c0_i32_0 : i32, i32
  }
  func.func @transform_7(%arg0: i32) -> (i32, i32) {
    %c0_i32 = arith.constant 0 : i32
    %c0_i32_0 = arith.constant 0 : i32
    %c0_i32_1 = arith.constant 0 : i32
    return %c0_i32, %c0_i32_0 : i32, i32
  }
  func.func @transform_8(%arg0: i32) -> (i32, i32) {
    %c0_i32 = arith.constant 0 : i32
    %c0_i32_0 = arith.constant 0 : i32
    %c0_i32_1 = arith.constant 0 : i32
    return %c0_i32, %c0_i32_0 : i32, i32
  }
  func.func @transform_9(%arg0: i32) -> (i32, i32) {
    %c0_i32 = arith.constant 0 : i32
    %c0_i32_0 = arith.constant 0 : i32
    return %arg0, %c0_i32 : i32, i32
  }
}

</mosaic_0001>

<llo_original>
// kernel: mlp_forward.1
$region0: #{mlp_forward.1}
  #allocation0 [shape = 'u32[]', space=smem, size = 0x4, offset = 0x4, fixed_abs, tag = 'smem constant byte address 0x4 - core index']
  #allocation1 [shape = 'u32[144,128]{1,0:T(1,128)}', space=vmem, size = 0x12000, scoped, tag = 'internal scratch']
  %s0 = inlined_call_operand.vmem [shape: f32[8,4], index: 0, kind: input, shape index: {}]
  %s1 = inlined_call_operand.vmem [shape: f32[4,512], index: 1, kind: input, shape index: {}]
  %s2 = inlined_call_operand.vmem [shape: f32[1,512], index: 2, kind: input, shape index: {}]
  %s3 = inlined_call_operand.vmem [shape: bf16[512,512], index: 3, kind: input, shape index: {}]
  %s4 = inlined_call_operand.vmem [shape: f32[1,512], index: 4, kind: input, shape index: {}]
  %s5 = inlined_call_operand.vmem [shape: bf16[512,512], index: 5, kind: input, shape index: {}]
  %s6 = inlined_call_operand.vmem [shape: f32[1,512], index: 6, kind: input, shape index: {}]
  %s7 = inlined_call_operand.vmem [shape: bf16[512,896], index: 7, kind: input, shape index: {}]
  %s8 = inlined_call_operand.vmem [shape: f32[1,896], index: 8, kind: input, shape index: {}]
  %s9 = inlined_call_operand.hbm [shape: f32[8,896], index: 9, kind: output, shape index: {}]
  %s10 = sld [smem:[#allocation0]]
  $region46: #{mlp_forward.1} parent=0
    _
  %s12 = ssub.s32 1, %s10
  %s13 = scalar_select 0, %s12, %s10
  $region1: #{mlp_forward.1} parent=0
    #allocation2 [shape = 'u8[28672]{0}', space=vmem, size = 0x7000, scoped, tag = 'output window, operand 0, single buffered']
    #allocation3 [shape = 's32[1]{0}', space=sflag, size = 0x4, scoped, tag = 'scoped memory for mlp_forward.1']
    %14 = vsyncpa [#allocation3], 0
    // Predicated region
    $region2: #{mlp_forward.1} parent=1 // pred_check
      _
    $region3: #{mlp_forward.1} parent=1 // pred_check_branch
      %16 = sbr.rel (0) target = $region5
    $region4: #{mlp_forward.1} parent=1 // pred_region
      _
    $region5: #{mlp_forward.1} parent=1 // pred_fallthru
      _
    // Predicated region
    $region6: #{mlp_forward.1} parent=1 // pred_check
      _
    $region7: #{mlp_forward.1} parent=1 // pred_check_branch
      %18 = sbr.rel (0) target = $region9
    $region8: #{mlp_forward.1} parent=1 // pred_region
      _
    $region9: #{mlp_forward.1} parent=1 // pred_fallthru
      _
    // Predicated region
    $region10: #{mlp_forward.1} parent=1 // pred_check
      _
    $region11: #{mlp_forward.1} parent=1 // pred_check_branch
      %20 = sbr.rel (0) target = $region13
    $region12: #{mlp_forward.1} parent=1 // pred_region
      _
    $region13: #{mlp_forward.1} parent=1 // pred_fallthru
      _
    // Predicated region
    $region14: #{mlp_forward.1} parent=1 // pred_check
      _
    $region15: #{mlp_forward.1} parent=1 // pred_check_branch
      %22 = sbr.rel (0) target = $region17
    $region16: #{mlp_forward.1} parent=1 // pred_region
      _
    $region17: #{mlp_forward.1} parent=1 // pred_fallthru
      _
    // Predicated region
    $region18: #{mlp_forward.1} parent=1 // pred_check
      _
    $region19: #{mlp_forward.1} parent=1 // pred_check_branch
      %24 = sbr.rel (0) target = $region21
    $region20: #{mlp_forward.1} parent=1 // pred_region
      _
    $region21: #{mlp_forward.1} parent=1 // pred_fallthru
      _
    // Predicated region
    $region22: #{mlp_forward.1} parent=1 // pred_check
      _
    $region23: #{mlp_forward.1} parent=1 // pred_check_branch
      %26 = sbr.rel (0) target = $region25
    $region24: #{mlp_forward.1} parent=1 // pred_region
      _
    $region25: #{mlp_forward.1} parent=1 // pred_fallthru
      _
    // Predicated region
    $region26: #{mlp_forward.1} parent=1 // pred_check
      _
    $region27: #{mlp_forward.1} parent=1 // pred_check_branch
      %28 = sbr.rel (0) target = $region29
    $region28: #{mlp_forward.1} parent=1 // pred_region
      _
    $region29: #{mlp_forward.1} parent=1 // pred_fallthru
      _
    // Predicated region
    $region30: #{mlp_forward.1} parent=1 // pred_check
      _
    $region31: #{mlp_forward.1} parent=1 // pred_check_branch
      %30 = sbr.rel (0) target = $region33
    $region32: #{mlp_forward.1} parent=1 // pred_region
      _
    $region33: #{mlp_forward.1} parent=1 // pred_fallthru
      _
    // Predicated region
    $region34: #{mlp_forward.1} parent=1 // pred_check
      _
    $region35: #{mlp_forward.1} parent=1 // pred_check_branch
      %32 = sbr.rel (0) target = $region37
    $region36: #{mlp_forward.1} parent=1 // pred_region
      _
    $region37: #{mlp_forward.1} parent=1 // pred_fallthru
      _
    %v34 = vld [vmem:[%s0] sm:$0xff]
    %v35 = vld [vmem:[%s1] sm:$0xff]
    %v36 = vld [vmem:[%s1 + $0x8] sm:$0xff]
    %v37 = vld [vmem:[%s2] sm:$0xf]
    %39 = vset.pattern.permute.xlu0 0
    %40 = vperm.xlu0 %39, %v34
    %v41 = vpop.permute.xlu0 %40
    %v45 = vlaneseq
    %v46 = vshrl.u32 %v45, 7
    %v47 = vsub.s32 0, %v46
    %v48 = vrot.slane %v35, %v47
    %v49 = vlaneseq
    %v50 = vshrl.u32 %v49, 7
    %v51 = vsub.s32 4, %v50
    %v52 = vrot.slane %v35, %v51
    %v53 = vlaneseq
    %v54 = vshrl.u32 %v53, 7
    %v55 = vsub.s32 0, %v54
    %v56 = vrot.slane %v36, %v55
    %v57 = vlaneseq
    %v58 = vshrl.u32 %v57, 7
    %v59 = vsub.s32 4, %v58
    %v60 = vrot.slane %v36, %v59
    %v65 = vlaneseq
    %v66 = vshrl.u32 %v65, 7
    %v67 = vsub.s32 0, %v66
    %v68 = vrot.slane %v48, %v67
    %v69 = vlaneseq
    %v70 = vshrl.u32 %v69, 7
    %v71 = vsub.s32 0, %v70
    %v72 = vrot.slane %v52, %v71
    %v73 = vlaneseq
    %v74 = vshrl.u32 %v73, 7
    %v75 = vsub.s32 0, %v74
    %v76 = vrot.slane %v56, %v75
    %v77 = vlaneseq
    %v78 = vshrl.u32 %v77, 7
    %v79 = vsub.s32 0, %v78
    %v80 = vrot.slane %v60, %v79
    %v81 = vmul.f32 %v41, %v68
    %v82 = vmul.f32 %v41, %v72
    %v83 = vmul.f32 %v41, %v76
    %v84 = vmul.f32 %v41, %v80
    %v86 = vlaneseq
    %v87 = vshrl.u32 %v86, 7
    %v88 = vsub.s32 0, %v87
    %v89 = vrot.slane %v37, %v88
    %v90 = vlaneseq
    %v91 = vshrl.u32 %v90, 7
    %v92 = vsub.s32 1, %v91
    %v93 = vrot.slane %v37, %v92
    %v94 = vlaneseq
    %v95 = vshrl.u32 %v94, 7
    %v96 = vsub.s32 2, %v95
    %v97 = vrot.slane %v37, %v96
    %v98 = vlaneseq
    %v99 = vshrl.u32 %v98, 7
    %v100 = vsub.s32 3, %v99
    %v101 = vrot.slane %v37, %v100
    %v106 = vadd.f32 %v89, %v81
    %v107 = vadd.f32 %v93, %v82
    %v108 = vadd.f32 %v97, %v83
    %v109 = vadd.f32 %v101, %v84
    %110 = vset.pattern.permute.xlu0 1
    %111 = vperm.xlu0 %110, %v34
    %v112 = vpop.permute.xlu0 %111
    %v114 = vlaneseq
    %v115 = vshrl.u32 %v114, 7
    %v116 = vsub.s32 1, %v115
    %v117 = vrot.slane %v35, %v116
    %v118 = vlaneseq
    %v119 = vshrl.u32 %v118, 7
    %v120 = vsub.s32 5, %v119
    %v121 = vrot.slane %v35, %v120
    %v122 = vlaneseq
    %v123 = vshrl.u32 %v122, 7
    %v124 = vsub.s32 1, %v123
    %v125 = vrot.slane %v36, %v124
    %v126 = vlaneseq
    %v127 = vshrl.u32 %v126, 7
    %v128 = vsub.s32 5, %v127
    %v129 = vrot.slane %v36, %v128
    %v134 = vlaneseq
    %v135 = vshrl.u32 %v134, 7
    %v136 = vsub.s32 1, %v135
    %v137 = vrot.slane %v117, %v136
    %v138 = vlaneseq
    %v139 = vshrl.u32 %v138, 7
    %v140 = vsub.s32 1, %v139
    %v141 = vrot.slane %v121, %v140
    %v142 = vlaneseq
    %v143 = vshrl.u32 %v142, 7
    %v144 = vsub.s32 1, %v143
    %v145 = vrot.slane %v125, %v144
    %v146 = vlaneseq
    %v147 = vshrl.u32 %v146, 7
    %v148 = vsub.s32 1, %v147
    %v149 = vrot.slane %v129, %v148
    %v150 = vmul.f32 %v112, %v137
    %v151 = vmul.f32 %v112, %v141
    %v152 = vmul.f32 %v112, %v145
    %v153 = vmul.f32 %v112, %v149
    %v154 = vadd.f32 %v106, %v150
    %v155 = vadd.f32 %v107, %v151
    %v156 = vadd.f32 %v108, %v152
    %v157 = vadd.f32 %v109, %v153
    %158 = vset.pattern.permute.xlu0 2
    %159 = vperm.xlu0 %158, %v34
    %v160 = vpop.permute.xlu0 %159
    %v162 = vlaneseq
    %v163 = vshrl.u32 %v162, 7
    %v164 = vsub.s32 2, %v163
    %v165 = vrot.slane %v35, %v164
    %v166 = vlaneseq
    %v167 = vshrl.u32 %v166, 7
    %v168 = vsub.s32 6, %v167
    %v169 = vrot.slane %v35, %v168
    %v170 = vlaneseq
    %v171 = vshrl.u32 %v170, 7
    %v172 = vsub.s32 2, %v171
    %v173 = vrot.slane %v36, %v172
    %v174 = vlaneseq
    %v175 = vshrl.u32 %v174, 7
    %v176 = vsub.s32 6, %v175
    %v177 = vrot.slane %v36, %v176
    %v182 = vlaneseq
    %v183 = vshrl.u32 %v182, 7
    %v184 = vsub.s32 2, %v183
    %v185 = vrot.slane %v165, %v184
    %v186 = vlaneseq
    %v187 = vshrl.u32 %v186, 7
    %v188 = vsub.s32 2, %v187
    %v189 = vrot.slane %v169, %v188
    %v190 = vlaneseq
    %v191 = vshrl.u32 %v190, 7
    %v192 = vsub.s32 2, %v191
    %v193 = vrot.slane %v173, %v192
    %v194 = vlaneseq
    %v195 = vshrl.u32 %v194, 7
    %v196 = vsub.s32 2, %v195
    %v197 = vrot.slane %v177, %v196
    %v198 = vmul.f32 %v160, %v185
    %v199 = vmul.f32 %v160, %v189
    %v200 = vmul.f32 %v160, %v193
    %v201 = vmul.f32 %v160, %v197
    %v202 = vadd.f32 %v154, %v198
    %v203 = vadd.f32 %v155, %v199
    %v204 = vadd.f32 %v156, %v200
    %v205 = vadd.f32 %v157, %v201
    %206 = vset.pattern.permute.xlu0 3
    %207 = vperm.xlu0 %206, %v34
    %v208 = vpop.permute.xlu0 %207
    %v210 = vlaneseq
    %v211 = vshrl.u32 %v210, 7
    %v212 = vsub.s32 3, %v211
    %v213 = vrot.slane %v35, %v212
    %v214 = vlaneseq
    %v215 = vshrl.u32 %v214, 7
    %v216 = vsub.s32 7, %v215
    %v217 = vrot.slane %v35, %v216
    %v218 = vlaneseq
    %v219 = vshrl.u32 %v218, 7
    %v220 = vsub.s32 3, %v219
    %v221 = vrot.slane %v36, %v220
    %v222 = vlaneseq
    %v223 = vshrl.u32 %v222, 7
    %v224 = vsub.s32 7, %v223
    %v225 = vrot.slane %v36, %v224
    %v230 = vlaneseq
    %v231 = vshrl.u32 %v230, 7
    %v232 = vsub.s32 3, %v231
    %v233 = vrot.slane %v213, %v232
    %v234 = vlaneseq
    %v235 = vshrl.u32 %v234, 7
    %v236 = vsub.s32 3, %v235
    %v237 = vrot.slane %v217, %v236
    %v238 = vlaneseq
    %v239 = vshrl.u32 %v238, 7
    %v240 = vsub.s32 3, %v239
    %v241 = vrot.slane %v221, %v240
    %v242 = vlaneseq
    %v243 = vshrl.u32 %v242, 7
    %v244 = vsub.s32 3, %v243
    %v245 = vrot.slane %v225, %v244
    %v246 = vmul.f32 %v208, %v233
    %v247 = vmul.f32 %v208, %v237
    %v248 = vmul.f32 %v208, %v241
    %v249 = vmul.f32 %v208, %v245
    %v250 = vadd.f32 %v202, %v246
    %v251 = vadd.f32 %v203, %v247
    %v252 = vadd.f32 %v204, %v248
    %v253 = vadd.f32 %v205, %v249
    %v254 = vmax.f32 %v250, 0.0
    %v255 = vmax.f32 %v251, 0.0
    %v256 = vmax.f32 %v252, 0.0
    %v257 = vmax.f32 %v253, 0.0
    %v258 = vpack.c.bf16 %v254, %v254
    %v259 = vpack.c.bf16 %v255, %v255
    %v260 = vpack.c.bf16 %v256, %v256
    %v261 = vpack.c.bf16 %v257, %v257
    %v262 = vld [vmem:[%s3] sm:$0xff]
    %v263 = vld [vmem:[%s3 + $0x8] sm:$0xff]
    %v264 = vld [vmem:[%s3 + $0x10] sm:$0xff]
    %v265 = vld [vmem:[%s3 + $0x18] sm:$0xff]
    %v266 = vld [vmem:[%s3 + $0x20] sm:$0xff]
    %v267 = vld [vmem:[%s3 + $0x28] sm:$0xff]
    %v268 = vld [vmem:[%s3 + $0x30] sm:$0xff]
    %v269 = vld [vmem:[%s3 + $0x38] sm:$0xff]
    %v270 = vld [vmem:[%s3 + $0x40] sm:$0xff]
    %v271 = vld [vmem:[%s3 + $0x48] sm:$0xff]
    %v272 = vld [vmem:[%s3 + $0x50] sm:$0xff]
    %v273 = vld [vmem:[%s3 + $0x58] sm:$0xff]
    %v274 = vld [vmem:[%s3 + $0x60] sm:$0xff]
    %v275 = vld [vmem:[%s3 + $0x68] sm:$0xff]
    %v276 = vld [vmem:[%s3 + $0x70] sm:$0xff]
    %v277 = vld [vmem:[%s3 + $0x78] sm:$0xff]
    %v278 = vld [vmem:[%s3 + $0x80] sm:$0xff]
    %v279 = vld [vmem:[%s3 + $0x88] sm:$0xff]
    %v280 = vld [vmem:[%s3 + $0x90] sm:$0xff]
    %v281 = vld [vmem:[%s3 + $0x98] sm:$0xff]
    %v282 = vld [vmem:[%s3 + $0xa0] sm:$0xff]
    %v283 = vld [vmem:[%s3 + $0xa8] sm:$0xff]
    %v284 = vld [vmem:[%s3 + $0xb0] sm:$0xff]
    %v285 = vld [vmem:[%s3 + $0xb8] sm:$0xff]
    %v286 = vld [vmem:[%s3 + $0xc0] sm:$0xff]
    %v287 = vld [vmem:[%s3 + $0xc8] sm:$0xff]
    %v288 = vld [vmem:[%s3 + $0xd0] sm:$0xff]
    %v289 = vld [vmem:[%s3 + $0xd8] sm:$0xff]
    %v290 = vld [vmem:[%s3 + $0xe0] sm:$0xff]
    %v291 = vld [vmem:[%s3 + $0xe8] sm:$0xff]
    %v292 = vld [vmem:[%s3 + $0xf0] sm:$0xff]
    %v293 = vld [vmem:[%s3 + $0xf8] sm:$0xff]
    %v294 = vld [vmem:[%s3 + $0x100] sm:$0xff]
    %v295 = vld [vmem:[%s3 + $0x108] sm:$0xff]
    %v296 = vld [vmem:[%s3 + $0x110] sm:$0xff]
    %v297 = vld [vmem:[%s3 + $0x118] sm:$0xff]
    %v298 = vld [vmem:[%s3 + $0x120] sm:$0xff]
    %v299 = vld [vmem:[%s3 + $0x128] sm:$0xff]
    %v300 = vld [vmem:[%s3 + $0x130] sm:$0xff]
    %v301 = vld [vmem:[%s3 + $0x138] sm:$0xff]
    %v302 = vld [vmem:[%s3 + $0x140] sm:$0xff]
    %v303 = vld [vmem:[%s3 + $0x148] sm:$0xff]
    %v304 = vld [vmem:[%s3 + $0x150] sm:$0xff]
    %v305 = vld [vmem:[%s3 + $0x158] sm:$0xff]
    %v306 = vld [vmem:[%s3 + $0x160] sm:$0xff]
    %v307 = vld [vmem:[%s3 + $0x168] sm:$0xff]
    %v308 = vld [vmem:[%s3 + $0x170] sm:$0xff]
    %v309 = vld [vmem:[%s3 + $0x178] sm:$0xff]
    %v310 = vld [vmem:[%s3 + $0x180] sm:$0xff]
    %v311 = vld [vmem:[%s3 + $0x188] sm:$0xff]
    %v312 = vld [vmem:[%s3 + $0x190] sm:$0xff]
    %v313 = vld [vmem:[%s3 + $0x198] sm:$0xff]
    %v314 = vld [vmem:[%s3 + $0x1a0] sm:$0xff]
    %v315 = vld [vmem:[%s3 + $0x1a8] sm:$0xff]
    %v316 = vld [vmem:[%s3 + $0x1b0] sm:$0xff]
    %v317 = vld [vmem:[%s3 + $0x1b8] sm:$0xff]
    %v318 = vld [vmem:[%s3 + $0x1c0] sm:$0xff]
    %v319 = vld [vmem:[%s3 + $0x1c8] sm:$0xff]
    %v320 = vld [vmem:[%s3 + $0x1d0] sm:$0xff]
    %v321 = vld [vmem:[%s3 + $0x1d8] sm:$0xff]
    %v322 = vld [vmem:[%s3 + $0x1e0] sm:$0xff]
    %v323 = vld [vmem:[%s3 + $0x1e8] sm:$0xff]
    %v324 = vld [vmem:[%s3 + $0x1f0] sm:$0xff]
    %v325 = vld [vmem:[%s3 + $0x1f8] sm:$0xff]
    %v326 = vld [vmem:[%s3 + $0x200] sm:$0xff]
    %v327 = vld [vmem:[%s3 + $0x208] sm:$0xff]
    %v328 = vld [vmem:[%s3 + $0x210] sm:$0xff]
    %v329 = vld [vmem:[%s3 + $0x218] sm:$0xff]
    %v330 = vld [vmem:[%s3 + $0x220] sm:$0xff]
    %v331 = vld [vmem:[%s3 + $0x228] sm:$0xff]
    %v332 = vld [vmem:[%s3 + $0x230] sm:$0xff]
    %v333 = vld [vmem:[%s3 + $0x238] sm:$0xff]
    %v334 = vld [vmem:[%s3 + $0x240] sm:$0xff]
    %v335 = vld [vmem:[%s3 + $0x248] sm:$0xff]
    %v336 = vld [vmem:[%s3 + $0x250] sm:$0xff]
    %v337 = vld [vmem:[%s3 + $0x258] sm:$0xff]
    %v338 = vld [vmem:[%s3 + $0x260] sm:$0xff]
    %v339 = vld [vmem:[%s3 + $0x268] sm:$0xff]
    %v340 = vld [vmem:[%s3 + $0x270] sm:$0xff]
    %v341 = vld [vmem:[%s3 + $0x278] sm:$0xff]
    %v342 = vld [vmem:[%s3 + $0x280] sm:$0xff]
    %v343 = vld [vmem:[%s3 + $0x288] sm:$0xff]
    %v344 = vld [vmem:[%s3 + $0x290] sm:$0xff]
    %v345 = vld [vmem:[%s3 + $0x298] sm:$0xff]
    %v346 = vld [vmem:[%s3 + $0x2a0] sm:$0xff]
    %v347 = vld [vmem:[%s3 + $0x2a8] sm:$0xff]
    %v348 = vld [vmem:[%s3 + $0x2b0] sm:$0xff]
    %v349 = vld [vmem:[%s3 + $0x2b8] sm:$0xff]
    %v350 = vld [vmem:[%s3 + $0x2c0] sm:$0xff]
    %v351 = vld [vmem:[%s3 + $0x2c8] sm:$0xff]
    %v352 = vld [vmem:[%s3 + $0x2d0] sm:$0xff]
    %v353 = vld [vmem:[%s3 + $0x2d8] sm:$0xff]
    %v354 = vld [vmem:[%s3 + $0x2e0] sm:$0xff]
    %v355 = vld [vmem:[%s3 + $0x2e8] sm:$0xff]
    %v356 = vld [vmem:[%s3 + $0x2f0] sm:$0xff]
    %v357 = vld [vmem:[%s3 + $0x2f8] sm:$0xff]
    %v358 = vld [vmem:[%s3 + $0x300] sm:$0xff]
    %v359 = vld [vmem:[%s3 + $0x308] sm:$0xff]
    %v360 = vld [vmem:[%s3 + $0x310] sm:$0xff]
    %v361 = vld [vmem:[%s3 + $0x318] sm:$0xff]
    %v362 = vld [vmem:[%s3 + $0x320] sm:$0xff]
    %v363 = vld [vmem:[%s3 + $0x328] sm:$0xff]
    %v364 = vld [vmem:[%s3 + $0x330] sm:$0xff]
    %v365 = vld [vmem:[%s3 + $0x338] sm:$0xff]
    %v366 = vld [vmem:[%s3 + $0x340] sm:$0xff]
    %v367 = vld [vmem:[%s3 + $0x348] sm:$0xff]
    %v368 = vld [vmem:[%s3 + $0x350] sm:$0xff]
    %v369 = vld [vmem:[%s3 + $0x358] sm:$0xff]
    %v370 = vld [vmem:[%s3 + $0x360] sm:$0xff]
    %v371 = vld [vmem:[%s3 + $0x368] sm:$0xff]
    %v372 = vld [vmem:[%s3 + $0x370] sm:$0xff]
    %v373 = vld [vmem:[%s3 + $0x378] sm:$0xff]
    %v374 = vld [vmem:[%s3 + $0x380] sm:$0xff]
    %v375 = vld [vmem:[%s3 + $0x388] sm:$0xff]
    %v376 = vld [vmem:[%s3 + $0x390] sm:$0xff]
    %v377 = vld [vmem:[%s3 + $0x398] sm:$0xff]
    %v378 = vld [vmem:[%s3 + $0x3a0] sm:$0xff]
    %v379 = vld [vmem:[%s3 + $0x3a8] sm:$0xff]
    %v380 = vld [vmem:[%s3 + $0x3b0] sm:$0xff]
    %v381 = vld [vmem:[%s3 + $0x3b8] sm:$0xff]
    %v382 = vld [vmem:[%s3 + $0x3c0] sm:$0xff]
    %v383 = vld [vmem:[%s3 + $0x3c8] sm:$0xff]
    %v384 = vld [vmem:[%s3 + $0x3d0] sm:$0xff]
    %v385 = vld [vmem:[%s3 + $0x3d8] sm:$0xff]
    %v386 = vld [vmem:[%s3 + $0x3e0] sm:$0xff]
    %v387 = vld [vmem:[%s3 + $0x3e8] sm:$0xff]
    %v388 = vld [vmem:[%s3 + $0x3f0] sm:$0xff]
    %v389 = vld [vmem:[%s3 + $0x3f8] sm:$0xff]
    %v390 = vld [vmem:[%s4] sm:$0xf]
    %v392 = vlaneseq
    %v393 = vshrl.u32 %v392, 7
    %v394 = vsub.s32 0, %v393
    %v395 = vrot.slane %v390, %v394
    %v396 = vlaneseq
    %v397 = vshrl.u32 %v396, 7
    %v398 = vsub.s32 1, %v397
    %v399 = vrot.slane %v390, %v398
    %v400 = vlaneseq
    %v401 = vshrl.u32 %v400, 7
    %v402 = vsub.s32 2, %v401
    %v403 = vrot.slane %v390, %v402
    %v404 = vlaneseq
    %v405 = vshrl.u32 %v404, 7
    %v406 = vsub.s32 3, %v405
    %v407 = vrot.slane %v390, %v406
    %v540 = vunpack.c.l.b16 %v262
    %v541 = vunpack.c.h.b16 %v262
    %v542 = vunpack.c.l.b16 %v263
    %v543 = vunpack.c.h.b16 %v263
    %v544 = vunpack.c.l.b16 %v264
    %v545 = vunpack.c.h.b16 %v264
    %v546 = vunpack.c.l.b16 %v265
    %v547 = vunpack.c.h.b16 %v265
    %v548 = vunpack.c.l.b16 %v266
    %v549 = vunpack.c.h.b16 %v266
    %v550 = vunpack.c.l.b16 %v267
    %v551 = vunpack.c.h.b16 %v267
    %v552 = vunpack.c.l.b16 %v268
    %v553 = vunpack.c.h.b16 %v268
    %v554 = vunpack.c.l.b16 %v269
    %v555 = vunpack.c.h.b16 %v269
    %v556 = vunpack.c.l.b16 %v270
    %v557 = vunpack.c.h.b16 %v270
    %v558 = vunpack.c.l.b16 %v271
    %v559 = vunpack.c.h.b16 %v271
    %v560 = vunpack.c.l.b16 %v272
    %v561 = vunpack.c.h.b16 %v272
    %v562 = vunpack.c.l.b16 %v273
    %v563 = vunpack.c.h.b16 %v273
    %v564 = vunpack.c.l.b16 %v274
    %v565 = vunpack.c.h.b16 %v274
    %v566 = vunpack.c.l.b16 %v275
    %v567 = vunpack.c.h.b16 %v275
    %v568 = vunpack.c.l.b16 %v276
    %v569 = vunpack.c.h.b16 %v276
    %v570 = vunpack.c.l.b16 %v277
    %v571 = vunpack.c.h.b16 %v277
    %v572 = vunpack.c.l.b16 %v278
    %v573 = vunpack.c.h.b16 %v278
    %v574 = vunpack.c.l.b16 %v279
    %v575 = vunpack.c.h.b16 %v279
    %v576 = vunpack.c.l.b16 %v280
    %v577 = vunpack.c.h.b16 %v280
    %v578 = vunpack.c.l.b16 %v281
    %v579 = vunpack.c.h.b16 %v281
    %v580 = vunpack.c.l.b16 %v282
    %v581 = vunpack.c.h.b16 %v282
    %v582 = vunpack.c.l.b16 %v283
    %v583 = vunpack.c.h.b16 %v283
    %v584 = vunpack.c.l.b16 %v284
    %v585 = vunpack.c.h.b16 %v284
    %v586 = vunpack.c.l.b16 %v285
    %v587 = vunpack.c.h.b16 %v285
    %v588 = vunpack.c.l.b16 %v286
    %v589 = vunpack.c.h.b16 %v286
    %v590 = vunpack.c.l.b16 %v287
    %v591 = vunpack.c.h.b16 %v287
    %v592 = vunpack.c.l.b16 %v288
    %v593 = vunpack.c.h.b16 %v288
    %v594 = vunpack.c.l.b16 %v289
    %v595 = vunpack.c.h.b16 %v289
    %v596 = vunpack.c.l.b16 %v290
    %v597 = vunpack.c.h.b16 %v290
    %v598 = vunpack.c.l.b16 %v291
    %v599 = vunpack.c.h.b16 %v291
    %v600 = vunpack.c.l.b16 %v292
    %v601 = vunpack.c.h.b16 %v292
    %v602 = vunpack.c.l.b16 %v293
    %v603 = vunpack.c.h.b16 %v293
    %v604 = vunpack.c.l.b16 %v294
    %v605 = vunpack.c.h.b16 %v294
    %v606 = vunpack.c.l.b16 %v295
    %v607 = vunpack.c.h.b16 %v295
    %v608 = vunpack.c.l.b16 %v296
    %v609 = vunpack.c.h.b16 %v296
    %v610 = vunpack.c.l.b16 %v297
    %v611 = vunpack.c.h.b16 %v297
    %v612 = vunpack.c.l.b16 %v298
    %v613 = vunpack.c.h.b16 %v298
    %v614 = vunpack.c.l.b16 %v299
    %v615 = vunpack.c.h.b16 %v299
    %v616 = vunpack.c.l.b16 %v300
    %v617 = vunpack.c.h.b16 %v300
    %v618 = vunpack.c.l.b16 %v301
    %v619 = vunpack.c.h.b16 %v301
    %v620 = vunpack.c.l.b16 %v302
    %v621 = vunpack.c.h.b16 %v302
    %v622 = vunpack.c.l.b16 %v303
    %v623 = vunpack.c.h.b16 %v303
    %v624 = vunpack.c.l.b16 %v304
    %v625 = vunpack.c.h.b16 %v304
    %v626 = vunpack.c.l.b16 %v305
    %v627 = vunpack.c.h.b16 %v305
    %v628 = vunpack.c.l.b16 %v306
    %v629 = vunpack.c.h.b16 %v306
    %v630 = vunpack.c.l.b16 %v307
    %v631 = vunpack.c.h.b16 %v307
    %v632 = vunpack.c.l.b16 %v308
    %v633 = vunpack.c.h.b16 %v308
    %v634 = vunpack.c.l.b16 %v309
    %v635 = vunpack.c.h.b16 %v309
    %v636 = vunpack.c.l.b16 %v310
    %v637 = vunpack.c.h.b16 %v310
    %v638 = vunpack.c.l.b16 %v311
    %v639 = vunpack.c.h.b16 %v311
    %v640 = vunpack.c.l.b16 %v312
    %v641 = vunpack.c.h.b16 %v312
    %v642 = vunpack.c.l.b16 %v313
    %v643 = vunpack.c.h.b16 %v313
    %v644 = vunpack.c.l.b16 %v314
    %v645 = vunpack.c.h.b16 %v314
    %v646 = vunpack.c.l.b16 %v315
    %v647 = vunpack.c.h.b16 %v315
    %v648 = vunpack.c.l.b16 %v316
    %v649 = vunpack.c.h.b16 %v316
    %v650 = vunpack.c.l.b16 %v317
    %v651 = vunpack.c.h.b16 %v317
    %v652 = vunpack.c.l.b16 %v318
    %v653 = vunpack.c.h.b16 %v318
    %v654 = vunpack.c.l.b16 %v319
    %v655 = vunpack.c.h.b16 %v319
    %v656 = vunpack.c.l.b16 %v320
    %v657 = vunpack.c.h.b16 %v320
    %v658 = vunpack.c.l.b16 %v321
    %v659 = vunpack.c.h.b16 %v321
    %v660 = vunpack.c.l.b16 %v322
    %v661 = vunpack.c.h.b16 %v322
    %v662 = vunpack.c.l.b16 %v323
    %v663 = vunpack.c.h.b16 %v323
    %v664 = vunpack.c.l.b16 %v324
    %v665 = vunpack.c.h.b16 %v324
    %v666 = vunpack.c.l.b16 %v325
    %v667 = vunpack.c.h.b16 %v325
    %v668 = vunpack.c.l.b16 %v326
    %v669 = vunpack.c.h.b16 %v326
    %v670 = vunpack.c.l.b16 %v327
    %v671 = vunpack.c.h.b16 %v327
    %v672 = vunpack.c.l.b16 %v328
    %v673 = vunpack.c.h.b16 %v328
    %v674 = vunpack.c.l.b16 %v329
    %v675 = vunpack.c.h.b16 %v329
    %v676 = vunpack.c.l.b16 %v330
    %v677 = vunpack.c.h.b16 %v330
    %v678 = vunpack.c.l.b16 %v331
    %v679 = vunpack.c.h.b16 %v331
    %v680 = vunpack.c.l.b16 %v332
    %v681 = vunpack.c.h.b16 %v332
    %v682 = vunpack.c.l.b16 %v333
    %v683 = vunpack.c.h.b16 %v333
    %v684 = vunpack.c.l.b16 %v334
    %v685 = vunpack.c.h.b16 %v334
    %v686 = vunpack.c.l.b16 %v335
    %v687 = vunpack.c.h.b16 %v335
    %v688 = vunpack.c.l.b16 %v336
    %v689 = vunpack.c.h.b16 %v336
    %v690 = vunpack.c.l.b16 %v337
    %v691 = vunpack.c.h.b16 %v337
    %v692 = vunpack.c.l.b16 %v338
    %v693 = vunpack.c.h.b16 %v338
    %v694 = vunpack.c.l.b16 %v339
    %v695 = vunpack.c.h.b16 %v339
    %v696 = vunpack.c.l.b16 %v340
    %v697 = vunpack.c.h.b16 %v340
    %v698 = vunpack.c.l.b16 %v341
    %v699 = vunpack.c.h.b16 %v341
    %v700 = vunpack.c.l.b16 %v342
    %v701 = vunpack.c.h.b16 %v342
    %v702 = vunpack.c.l.b16 %v343
    %v703 = vunpack.c.h.b16 %v343
    %v704 = vunpack.c.l.b16 %v344
    %v705 = vunpack.c.h.b16 %v344
    %v706 = vunpack.c.l.b16 %v345
    %v707 = vunpack.c.h.b16 %v345
    %v708 = vunpack.c.l.b16 %v346
    %v709 = vunpack.c.h.b16 %v346
    %v710 = vunpack.c.l.b16 %v347
    %v711 = vunpack.c.h.b16 %v347
    %v712 = vunpack.c.l.b16 %v348
    %v713 = vunpack.c.h.b16 %v348
    %v714 = vunpack.c.l.b16 %v349
    %v715 = vunpack.c.h.b16 %v349
    %v716 = vunpack.c.l.b16 %v350
    %v717 = vunpack.c.h.b16 %v350
    %v718 = vunpack.c.l.b16 %v351
    %v719 = vunpack.c.h.b16 %v351
    %v720 = vunpack.c.l.b16 %v352
    %v721 = vunpack.c.h.b16 %v352
    %v722 = vunpack.c.l.b16 %v353
    %v723 = vunpack.c.h.b16 %v353
    %v724 = vunpack.c.l.b16 %v354
    %v725 = vunpack.c.h.b16 %v354
    %v726 = vunpack.c.l.b16 %v355
    %v727 = vunpack.c.h.b16 %v355
    %v728 = vunpack.c.l.b16 %v356
    %v729 = vunpack.c.h.b16 %v356
    %v730 = vunpack.c.l.b16 %v357
    %v731 = vunpack.c.h.b16 %v357
    %v732 = vunpack.c.l.b16 %v358
    %v733 = vunpack.c.h.b16 %v358
    %v734 = vunpack.c.l.b16 %v359
    %v735 = vunpack.c.h.b16 %v359
    %v736 = vunpack.c.l.b16 %v360
    %v737 = vunpack.c.h.b16 %v360
    %v738 = vunpack.c.l.b16 %v361
    %v739 = vunpack.c.h.b16 %v361
    %v740 = vunpack.c.l.b16 %v362
    %v741 = vunpack.c.h.b16 %v362
    %v742 = vunpack.c.l.b16 %v363
    %v743 = vunpack.c.h.b16 %v363
    %v744 = vunpack.c.l.b16 %v364
    %v745 = vunpack.c.h.b16 %v364
    %v746 = vunpack.c.l.b16 %v365
    %v747 = vunpack.c.h.b16 %v365
    %v748 = vunpack.c.l.b16 %v366
    %v749 = vunpack.c.h.b16 %v366
    %v750 = vunpack.c.l.b16 %v367
    %v751 = vunpack.c.h.b16 %v367
    %v752 = vunpack.c.l.b16 %v368
    %v753 = vunpack.c.h.b16 %v368
    %v754 = vunpack.c.l.b16 %v369
    %v755 = vunpack.c.h.b16 %v369
    %v756 = vunpack.c.l.b16 %v370
    %v757 = vunpack.c.h.b16 %v370
    %v758 = vunpack.c.l.b16 %v371
    %v759 = vunpack.c.h.b16 %v371
    %v760 = vunpack.c.l.b16 %v372
    %v761 = vunpack.c.h.b16 %v372
    %v762 = vunpack.c.l.b16 %v373
    %v763 = vunpack.c.h.b16 %v373
    %v764 = vunpack.c.l.b16 %v374
    %v765 = vunpack.c.h.b16 %v374
    %v766 = vunpack.c.l.b16 %v375
    %v767 = vunpack.c.h.b16 %v375
    %v768 = vunpack.c.l.b16 %v376
    %v769 = vunpack.c.h.b16 %v376
    %v770 = vunpack.c.l.b16 %v377
    %v771 = vunpack.c.h.b16 %v377
    %v772 = vunpack.c.l.b16 %v378
    %v773 = vunpack.c.h.b16 %v378
    %v774 = vunpack.c.l.b16 %v379
    %v775 = vunpack.c.h.b16 %v379
    %v776 = vunpack.c.l.b16 %v380
    %v777 = vunpack.c.h.b16 %v380
    %v778 = vunpack.c.l.b16 %v381
    %v779 = vunpack.c.h.b16 %v381
    %v780 = vunpack.c.l.b16 %v382
    %v781 = vunpack.c.h.b16 %v382
    %v782 = vunpack.c.l.b16 %v383
    %v783 = vunpack.c.h.b16 %v383
    %v784 = vunpack.c.l.b16 %v384
    %v785 = vunpack.c.h.b16 %v384
    %v786 = vunpack.c.l.b16 %v385
    %v787 = vunpack.c.h.b16 %v385
    %v788 = vunpack.c.l.b16 %v386
    %v789 = vunpack.c.h.b16 %v386
    %v790 = vunpack.c.l.b16 %v387
    %v791 = vunpack.c.h.b16 %v387
    %v792 = vunpack.c.l.b16 %v388
    %v793 = vunpack.c.h.b16 %v388
    %v794 = vunpack.c.l.b16 %v389
    %v795 = vunpack.c.h.b16 %v389
    %v796 = vpack.c.b16 %v544, %v540
    %v797 = vpack.c.b16 %v545, %v541
    %v798 = vpack.c.b16 %v546, %v542
    %v799 = vpack.c.b16 %v547, %v543
    %v800 = vpack.c.b16 %v552, %v548
    %v801 = vpack.c.b16 %v553, %v549
    %v802 = vpack.c.b16 %v554, %v550
    %v803 = vpack.c.b16 %v555, %v551
    %v804 = vpack.c.b16 %v560, %v556
    %v805 = vpack.c.b16 %v561, %v557
    %v806 = vpack.c.b16 %v562, %v558
    %v807 = vpack.c.b16 %v563, %v559
    %v808 = vpack.c.b16 %v568, %v564
    %v809 = vpack.c.b16 %v569, %v565
    %v810 = vpack.c.b16 %v570, %v566
    %v811 = vpack.c.b16 %v571, %v567
    %v812 = vpack.c.b16 %v576, %v572
    %v813 = vpack.c.b16 %v577, %v573
    %v814 = vpack.c.b16 %v578, %v574
    %v815 = vpack.c.b16 %v579, %v575
    %v816 = vpack.c.b16 %v584, %v580
    %v817 = vpack.c.b16 %v585, %v581
    %v818 = vpack.c.b16 %v586, %v582
    %v819 = vpack.c.b16 %v587, %v583
    %v820 = vpack.c.b16 %v592, %v588
    %v821 = vpack.c.b16 %v593, %v589
    %v822 = vpack.c.b16 %v594, %v590
    %v823 = vpack.c.b16 %v595, %v591
    %v824 = vpack.c.b16 %v600, %v596
    %v825 = vpack.c.b16 %v601, %v597
    %v826 = vpack.c.b16 %v602, %v598
    %v827 = vpack.c.b16 %v603, %v599
    %v828 = vpack.c.b16 %v608, %v604
    %v829 = vpack.c.b16 %v609, %v605
    %v830 = vpack.c.b16 %v610, %v606
    %v831 = vpack.c.b16 %v611, %v607
    %v832 = vpack.c.b16 %v616, %v612
    %v833 = vpack.c.b16 %v617, %v613
    %v834 = vpack.c.b16 %v618, %v614
    %v835 = vpack.c.b16 %v619, %v615
    %v836 = vpack.c.b16 %v624, %v620
    %v837 = vpack.c.b16 %v625, %v621
    %v838 = vpack.c.b16 %v626, %v622
    %v839 = vpack.c.b16 %v627, %v623
    %v840 = vpack.c.b16 %v632, %v628
    %v841 = vpack.c.b16 %v633, %v629
    %v842 = vpack.c.b16 %v634, %v630
    %v843 = vpack.c.b16 %v635, %v631
    %v844 = vpack.c.b16 %v640, %v636
    %v845 = vpack.c.b16 %v641, %v637
    %v846 = vpack.c.b16 %v642, %v638
    %v847 = vpack.c.b16 %v643, %v639
    %v848 = vpack.c.b16 %v648, %v644
    %v849 = vpack.c.b16 %v649, %v645
    %v850 = vpack.c.b16 %v650, %v646
    %v851 = vpack.c.b16 %v651, %v647
    %v852 = vpack.c.b16 %v656, %v652
    %v853 = vpack.c.b16 %v657, %v653
    %v854 = vpack.c.b16 %v658, %v654
    %v855 = vpack.c.b16 %v659, %v655
    %v856 = vpack.c.b16 %v664, %v660
    %v857 = vpack.c.b16 %v665, %v661
    %v858 = vpack.c.b16 %v666, %v662
    %v859 = vpack.c.b16 %v667, %v663
    %v860 = vpack.c.b16 %v672, %v668
    %v861 = vpack.c.b16 %v673, %v669
    %v862 = vpack.c.b16 %v674, %v670
    %v863 = vpack.c.b16 %v675, %v671
    %v864 = vpack.c.b16 %v680, %v676
    %v865 = vpack.c.b16 %v681, %v677
    %v866 = vpack.c.b16 %v682, %v678
    %v867 = vpack.c.b16 %v683, %v679
    %v868 = vpack.c.b16 %v688, %v684
    %v869 = vpack.c.b16 %v689, %v685
    %v870 = vpack.c.b16 %v690, %v686
    %v871 = vpack.c.b16 %v691, %v687
    %v872 = vpack.c.b16 %v696, %v692
    %v873 = vpack.c.b16 %v697, %v693
    %v874 = vpack.c.b16 %v698, %v694
    %v875 = vpack.c.b16 %v699, %v695
    %v876 = vpack.c.b16 %v704, %v700
    %v877 = vpack.c.b16 %v705, %v701
    %v878 = vpack.c.b16 %v706, %v702
    %v879 = vpack.c.b16 %v707, %v703
    %v880 = vpack.c.b16 %v712, %v708
    %v881 = vpack.c.b16 %v713, %v709
    %v882 = vpack.c.b16 %v714, %v710
    %v883 = vpack.c.b16 %v715, %v711
    %v884 = vpack.c.b16 %v720, %v716
    %v885 = vpack.c.b16 %v721, %v717
    %v886 = vpack.c.b16 %v722, %v718
    %v887 = vpack.c.b16 %v723, %v719
    %v888 = vpack.c.b16 %v728, %v724
    %v889 = vpack.c.b16 %v729, %v725
    %v890 = vpack.c.b16 %v730, %v726
    %v891 = vpack.c.b16 %v731, %v727
    %v892 = vpack.c.b16 %v736, %v732
    %v893 = vpack.c.b16 %v737, %v733
    %v894 = vpack.c.b16 %v738, %v734
    %v895 = vpack.c.b16 %v739, %v735
    %v896 = vpack.c.b16 %v744, %v740
    %v897 = vpack.c.b16 %v745, %v741
    %v898 = vpack.c.b16 %v746, %v742
    %v899 = vpack.c.b16 %v747, %v743
    %v900 = vpack.c.b16 %v752, %v748
    %v901 = vpack.c.b16 %v753, %v749
    %v902 = vpack.c.b16 %v754, %v750
    %v903 = vpack.c.b16 %v755, %v751
    %v904 = vpack.c.b16 %v760, %v756
    %v905 = vpack.c.b16 %v761, %v757
    %v906 = vpack.c.b16 %v762, %v758
    %v907 = vpack.c.b16 %v763, %v759
    %v908 = vpack.c.b16 %v768, %v764
    %v909 = vpack.c.b16 %v769, %v765
    %v910 = vpack.c.b16 %v770, %v766
    %v911 = vpack.c.b16 %v771, %v767
    %v912 = vpack.c.b16 %v776, %v772
    %v913 = vpack.c.b16 %v777, %v773
    %v914 = vpack.c.b16 %v778, %v774
    %v915 = vpack.c.b16 %v779, %v775
    %v916 = vpack.c.b16 %v784, %v780
    %v917 = vpack.c.b16 %v785, %v781
    %v918 = vpack.c.b16 %v786, %v782
    %v919 = vpack.c.b16 %v787, %v783
    %v920 = vpack.c.b16 %v792, %v788
    %v921 = vpack.c.b16 %v793, %v789
    %v922 = vpack.c.b16 %v794, %v790
    %v923 = vpack.c.b16 %v795, %v791
    %1052 = vmatprep.subr.bf16.mxu0 %v797
    %1053 = vmatpush1.bf16.msra.mxu0 %v796
    %1054 = vmatprep.subr.bf16.mxu0 %v801
    %1055 = vmatpush1.bf16.msra.mxu0 %v800
    %1056 = vmatprep.subr.bf16.mxu0 %v805
    %1057 = vmatpush1.bf16.msra.mxu0 %v804
    %1058 = vmatprep.subr.bf16.mxu0 %v809
    %1059 = vmatpush1.bf16.msra.mxu0 %v808
    %1060 = vmatprep.subr.bf16.mxu0 %v813
    %1061 = vmatpush1.bf16.msra.mxu0 %v812
    %1062 = vmatprep.subr.bf16.mxu0 %v817
    %1063 = vmatpush1.bf16.msra.mxu0 %v816
    %1064 = vmatprep.subr.bf16.mxu0 %v821
    %1065 = vmatpush1.bf16.msra.mxu0 %v820
    %1066 = vmatprep.subr.bf16.mxu0 %v825
    %1067 = vmatpush1.bf16.msra.mxu0 %v824
    %1068 = vmatprep.subr.bf16.mxu0 %v829
    %1069 = vmatpush1.bf16.msra.mxu0 %v828
    %1070 = vmatprep.subr.bf16.mxu0 %v833
    %1071 = vmatpush1.bf16.msra.mxu0 %v832
    %1072 = vmatprep.subr.bf16.mxu0 %v837
    %1073 = vmatpush1.bf16.msra.mxu0 %v836
    %1074 = vmatprep.subr.bf16.mxu0 %v841
    %1075 = vmatpush1.bf16.msra.mxu0 %v840
    %1076 = vmatprep.subr.bf16.mxu0 %v845
    %1077 = vmatpush1.bf16.msra.mxu0 %v844
    %1078 = vmatprep.subr.bf16.mxu0 %v849
    %1079 = vmatpush1.bf16.msra.mxu0 %v848
    %1080 = vmatprep.subr.bf16.mxu0 %v853
    %1081 = vmatpush1.bf16.msra.mxu0 %v852
    %1082 = vmatprep.subr.bf16.mxu0 %v857
    %1083 = vmatpush1.bf16.msra.mxu0 %v856
    %1084 = vmatprep.mubr.bf16.mxu0 %v259
    %1085 = vmatmul.mubr.bf16.gmra.mrb[0].mxu0 %v258
    %v1086 = vpop.f32.mrb[0].mxu0
    %v1087 = vadd.f32 %v395, %v1086
    %v1088 = vpop.f32.mrb[0].mxu0
    %v1089 = vadd.f32 %v399, %v1088
    %v1090 = vpop.f32.mrb[0].mxu0
    %v1091 = vpop.f32.mrb[0].mxu0
    %1092 = vdwg.mxu0
    %1093 = vmatprep.subr.bf16.mxu0 %v861
    %1094 = vmatpush1.bf16.msra.mxu0 %v860
    %1095 = vmatprep.subr.bf16.mxu0 %v865
    %1096 = vmatpush1.bf16.msra.mxu0 %v864
    %1097 = vmatprep.subr.bf16.mxu0 %v869
    %1098 = vmatpush1.bf16.msra.mxu0 %v868
    %1099 = vmatprep.subr.bf16.mxu0 %v873
    %1100 = vmatpush1.bf16.msra.mxu0 %v872
    %1101 = vmatprep.subr.bf16.mxu0 %v877
    %1102 = vmatpush1.bf16.msra.mxu0 %v876
    %1103 = vmatprep.subr.bf16.mxu0 %v881
    %1104 = vmatpush1.bf16.msra.mxu0 %v880
    %1105 = vmatprep.subr.bf16.mxu0 %v885
    %1106 = vmatpush1.bf16.msra.mxu0 %v884
    %1107 = vmatprep.subr.bf16.mxu0 %v889
    %1108 = vmatpush1.bf16.msra.mxu0 %v888
    %1109 = vmatprep.subr.bf16.mxu0 %v893
    %1110 = vmatpush1.bf16.msra.mxu0 %v892
    %1111 = vmatprep.subr.bf16.mxu0 %v897
    %1112 = vmatpush1.bf16.msra.mxu0 %v896
    %1113 = vmatprep.subr.bf16.mxu0 %v901
    %1114 = vmatpush1.bf16.msra.mxu0 %v900
    %1115 = vmatprep.subr.bf16.mxu0 %v905
    %1116 = vmatpush1.bf16.msra.mxu0 %v904
    %1117 = vmatprep.subr.bf16.mxu0 %v909
    %1118 = vmatpush1.bf16.msra.mxu0 %v908
    %1119 = vmatprep.subr.bf16.mxu0 %v913
    %1120 = vmatpush1.bf16.msra.mxu0 %v912
    %1121 = vmatprep.subr.bf16.mxu0 %v917
    %1122 = vmatpush1.bf16.msra.mxu0 %v916
    %1123 = vmatprep.subr.bf16.mxu0 %v921
    %1124 = vmatpush1.bf16.msra.mxu0 %v920
    %1125 = vmatprep.mubr.bf16.mxu0 %v261
    %1126 = vmatmul.mubr.bf16.gmra.mrb[0].mxu0 %v260
    %v1127 = vpop.f32.mrb[0].mxu0
    %v1128 = vadd.f32 %v1087, %v1127
    %v1129 = vpop.f32.mrb[0].mxu0
    %v1130 = vadd.f32 %v1089, %v1129
    %v1131 = vpop.f32.mrb[0].mxu0
    %v1132 = vpop.f32.mrb[0].mxu0
    %1133 = vdwg.mxu0
    %1134 = vmatprep.subr.bf16.mxu0 %v799
    %1135 = vmatpush1.bf16.msra.mxu0 %v798
    %1136 = vmatprep.subr.bf16.mxu0 %v803
    %1137 = vmatpush1.bf16.msra.mxu0 %v802
    %1138 = vmatprep.subr.bf16.mxu0 %v807
    %1139 = vmatpush1.bf16.msra.mxu0 %v806
    %1140 = vmatprep.subr.bf16.mxu0 %v811
    %1141 = vmatpush1.bf16.msra.mxu0 %v810
    %1142 = vmatprep.subr.bf16.mxu0 %v815
    %1143 = vmatpush1.bf16.msra.mxu0 %v814
    %1144 = vmatprep.subr.bf16.mxu0 %v819
    %1145 = vmatpush1.bf16.msra.mxu0 %v818
    %1146 = vmatprep.subr.bf16.mxu0 %v823
    %1147 = vmatpush1.bf16.msra.mxu0 %v822
    %1148 = vmatprep.subr.bf16.mxu0 %v827
    %1149 = vmatpush1.bf16.msra.mxu0 %v826
    %1150 = vmatprep.subr.bf16.mxu0 %v831
    %1151 = vmatpush1.bf16.msra.mxu0 %v830
    %1152 = vmatprep.subr.bf16.mxu0 %v835
    %1153 = vmatpush1.bf16.msra.mxu0 %v834
    %1154 = vmatprep.subr.bf16.mxu0 %v839
    %1155 = vmatpush1.bf16.msra.mxu0 %v838
    %1156 = vmatprep.subr.bf16.mxu0 %v843
    %1157 = vmatpush1.bf16.msra.mxu0 %v842
    %1158 = vmatprep.subr.bf16.mxu0 %v847
    %1159 = vmatpush1.bf16.msra.mxu0 %v846
    %1160 = vmatprep.subr.bf16.mxu0 %v851
    %1161 = vmatpush1.bf16.msra.mxu0 %v850
    %1162 = vmatprep.subr.bf16.mxu0 %v855
    %1163 = vmatpush1.bf16.msra.mxu0 %v854
    %1164 = vmatprep.subr.bf16.mxu0 %v859
    %1165 = vmatpush1.bf16.msra.mxu0 %v858
    %1166 = vmatprep.mubr.bf16.mxu0 %v259
    %1167 = vmatmul.mubr.bf16.gmra.mrb[0].mxu0 %v258
    %v1168 = vpop.f32.mrb[0].mxu0
    %v1169 = vadd.f32 %v403, %v1168
    %v1170 = vpop.f32.mrb[0].mxu0
    %v1171 = vadd.f32 %v407, %v1170
    %v1172 = vpop.f32.mrb[0].mxu0
    %v1173 = vpop.f32.mrb[0].mxu0
    %1174 = vdwg.mxu0
    %1175 = vmatprep.subr.bf16.mxu0 %v863
    %1176 = vmatpush1.bf16.msra.mxu0 %v862
    %1177 = vmatprep.subr.bf16.mxu0 %v867
    %1178 = vmatpush1.bf16.msra.mxu0 %v866
    %1179 = vmatprep.subr.bf16.mxu0 %v871
    %1180 = vmatpush1.bf16.msra.mxu0 %v870
    %1181 = vmatprep.subr.bf16.mxu0 %v875
    %1182 = vmatpush1.bf16.msra.mxu0 %v874
    %1183 = vmatprep.subr.bf16.mxu0 %v879
    %1184 = vmatpush1.bf16.msra.mxu0 %v878
    %1185 = vmatprep.subr.bf16.mxu0 %v883
    %1186 = vmatpush1.bf16.msra.mxu0 %v882
    %1187 = vmatprep.subr.bf16.mxu0 %v887
    %1188 = vmatpush1.bf16.msra.mxu0 %v886
    %1189 = vmatprep.subr.bf16.mxu0 %v891
    %1190 = vmatpush1.bf16.msra.mxu0 %v890
    %1191 = vmatprep.subr.bf16.mxu0 %v895
    %1192 = vmatpush1.bf16.msra.mxu0 %v894
    %1193 = vmatprep.subr.bf16.mxu0 %v899
    %1194 = vmatpush1.bf16.msra.mxu0 %v898
    %1195 = vmatprep.subr.bf16.mxu0 %v903
    %1196 = vmatpush1.bf16.msra.mxu0 %v902
    %1197 = vmatprep.subr.bf16.mxu0 %v907
    %1198 = vmatpush1.bf16.msra.mxu0 %v906
    %1199 = vmatprep.subr.bf16.mxu0 %v911
    %1200 = vmatpush1.bf16.msra.mxu0 %v910
    %1201 = vmatprep.subr.bf16.mxu0 %v915
    %1202 = vmatpush1.bf16.msra.mxu0 %v914
    %1203 = vmatprep.subr.bf16.mxu0 %v919
    %1204 = vmatpush1.bf16.msra.mxu0 %v918
    %1205 = vmatprep.subr.bf16.mxu0 %v923
    %1206 = vmatpush1.bf16.msra.mxu0 %v922
    %1207 = vmatprep.mubr.bf16.mxu0 %v261
    %1208 = vmatmul.mubr.bf16.gmra.mrb[0].mxu0 %v260
    %v1209 = vpop.f32.mrb[0].mxu0
    %v1210 = vadd.f32 %v1169, %v1209
    %v1211 = vpop.f32.mrb[0].mxu0
    %v1212 = vadd.f32 %v1171, %v1211
    %v1213 = vpop.f32.mrb[0].mxu0
    %v1214 = vpop.f32.mrb[0].mxu0
    %1215 = vdwg.mxu0
    %v1216 = vmax.f32 %v1128, 0.0
    %v1217 = vmax.f32 %v1130, 0.0
    %v1218 = vmax.f32 %v1210, 0.0
    %v1219 = vmax.f32 %v1212, 0.0
    %v1220 = vpack.c.bf16 %v1216, %v1216
    %v1221 = vpack.c.bf16 %v1217, %v1217
    %v1222 = vpack.c.bf16 %v1218, %v1218
    %v1223 = vpack.c.bf16 %v1219, %v1219
    %v1224 = vld [vmem:[%s5] sm:$0xff]
    %v1225 = vld [vmem:[%s5 + $0x8] sm:$0xff]
    %v1226 = vld [vmem:[%s5 + $0x10] sm:$0xff]
    %v1227 = vld [vmem:[%s5 + $0x18] sm:$0xff]
    %v1228 = vld [vmem:[%s5 + $0x20] sm:$0xff]
    %v1229 = vld [vmem:[%s5 + $0x28] sm:$0xff]
    %v1230 = vld [vmem:[%s5 + $0x30] sm:$0xff]
    %v1231 = vld [vmem:[%s5 + $0x38] sm:$0xff]
    %v1232 = vld [vmem:[%s5 + $0x40] sm:$0xff]
    %v1233 = vld [vmem:[%s5 + $0x48] sm:$0xff]
    %v1234 = vld [vmem:[%s5 + $0x50] sm:$0xff]
    %v1235 = vld [vmem:[%s5 + $0x58] sm:$0xff]
    %v1236 = vld [vmem:[%s5 + $0x60] sm:$0xff]
    %v1237 = vld [vmem:[%s5 + $0x68] sm:$0xff]
    %v1238 = vld [vmem:[%s5 + $0x70] sm:$0xff]
    %v1239 = vld [vmem:[%s5 + $0x78] sm:$0xff]
    %v1240 = vld [vmem:[%s5 + $0x80] sm:$0xff]
    %v1241 = vld [vmem:[%s5 + $0x88] sm:$0xff]
    %v1242 = vld [vmem:[%s5 + $0x90] sm:$0xff]
    %v1243 = vld [vmem:[%s5 + $0x98] sm:$0xff]
    %v1244 = vld [vmem:[%s5 + $0xa0] sm:$0xff]
    %v1245 = vld [vmem:[%s5 + $0xa8] sm:$0xff]
    %v1246 = vld [vmem:[%s5 + $0xb0] sm:$0xff]
    %v1247 = vld [vmem:[%s5 + $0xb8] sm:$0xff]
    %v1248 = vld [vmem:[%s5 + $0xc0] sm:$0xff]
    %v1249 = vld [vmem:[%s5 + $0xc8] sm:$0xff]
    %v1250 = vld [vmem:[%s5 + $0xd0] sm:$0xff]
    %v1251 = vld [vmem:[%s5 + $0xd8] sm:$0xff]
    %v1252 = vld [vmem:[%s5 + $0xe0] sm:$0xff]
    %v1253 = vld [vmem:[%s5 + $0xe8] sm:$0xff]
    %v1254 = vld [vmem:[%s5 + $0xf0] sm:$0xff]
    %v1255 = vld [vmem:[%s5 + $0xf8] sm:$0xff]
    %v1256 = vld [vmem:[%s5 + $0x100] sm:$0xff]
    %v1257 = vld [vmem:[%s5 + $0x108] sm:$0xff]
    %v1258 = vld [vmem:[%s5 + $0x110] sm:$0xff]
    %v1259 = vld [vmem:[%s5 + $0x118] sm:$0xff]
    %v1260 = vld [vmem:[%s5 + $0x120] sm:$0xff]
    %v1261 = vld [vmem:[%s5 + $0x128] sm:$0xff]
    %v1262 = vld [vmem:[%s5 + $0x130] sm:$0xff]
    %v1263 = vld [vmem:[%s5 + $0x138] sm:$0xff]
    %v1264 = vld [vmem:[%s5 + $0x140] sm:$0xff]
    %v1265 = vld [vmem:[%s5 + $0x148] sm:$0xff]
    %v1266 = vld [vmem:[%s5 + $0x150] sm:$0xff]
    %v1267 = vld [vmem:[%s5 + $0x158] sm:$0xff]
    %v1268 = vld [vmem:[%s5 + $0x160] sm:$0xff]
    %v1269 = vld [vmem:[%s5 + $0x168] sm:$0xff]
    %v1270 = vld [vmem:[%s5 + $0x170] sm:$0xff]
    %v1271 = vld [vmem:[%s5 + $0x178] sm:$0xff]
    %v1272 = vld [vmem:[%s5 + $0x180] sm:$0xff]
    %v1273 = vld [vmem:[%s5 + $0x188] sm:$0xff]
    %v1274 = vld [vmem:[%s5 + $0x190] sm:$0xff]
    %v1275 = vld [vmem:[%s5 + $0x198] sm:$0xff]
    %v1276 = vld [vmem:[%s5 + $0x1a0] sm:$0xff]
    %v1277 = vld [vmem:[%s5 + $0x1a8] sm:$0xff]
    %v1278 = vld [vmem:[%s5 + $0x1b0] sm:$0xff]
    %v1279 = vld [vmem:[%s5 + $0x1b8] sm:$0xff]
    %v1280 = vld [vmem:[%s5 + $0x1c0] sm:$0xff]
    %v1281 = vld [vmem:[%s5 + $0x1c8] sm:$0xff]
    %v1282 = vld [vmem:[%s5 + $0x1d0] sm:$0xff]
    %v1283 = vld [vmem:[%s5 + $0x1d8] sm:$0xff]
    %v1284 = vld [vmem:[%s5 + $0x1e0] sm:$0xff]
    %v1285 = vld [vmem:[%s5 + $0x1e8] sm:$0xff]
    %v1286 = vld [vmem:[%s5 + $0x1f0] sm:$0xff]
    %v1287 = vld [vmem:[%s5 + $0x1f8] sm:$0xff]
    %v1288 = vld [vmem:[%s5 + $0x200] sm:$0xff]
    %v1289 = vld [vmem:[%s5 + $0x208] sm:$0xff]
    %v1290 = vld [vmem:[%s5 + $0x210] sm:$0xff]
    %v1291 = vld [vmem:[%s5 + $0x218] sm:$0xff]
    %v1292 = vld [vmem:[%s5 + $0x220] sm:$0xff]
    %v1293 = vld [vmem:[%s5 + $0x228] sm:$0xff]
    %v1294 = vld [vmem:[%s5 + $0x230] sm:$0xff]
    %v1295 = vld [vmem:[%s5 + $0x238] sm:$0xff]
    %v1296 = vld [vmem:[%s5 + $0x240] sm:$0xff]
    %v1297 = vld [vmem:[%s5 + $0x248] sm:$0xff]
    %v1298 = vld [vmem:[%s5 + $0x250] sm:$0xff]
    %v1299 = vld [vmem:[%s5 + $0x258] sm:$0xff]
    %v1300 = vld [vmem:[%s5 + $0x260] sm:$0xff]
    %v1301 = vld [vmem:[%s5 + $0x268] sm:$0xff]
    %v1302 = vld [vmem:[%s5 + $0x270] sm:$0xff]
    %v1303 = vld [vmem:[%s5 + $0x278] sm:$0xff]
    %v1304 = vld [vmem:[%s5 + $0x280] sm:$0xff]
    %v1305 = vld [vmem:[%s5 + $0x288] sm:$0xff]
    %v1306 = vld [vmem:[%s5 + $0x290] sm:$0xff]
    %v1307 = vld [vmem:[%s5 + $0x298] sm:$0xff]
    %v1308 = vld [vmem:[%s5 + $0x2a0] sm:$0xff]
    %v1309 = vld [vmem:[%s5 + $0x2a8] sm:$0xff]
    %v1310 = vld [vmem:[%s5 + $0x2b0] sm:$0xff]
    %v1311 = vld [vmem:[%s5 + $0x2b8] sm:$0xff]
    %v1312 = vld [vmem:[%s5 + $0x2c0] sm:$0xff]
    %v1313 = vld [vmem:[%s5 + $0x2c8] sm:$0xff]
    %v1314 = vld [vmem:[%s5 + $0x2d0] sm:$0xff]
    %v1315 = vld [vmem:[%s5 + $0x2d8] sm:$0xff]
    %v1316 = vld [vmem:[%s5 + $0x2e0] sm:$0xff]
    %v1317 = vld [vmem:[%s5 + $0x2e8] sm:$0xff]
    %v1318 = vld [vmem:[%s5 + $0x2f0] sm:$0xff]
    %v1319 = vld [vmem:[%s5 + $0x2f8] sm:$0xff]
    %v1320 = vld [vmem:[%s5 + $0x300] sm:$0xff]
    %v1321 = vld [vmem:[%s5 + $0x308] sm:$0xff]
    %v1322 = vld [vmem:[%s5 + $0x310] sm:$0xff]
    %v1323 = vld [vmem:[%s5 + $0x318] sm:$0xff]
    %v1324 = vld [vmem:[%s5 + $0x320] sm:$0xff]
    %v1325 = vld [vmem:[%s5 + $0x328] sm:$0xff]
    %v1326 = vld [vmem:[%s5 + $0x330] sm:$0xff]
    %v1327 = vld [vmem:[%s5 + $0x338] sm:$0xff]
    %v1328 = vld [vmem:[%s5 + $0x340] sm:$0xff]
    %v1329 = vld [vmem:[%s5 + $0x348] sm:$0xff]
    %v1330 = vld [vmem:[%s5 + $0x350] sm:$0xff]
    %v1331 = vld [vmem:[%s5 + $0x358] sm:$0xff]
    %v1332 = vld [vmem:[%s5 + $0x360] sm:$0xff]
    %v1333 = vld [vmem:[%s5 + $0x368] sm:$0xff]
    %v1334 = vld [vmem:[%s5 + $0x370] sm:$0xff]
    %v1335 = vld [vmem:[%s5 + $0x378] sm:$0xff]
    %v1336 = vld [vmem:[%s5 + $0x380] sm:$0xff]
    %v1337 = vld [vmem:[%s5 + $0x388] sm:$0xff]
    %v1338 = vld [vmem:[%s5 + $0x390] sm:$0xff]
    %v1339 = vld [vmem:[%s5 + $0x398] sm:$0xff]
    %v1340 = vld [vmem:[%s5 + $0x3a0] sm:$0xff]
    %v1341 = vld [vmem:[%s5 + $0x3a8] sm:$0xff]
    %v1342 = vld [vmem:[%s5 + $0x3b0] sm:$0xff]
    %v1343 = vld [vmem:[%s5 + $0x3b8] sm:$0xff]
    %v1344 = vld [vmem:[%s5 + $0x3c0] sm:$0xff]
    %v1345 = vld [vmem:[%s5 + $0x3c8] sm:$0xff]
    %v1346 = vld [vmem:[%s5 + $0x3d0] sm:$0xff]
    %v1347 = vld [vmem:[%s5 + $0x3d8] sm:$0xff]
    %v1348 = vld [vmem:[%s5 + $0x3e0] sm:$0xff]
    %v1349 = vld [vmem:[%s5 + $0x3e8] sm:$0xff]
    %v1350 = vld [vmem:[%s5 + $0x3f0] sm:$0xff]
    %v1351 = vld [vmem:[%s5 + $0x3f8] sm:$0xff]
    %v1352 = vld [vmem:[%s6] sm:$0xf]
    %v1354 = vlaneseq
    %v1355 = vshrl.u32 %v1354, 7
    %v1356 = vsub.s32 0, %v1355
    %v1357 = vrot.slane %v1352, %v1356
    %v1358 = vlaneseq
    %v1359 = vshrl.u32 %v1358, 7
    %v1360 = vsub.s32 1, %v1359
    %v1361 = vrot.slane %v1352, %v1360
    %v1362 = vlaneseq
    %v1363 = vshrl.u32 %v1362, 7
    %v1364 = vsub.s32 2, %v1363
    %v1365 = vrot.slane %v1352, %v1364
    %v1366 = vlaneseq
    %v1367 = vshrl.u32 %v1366, 7
    %v1368 = vsub.s32 3, %v1367
    %v1369 = vrot.slane %v1352, %v1368
    %v1502 = vunpack.c.l.b16 %v1224
    %v1503 = vunpack.c.h.b16 %v1224
    %v1504 = vunpack.c.l.b16 %v1225
    %v1505 = vunpack.c.h.b16 %v1225
    %v1506 = vunpack.c.l.b16 %v1226
    %v1507 = vunpack.c.h.b16 %v1226
    %v1508 = vunpack.c.l.b16 %v1227
    %v1509 = vunpack.c.h.b16 %v1227
    %v1510 = vunpack.c.l.b16 %v1228
    %v1511 = vunpack.c.h.b16 %v1228
    %v1512 = vunpack.c.l.b16 %v1229
    %v1513 = vunpack.c.h.b16 %v1229
    %v1514 = vunpack.c.l.b16 %v1230
    %v1515 = vunpack.c.h.b16 %v1230
    %v1516 = vunpack.c.l.b16 %v1231
    %v1517 = vunpack.c.h.b16 %v1231
    %v1518 = vunpack.c.l.b16 %v1232
    %v1519 = vunpack.c.h.b16 %v1232
    %v1520 = vunpack.c.l.b16 %v1233
    %v1521 = vunpack.c.h.b16 %v1233
    %v1522 = vunpack.c.l.b16 %v1234
    %v1523 = vunpack.c.h.b16 %v1234
    %v1524 = vunpack.c.l.b16 %v1235
    %v1525 = vunpack.c.h.b16 %v1235
    %v1526 = vunpack.c.l.b16 %v1236
    %v1527 = vunpack.c.h.b16 %v1236
    %v1528 = vunpack.c.l.b16 %v1237
    %v1529 = vunpack.c.h.b16 %v1237
    %v1530 = vunpack.c.l.b16 %v1238
    %v1531 = vunpack.c.h.b16 %v1238
    %v1532 = vunpack.c.l.b16 %v1239
    %v1533 = vunpack.c.h.b16 %v1239
    %v1534 = vunpack.c.l.b16 %v1240
    %v1535 = vunpack.c.h.b16 %v1240
    %v1536 = vunpack.c.l.b16 %v1241
    %v1537 = vunpack.c.h.b16 %v1241
    %v1538 = vunpack.c.l.b16 %v1242
    %v1539 = vunpack.c.h.b16 %v1242
    %v1540 = vunpack.c.l.b16 %v1243
    %v1541 = vunpack.c.h.b16 %v1243
    %v1542 = vunpack.c.l.b16 %v1244
    %v1543 = vunpack.c.h.b16 %v1244
    %v1544 = vunpack.c.l.b16 %v1245
    %v1545 = vunpack.c.h.b16 %v1245
    %v1546 = vunpack.c.l.b16 %v1246
    %v1547 = vunpack.c.h.b16 %v1246
    %v1548 = vunpack.c.l.b16 %v1247
    %v1549 = vunpack.c.h.b16 %v1247
    %v1550 = vunpack.c.l.b16 %v1248
    %v1551 = vunpack.c.h.b16 %v1248
    %v1552 = vunpack.c.l.b16 %v1249
    %v1553 = vunpack.c.h.b16 %v1249
    %v1554 = vunpack.c.l.b16 %v1250
    %v1555 = vunpack.c.h.b16 %v1250
    %v1556 = vunpack.c.l.b16 %v1251
    %v1557 = vunpack.c.h.b16 %v1251
    %v1558 = vunpack.c.l.b16 %v1252
    %v1559 = vunpack.c.h.b16 %v1252
    %v1560 = vunpack.c.l.b16 %v1253
    %v1561 = vunpack.c.h.b16 %v1253
    %v1562 = vunpack.c.l.b16 %v1254
    %v1563 = vunpack.c.h.b16 %v1254
    %v1564 = vunpack.c.l.b16 %v1255
    %v1565 = vunpack.c.h.b16 %v1255
    %v1566 = vunpack.c.l.b16 %v1256
    %v1567 = vunpack.c.h.b16 %v1256
    %v1568 = vunpack.c.l.b16 %v1257
    %v1569 = vunpack.c.h.b16 %v1257
    %v1570 = vunpack.c.l.b16 %v1258
    %v1571 = vunpack.c.h.b16 %v1258
    %v1572 = vunpack.c.l.b16 %v1259
    %v1573 = vunpack.c.h.b16 %v1259
    %v1574 = vunpack.c.l.b16 %v1260
    %v1575 = vunpack.c.h.b16 %v1260
    %v1576 = vunpack.c.l.b16 %v1261
    %v1577 = vunpack.c.h.b16 %v1261
    %v1578 = vunpack.c.l.b16 %v1262
    %v1579 = vunpack.c.h.b16 %v1262
    %v1580 = vunpack.c.l.b16 %v1263
    %v1581 = vunpack.c.h.b16 %v1263
    %v1582 = vunpack.c.l.b16 %v1264
    %v1583 = vunpack.c.h.b16 %v1264
    %v1584 = vunpack.c.l.b16 %v1265
    %v1585 = vunpack.c.h.b16 %v1265
    %v1586 = vunpack.c.l.b16 %v1266
    %v1587 = vunpack.c.h.b16 %v1266
    %v1588 = vunpack.c.l.b16 %v1267
    %v1589 = vunpack.c.h.b16 %v1267
    %v1590 = vunpack.c.l.b16 %v1268
    %v1591 = vunpack.c.h.b16 %v1268
    %v1592 = vunpack.c.l.b16 %v1269
    %v1593 = vunpack.c.h.b16 %v1269
    %v1594 = vunpack.c.l.b16 %v1270
    %v1595 = vunpack.c.h.b16 %v1270
    %v1596 = vunpack.c.l.b16 %v1271
    %v1597 = vunpack.c.h.b16 %v1271
    %v1598 = vunpack.c.l.b16 %v1272
    %v1599 = vunpack.c.h.b16 %v1272
    %v1600 = vunpack.c.l.b16 %v1273
    %v1601 = vunpack.c.h.b16 %v1273
    %v1602 = vunpack.c.l.b16 %v1274
    %v1603 = vunpack.c.h.b16 %v1274
    %v1604 = vunpack.c.l.b16 %v1275
    %v1605 = vunpack.c.h.b16 %v1275
    %v1606 = vunpack.c.l.b16 %v1276
    %v1607 = vunpack.c.h.b16 %v1276
    %v1608 = vunpack.c.l.b16 %v1277
    %v1609 = vunpack.c.h.b16 %v1277
    %v1610 = vunpack.c.l.b16 %v1278
    %v1611 = vunpack.c.h.b16 %v1278
    %v1612 = vunpack.c.l.b16 %v1279
    %v1613 = vunpack.c.h.b16 %v1279
    %v1614 = vunpack.c.l.b16 %v1280
    %v1615 = vunpack.c.h.b16 %v1280
    %v1616 = vunpack.c.l.b16 %v1281
    %v1617 = vunpack.c.h.b16 %v1281
    %v1618 = vunpack.c.l.b16 %v1282
    %v1619 = vunpack.c.h.b16 %v1282
    %v1620 = vunpack.c.l.b16 %v1283
    %v1621 = vunpack.c.h.b16 %v1283
    %v1622 = vunpack.c.l.b16 %v1284
    %v1623 = vunpack.c.h.b16 %v1284
    %v1624 = vunpack.c.l.b16 %v1285
    %v1625 = vunpack.c.h.b16 %v1285
    %v1626 = vunpack.c.l.b16 %v1286
    %v1627 = vunpack.c.h.b16 %v1286
    %v1628 = vunpack.c.l.b16 %v1287
    %v1629 = vunpack.c.h.b16 %v1287
    %v1630 = vunpack.c.l.b16 %v1288
    %v1631 = vunpack.c.h.b16 %v1288
    %v1632 = vunpack.c.l.b16 %v1289
    %v1633 = vunpack.c.h.b16 %v1289
    %v1634 = vunpack.c.l.b16 %v1290
    %v1635 = vunpack.c.h.b16 %v1290
    %v1636 = vunpack.c.l.b16 %v1291
    %v1637 = vunpack.c.h.b16 %v1291
    %v1638 = vunpack.c.l.b16 %v1292
    %v1639 = vunpack.c.h.b16 %v1292
    %v1640 = vunpack.c.l.b16 %v1293
    %v1641 = vunpack.c.h.b16 %v1293
    %v1642 = vunpack.c.l.b16 %v1294
    %v1643 = vunpack.c.h.b16 %v1294
    %v1644 = vunpack.c.l.b16 %v1295
    %v1645 = vunpack.c.h.b16 %v1295
    %v1646 = vunpack.c.l.b16 %v1296
    %v1647 = vunpack.c.h.b16 %v1296
    %v1648 = vunpack.c.l.b16 %v1297
    %v1649 = vunpack.c.h.b16 %v1297
    %v1650 = vunpack.c.l.b16 %v1298
    %v1651 = vunpack.c.h.b16 %v1298
    %v1652 = vunpack.c.l.b16 %v1299
    %v1653 = vunpack.c.h.b16 %v1299
    %v1654 = vunpack.c.l.b16 %v1300
    %v1655 = vunpack.c.h.b16 %v1300
    %v1656 = vunpack.c.l.b16 %v1301
    %v1657 = vunpack.c.h.b16 %v1301
    %v1658 = vunpack.c.l.b16 %v1302
    %v1659 = vunpack.c.h.b16 %v1302
    %v1660 = vunpack.c.l.b16 %v1303
    %v1661 = vunpack.c.h.b16 %v1303
    %v1662 = vunpack.c.l.b16 %v1304
    %v1663 = vunpack.c.h.b16 %v1304
    %v1664 = vunpack.c.l.b16 %v1305
    %v1665 = vunpack.c.h.b16 %v1305
    %v1666 = vunpack.c.l.b16 %v1306
    %v1667 = vunpack.c.h.b16 %v1306
    %v1668 = vunpack.c.l.b16 %v1307
    %v1669 = vunpack.c.h.b16 %v1307
    %v1670 = vunpack.c.l.b16 %v1308
    %v1671 = vunpack.c.h.b16 %v1308
    %v1672 = vunpack.c.l.b16 %v1309
    %v1673 = vunpack.c.h.b16 %v1309
    %v1674 = vunpack.c.l.b16 %v1310
    %v1675 = vunpack.c.h.b16 %v1310
    %v1676 = vunpack.c.l.b16 %v1311
    %v1677 = vunpack.c.h.b16 %v1311
    %v1678 = vunpack.c.l.b16 %v1312
    %v1679 = vunpack.c.h.b16 %v1312
    %v1680 = vunpack.c.l.b16 %v1313
    %v1681 = vunpack.c.h.b16 %v1313
    %v1682 = vunpack.c.l.b16 %v1314
    %v1683 = vunpack.c.h.b16 %v1314
    %v1684 = vunpack.c.l.b16 %v1315
    %v1685 = vunpack.c.h.b16 %v1315
    %v1686 = vunpack.c.l.b16 %v1316
    %v1687 = vunpack.c.h.b16 %v1316
    %v1688 = vunpack.c.l.b16 %v1317
    %v1689 = vunpack.c.h.b16 %v1317
    %v1690 = vunpack.c.l.b16 %v1318
    %v1691 = vunpack.c.h.b16 %v1318
    %v1692 = vunpack.c.l.b16 %v1319
    %v1693 = vunpack.c.h.b16 %v1319
    %v1694 = vunpack.c.l.b16 %v1320
    %v1695 = vunpack.c.h.b16 %v1320
    %v1696 = vunpack.c.l.b16 %v1321
    %v1697 = vunpack.c.h.b16 %v1321
    %v1698 = vunpack.c.l.b16 %v1322
    %v1699 = vunpack.c.h.b16 %v1322
    %v1700 = vunpack.c.l.b16 %v1323
    %v1701 = vunpack.c.h.b16 %v1323
    %v1702 = vunpack.c.l.b16 %v1324
    %v1703 = vunpack.c.h.b16 %v1324
    %v1704 = vunpack.c.l.b16 %v1325
    %v1705 = vunpack.c.h.b16 %v1325
    %v1706 = vunpack.c.l.b16 %v1326
    %v1707 = vunpack.c.h.b16 %v1326
    %v1708 = vunpack.c.l.b16 %v1327
    %v1709 = vunpack.c.h.b16 %v1327
    %v1710 = vunpack.c.l.b16 %v1328
    %v1711 = vunpack.c.h.b16 %v1328
    %v1712 = vunpack.c.l.b16 %v1329
    %v1713 = vunpack.c.h.b16 %v1329
    %v1714 = vunpack.c.l.b16 %v1330
    %v1715 = vunpack.c.h.b16 %v1330
    %v1716 = vunpack.c.l.b16 %v1331
    %v1717 = vunpack.c.h.b16 %v1331
    %v1718 = vunpack.c.l.b16 %v1332
    %v1719 = vunpack.c.h.b16 %v1332
    %v1720 = vunpack.c.l.b16 %v1333
    %v1721 = vunpack.c.h.b16 %v1333
    %v1722 = vunpack.c.l.b16 %v1334
    %v1723 = vunpack.c.h.b16 %v1334
    %v1724 = vunpack.c.l.b16 %v1335
    %v1725 = vunpack.c.h.b16 %v1335
    %v1726 = vunpack.c.l.b16 %v1336
    %v1727 = vunpack.c.h.b16 %v1336
    %v1728 = vunpack.c.l.b16 %v1337
    %v1729 = vunpack.c.h.b16 %v1337
    %v1730 = vunpack.c.l.b16 %v1338
    %v1731 = vunpack.c.h.b16 %v1338
    %v1732 = vunpack.c.l.b16 %v1339
    %v1733 = vunpack.c.h.b16 %v1339
    %v1734 = vunpack.c.l.b16 %v1340
    %v1735 = vunpack.c.h.b16 %v1340
    %v1736 = vunpack.c.l.b16 %v1341
    %v1737 = vunpack.c.h.b16 %v1341
    %v1738 = vunpack.c.l.b16 %v1342
    %v1739 = vunpack.c.h.b16 %v1342
    %v1740 = vunpack.c.l.b16 %v1343
    %v1741 = vunpack.c.h.b16 %v1343
    %v1742 = vunpack.c.l.b16 %v1344
    %v1743 = vunpack.c.h.b16 %v1344
    %v1744 = vunpack.c.l.b16 %v1345
    %v1745 = vunpack.c.h.b16 %v1345
    %v1746 = vunpack.c.l.b16 %v1346
    %v1747 = vunpack.c.h.b16 %v1346
    %v1748 = vunpack.c.l.b16 %v1347
    %v1749 = vunpack.c.h.b16 %v1347
    %v1750 = vunpack.c.l.b16 %v1348
    %v1751 = vunpack.c.h.b16 %v1348
    %v1752 = vunpack.c.l.b16 %v1349
    %v1753 = vunpack.c.h.b16 %v1349
    %v1754 = vunpack.c.l.b16 %v1350
    %v1755 = vunpack.c.h.b16 %v1350
    %v1756 = vunpack.c.l.b16 %v1351
    %v1757 = vunpack.c.h.b16 %v1351
    %v1758 = vpack.c.b16 %v1506, %v1502
    %v1759 = vpack.c.b16 %v1507, %v1503
    %v1760 = vpack.c.b16 %v1508, %v1504
    %v1761 = vpack.c.b16 %v1509, %v1505
    %v1762 = vpack.c.b16 %v1514, %v1510
    %v1763 = vpack.c.b16 %v1515, %v1511
    %v1764 = vpack.c.b16 %v1516, %v1512
    %v1765 = vpack.c.b16 %v1517, %v1513
    %v1766 = vpack.c.b16 %v1522, %v1518
    %v1767 = vpack.c.b16 %v1523, %v1519
    %v1768 = vpack.c.b16 %v1524, %v1520
    %v1769 = vpack.c.b16 %v1525, %v1521
    %v1770 = vpack.c.b16 %v1530, %v1526
    %v1771 = vpack.c.b16 %v1531, %v1527
    %v1772 = vpack.c.b16 %v1532, %v1528
    %v1773 = vpack.c.b16 %v1533, %v1529
    %v1774 = vpack.c.b16 %v1538, %v1534
    %v1775 = vpack.c.b16 %v1539, %v1535
    %v1776 = vpack.c.b16 %v1540, %v1536
    %v1777 = vpack.c.b16 %v1541, %v1537
    %v1778 = vpack.c.b16 %v1546, %v1542
    %v1779 = vpack.c.b16 %v1547, %v1543
    %v1780 = vpack.c.b16 %v1548, %v1544
    %v1781 = vpack.c.b16 %v1549, %v1545
    %v1782 = vpack.c.b16 %v1554, %v1550
    %v1783 = vpack.c.b16 %v1555, %v1551
    %v1784 = vpack.c.b16 %v1556, %v1552
    %v1785 = vpack.c.b16 %v1557, %v1553
    %v1786 = vpack.c.b16 %v1562, %v1558
    %v1787 = vpack.c.b16 %v1563, %v1559
    %v1788 = vpack.c.b16 %v1564, %v1560
    %v1789 = vpack.c.b16 %v1565, %v1561
    %v1790 = vpack.c.b16 %v1570, %v1566
    %v1791 = vpack.c.b16 %v1571, %v1567
    %v1792 = vpack.c.b16 %v1572, %v1568
    %v1793 = vpack.c.b16 %v1573, %v1569
    %v1794 = vpack.c.b16 %v1578, %v1574
    %v1795 = vpack.c.b16 %v1579, %v1575
    %v1796 = vpack.c.b16 %v1580, %v1576
    %v1797 = vpack.c.b16 %v1581, %v1577
    %v1798 = vpack.c.b16 %v1586, %v1582
    %v1799 = vpack.c.b16 %v1587, %v1583
    %v1800 = vpack.c.b16 %v1588, %v1584
    %v1801 = vpack.c.b16 %v1589, %v1585
    %v1802 = vpack.c.b16 %v1594, %v1590
    %v1803 = vpack.c.b16 %v1595, %v1591
    %v1804 = vpack.c.b16 %v1596, %v1592
    %v1805 = vpack.c.b16 %v1597, %v1593
    %v1806 = vpack.c.b16 %v1602, %v1598
    %v1807 = vpack.c.b16 %v1603, %v1599
    %v1808 = vpack.c.b16 %v1604, %v1600
    %v1809 = vpack.c.b16 %v1605, %v1601
    %v1810 = vpack.c.b16 %v1610, %v1606
    %v1811 = vpack.c.b16 %v1611, %v1607
    %v1812 = vpack.c.b16 %v1612, %v1608
    %v1813 = vpack.c.b16 %v1613, %v1609
    %v1814 = vpack.c.b16 %v1618, %v1614
    %v1815 = vpack.c.b16 %v1619, %v1615
    %v1816 = vpack.c.b16 %v1620, %v1616
    %v1817 = vpack.c.b16 %v1621, %v1617
    %v1818 = vpack.c.b16 %v1626, %v1622
    %v1819 = vpack.c.b16 %v1627, %v1623
    %v1820 = vpack.c.b16 %v1628, %v1624
    %v1821 = vpack.c.b16 %v1629, %v1625
    %v1822 = vpack.c.b16 %v1634, %v1630
    %v1823 = vpack.c.b16 %v1635, %v1631
    %v1824 = vpack.c.b16 %v1636, %v1632
    %v1825 = vpack.c.b16 %v1637, %v1633
    %v1826 = vpack.c.b16 %v1642, %v1638
    %v1827 = vpack.c.b16 %v1643, %v1639
    %v1828 = vpack.c.b16 %v1644, %v1640
    %v1829 = vpack.c.b16 %v1645, %v1641
    %v1830 = vpack.c.b16 %v1650, %v1646
    %v1831 = vpack.c.b16 %v1651, %v1647
    %v1832 = vpack.c.b16 %v1652, %v1648
    %v1833 = vpack.c.b16 %v1653, %v1649
    %v1834 = vpack.c.b16 %v1658, %v1654
    %v1835 = vpack.c.b16 %v1659, %v1655
    %v1836 = vpack.c.b16 %v1660, %v1656
    %v1837 = vpack.c.b16 %v1661, %v1657
    %v1838 = vpack.c.b16 %v1666, %v1662
    %v1839 = vpack.c.b16 %v1667, %v1663
    %v1840 = vpack.c.b16 %v1668, %v1664
    %v1841 = vpack.c.b16 %v1669, %v1665
    %v1842 = vpack.c.b16 %v1674, %v1670
    %v1843 = vpack.c.b16 %v1675, %v1671
    %v1844 = vpack.c.b16 %v1676, %v1672
    %v1845 = vpack.c.b16 %v1677, %v1673
    %v1846 = vpack.c.b16 %v1682, %v1678
    %v1847 = vpack.c.b16 %v1683, %v1679
    %v1848 = vpack.c.b16 %v1684, %v1680
    %v1849 = vpack.c.b16 %v1685, %v1681
    %v1850 = vpack.c.b16 %v1690, %v1686
    %v1851 = vpack.c.b16 %v1691, %v1687
    %v1852 = vpack.c.b16 %v1692, %v1688
    %v1853 = vpack.c.b16 %v1693, %v1689
    %v1854 = vpack.c.b16 %v1698, %v1694
    %v1855 = vpack.c.b16 %v1699, %v1695
    %v1856 = vpack.c.b16 %v1700, %v1696
    %v1857 = vpack.c.b16 %v1701, %v1697
    %v1858 = vpack.c.b16 %v1706, %v1702
    %v1859 = vpack.c.b16 %v1707, %v1703
    %v1860 = vpack.c.b16 %v1708, %v1704
    %v1861 = vpack.c.b16 %v1709, %v1705
    %v1862 = vpack.c.b16 %v1714, %v1710
    %v1863 = vpack.c.b16 %v1715, %v1711
    %v1864 = vpack.c.b16 %v1716, %v1712
    %v1865 = vpack.c.b16 %v1717, %v1713
    %v1866 = vpack.c.b16 %v1722, %v1718
    %v1867 = vpack.c.b16 %v1723, %v1719
    %v1868 = vpack.c.b16 %v1724, %v1720
    %v1869 = vpack.c.b16 %v1725, %v1721
    %v1870 = vpack.c.b16 %v1730, %v1726
    %v1871 = vpack.c.b16 %v1731, %v1727
    %v1872 = vpack.c.b16 %v1732, %v1728
    %v1873 = vpack.c.b16 %v1733, %v1729
    %v1874 = vpack.c.b16 %v1738, %v1734
    %v1875 = vpack.c.b16 %v1739, %v1735
    %v1876 = vpack.c.b16 %v1740, %v1736
    %v1877 = vpack.c.b16 %v1741, %v1737
    %v1878 = vpack.c.b16 %v1746, %v1742
    %v1879 = vpack.c.b16 %v1747, %v1743
    %v1880 = vpack.c.b16 %v1748, %v1744
    %v1881 = vpack.c.b16 %v1749, %v1745
    %v1882 = vpack.c.b16 %v1754, %v1750
    %v1883 = vpack.c.b16 %v1755, %v1751
    %v1884 = vpack.c.b16 %v1756, %v1752
    %v1885 = vpack.c.b16 %v1757, %v1753
    %2014 = vmatprep.subr.bf16.mxu0 %v1759
    %2015 = vmatpush1.bf16.msra.mxu0 %v1758
    %2016 = vmatprep.subr.bf16.mxu0 %v1763
    %2017 = vmatpush1.bf16.msra.mxu0 %v1762
    %2018 = vmatprep.subr.bf16.mxu0 %v1767
    %2019 = vmatpush1.bf16.msra.mxu0 %v1766
    %2020 = vmatprep.subr.bf16.mxu0 %v1771
    %2021 = vmatpush1.bf16.msra.mxu0 %v1770
    %2022 = vmatprep.subr.bf16.mxu0 %v1775
    %2023 = vmatpush1.bf16.msra.mxu0 %v1774
    %2024 = vmatprep.subr.bf16.mxu0 %v1779
    %2025 = vmatpush1.bf16.msra.mxu0 %v1778
    %2026 = vmatprep.subr.bf16.mxu0 %v1783
    %2027 = vmatpush1.bf16.msra.mxu0 %v1782
    %2028 = vmatprep.subr.bf16.mxu0 %v1787
    %2029 = vmatpush1.bf16.msra.mxu0 %v1786
    %2030 = vmatprep.subr.bf16.mxu0 %v1791
    %2031 = vmatpush1.bf16.msra.mxu0 %v1790
    %2032 = vmatprep.subr.bf16.mxu0 %v1795
    %2033 = vmatpush1.bf16.msra.mxu0 %v1794
    %2034 = vmatprep.subr.bf16.mxu0 %v1799
    %2035 = vmatpush1.bf16.msra.mxu0 %v1798
    %2036 = vmatprep.subr.bf16.mxu0 %v1803
    %2037 = vmatpush1.bf16.msra.mxu0 %v1802
    %2038 = vmatprep.subr.bf16.mxu0 %v1807
    %2039 = vmatpush1.bf16.msra.mxu0 %v1806
    %2040 = vmatprep.subr.bf16.mxu0 %v1811
    %2041 = vmatpush1.bf16.msra.mxu0 %v1810
    %2042 = vmatprep.subr.bf16.mxu0 %v1815
    %2043 = vmatpush1.bf16.msra.mxu0 %v1814
    %2044 = vmatprep.subr.bf16.mxu0 %v1819
    %2045 = vmatpush1.bf16.msra.mxu0 %v1818
    %2046 = vmatprep.mubr.bf16.mxu0 %v1221
    %2047 = vmatmul.mubr.bf16.gmra.mrb[0].mxu0 %v1220
    %v2048 = vpop.f32.mrb[0].mxu0
    %v2049 = vadd.f32 %v1357, %v2048
    %v2050 = vpop.f32.mrb[0].mxu0
    %v2051 = vadd.f32 %v1361, %v2050
    %v2052 = vpop.f32.mrb[0].mxu0
    %v2053 = vpop.f32.mrb[0].mxu0
    %2054 = vdwg.mxu0
    %2055 = vmatprep.subr.bf16.mxu0 %v1823
    %2056 = vmatpush1.bf16.msra.mxu0 %v1822
    %2057 = vmatprep.subr.bf16.mxu0 %v1827
    %2058 = vmatpush1.bf16.msra.mxu0 %v1826
    %2059 = vmatprep.subr.bf16.mxu0 %v1831
    %2060 = vmatpush1.bf16.msra.mxu0 %v1830
    %2061 = vmatprep.subr.bf16.mxu0 %v1835
    %2062 = vmatpush1.bf16.msra.mxu0 %v1834
    %2063 = vmatprep.subr.bf16.mxu0 %v1839
    %2064 = vmatpush1.bf16.msra.mxu0 %v1838
    %2065 = vmatprep.subr.bf16.mxu0 %v1843
    %2066 = vmatpush1.bf16.msra.mxu0 %v1842
    %2067 = vmatprep.subr.bf16.mxu0 %v1847
    %2068 = vmatpush1.bf16.msra.mxu0 %v1846
    %2069 = vmatprep.subr.bf16.mxu0 %v1851
    %2070 = vmatpush1.bf16.msra.mxu0 %v1850
    %2071 = vmatprep.subr.bf16.mxu0 %v1855
    %2072 = vmatpush1.bf16.msra.mxu0 %v1854
    %2073 = vmatprep.subr.bf16.mxu0 %v1859
    %2074 = vmatpush1.bf16.msra.mxu0 %v1858
    %2075 = vmatprep.subr.bf16.mxu0 %v1863
    %2076 = vmatpush1.bf16.msra.mxu0 %v1862
    %2077 = vmatprep.subr.bf16.mxu0 %v1867
    %2078 = vmatpush1.bf16.msra.mxu0 %v1866
    %2079 = vmatprep.subr.bf16.mxu0 %v1871
    %2080 = vmatpush1.bf16.msra.mxu0 %v1870
    %2081 = vmatprep.subr.bf16.mxu0 %v1875
    %2082 = vmatpush1.bf16.msra.mxu0 %v1874
    %2083 = vmatprep.subr.bf16.mxu0 %v1879
    %2084 = vmatpush1.bf16.msra.mxu0 %v1878
    %2085 = vmatprep.subr.bf16.mxu0 %v1883
    %2086 = vmatpush1.bf16.msra.mxu0 %v1882
    %2087 = vmatprep.mubr.bf16.mxu0 %v1223
    %2088 = vmatmul.mubr.bf16.gmra.mrb[0].mxu0 %v1222
    %v2089 = vpop.f32.mrb[0].mxu0
    %v2090 = vadd.f32 %v2049, %v2089
    %v2091 = vpop.f32.mrb[0].mxu0
    %v2092 = vadd.f32 %v2051, %v2091
    %v2093 = vpop.f32.mrb[0].mxu0
    %v2094 = vpop.f32.mrb[0].mxu0
    %2095 = vdwg.mxu0
    %2096 = vmatprep.subr.bf16.mxu0 %v1761
    %2097 = vmatpush1.bf16.msra.mxu0 %v1760
    %2098 = vmatprep.subr.bf16.mxu0 %v1765
    %2099 = vmatpush1.bf16.msra.mxu0 %v1764
    %2100 = vmatprep.subr.bf16.mxu0 %v1769
    %2101 = vmatpush1.bf16.msra.mxu0 %v1768
    %2102 = vmatprep.subr.bf16.mxu0 %v1773
    %2103 = vmatpush1.bf16.msra.mxu0 %v1772
    %2104 = vmatprep.subr.bf16.mxu0 %v1777
    %2105 = vmatpush1.bf16.msra.mxu0 %v1776
    %2106 = vmatprep.subr.bf16.mxu0 %v1781
    %2107 = vmatpush1.bf16.msra.mxu0 %v1780
    %2108 = vmatprep.subr.bf16.mxu0 %v1785
    %2109 = vmatpush1.bf16.msra.mxu0 %v1784
    %2110 = vmatprep.subr.bf16.mxu0 %v1789
    %2111 = vmatpush1.bf16.msra.mxu0 %v1788
    %2112 = vmatprep.subr.bf16.mxu0 %v1793
    %2113 = vmatpush1.bf16.msra.mxu0 %v1792
    %2114 = vmatprep.subr.bf16.mxu0 %v1797
    %2115 = vmatpush1.bf16.msra.mxu0 %v1796
    %2116 = vmatprep.subr.bf16.mxu0 %v1801
    %2117 = vmatpush1.bf16.msra.mxu0 %v1800
    %2118 = vmatprep.subr.bf16.mxu0 %v1805
    %2119 = vmatpush1.bf16.msra.mxu0 %v1804
    %2120 = vmatprep.subr.bf16.mxu0 %v1809
    %2121 = vmatpush1.bf16.msra.mxu0 %v1808
    %2122 = vmatprep.subr.bf16.mxu0 %v1813
    %2123 = vmatpush1.bf16.msra.mxu0 %v1812
    %2124 = vmatprep.subr.bf16.mxu0 %v1817
    %2125 = vmatpush1.bf16.msra.mxu0 %v1816
    %2126 = vmatprep.subr.bf16.mxu0 %v1821
    %2127 = vmatpush1.bf16.msra.mxu0 %v1820
    %2128 = vmatprep.mubr.bf16.mxu0 %v1221
    %2129 = vmatmul.mubr.bf16.gmra.mrb[0].mxu0 %v1220
    %v2130 = vpop.f32.mrb[0].mxu0
    %v2131 = vadd.f32 %v1365, %v2130
    %v2132 = vpop.f32.mrb[0].mxu0
    %v2133 = vadd.f32 %v1369, %v2132
    %v2134 = vpop.f32.mrb[0].mxu0
    %v2135 = vpop.f32.mrb[0].mxu0
    %2136 = vdwg.mxu0
    %2137 = vmatprep.subr.bf16.mxu0 %v1825
    %2138 = vmatpush1.bf16.msra.mxu0 %v1824
    %2139 = vmatprep.subr.bf16.mxu0 %v1829
    %2140 = vmatpush1.bf16.msra.mxu0 %v1828
    %2141 = vmatprep.subr.bf16.mxu0 %v1833
    %2142 = vmatpush1.bf16.msra.mxu0 %v1832
    %2143 = vmatprep.subr.bf16.mxu0 %v1837
    %2144 = vmatpush1.bf16.msra.mxu0 %v1836
    %2145 = vmatprep.subr.bf16.mxu0 %v1841
    %2146 = vmatpush1.bf16.msra.mxu0 %v1840
    %2147 = vmatprep.subr.bf16.mxu0 %v1845
    %2148 = vmatpush1.bf16.msra.mxu0 %v1844
    %2149 = vmatprep.subr.bf16.mxu0 %v1849
    %2150 = vmatpush1.bf16.msra.mxu0 %v1848
    %2151 = vmatprep.subr.bf16.mxu0 %v1853
    %2152 = vmatpush1.bf16.msra.mxu0 %v1852
    %2153 = vmatprep.subr.bf16.mxu0 %v1857
    %2154 = vmatpush1.bf16.msra.mxu0 %v1856
    %2155 = vmatprep.subr.bf16.mxu0 %v1861
    %2156 = vmatpush1.bf16.msra.mxu0 %v1860
    %2157 = vmatprep.subr.bf16.mxu0 %v1865
    %2158 = vmatpush1.bf16.msra.mxu0 %v1864
    %2159 = vmatprep.subr.bf16.mxu0 %v1869
    %2160 = vmatpush1.bf16.msra.mxu0 %v1868
    %2161 = vmatprep.subr.bf16.mxu0 %v1873
    %2162 = vmatpush1.bf16.msra.mxu0 %v1872
    %2163 = vmatprep.subr.bf16.mxu0 %v1877
    %2164 = vmatpush1.bf16.msra.mxu0 %v1876
    %2165 = vmatprep.subr.bf16.mxu0 %v1881
    %2166 = vmatpush1.bf16.msra.mxu0 %v1880
    %2167 = vmatprep.subr.bf16.mxu0 %v1885
    %2168 = vmatpush1.bf16.msra.mxu0 %v1884
    %2169 = vmatprep.mubr.bf16.mxu0 %v1223
    %2170 = vmatmul.mubr.bf16.gmra.mrb[0].mxu0 %v1222
    %v2171 = vpop.f32.mrb[0].mxu0
    %v2172 = vadd.f32 %v2131, %v2171
    %v2173 = vpop.f32.mrb[0].mxu0
    %v2174 = vadd.f32 %v2133, %v2173
    %v2175 = vpop.f32.mrb[0].mxu0
    %v2176 = vpop.f32.mrb[0].mxu0
    %2177 = vdwg.mxu0
    %v2178 = vmax.f32 %v2090, 0.0
    %v2179 = vmax.f32 %v2092, 0.0
    %v2180 = vmax.f32 %v2172, 0.0
    %v2181 = vmax.f32 %v2174, 0.0
    %v2182 = vpack.c.bf16 %v2178, %v2178
    %v2183 = vpack.c.bf16 %v2179, %v2179
    %v2184 = vpack.c.bf16 %v2180, %v2180
    %v2185 = vpack.c.bf16 %v2181, %v2181
    %v2186 = vld [vmem:[%s7] sm:$0xff]
    %v2187 = vld [vmem:[%s7 + $0x8] sm:$0xff]
    %v2188 = vld [vmem:[%s7 + $0x10] sm:$0xff]
    %v2189 = vld [vmem:[%s7 + $0x18] sm:$0xf]
    %v2190 = vld [vmem:[%s7 + $0x1c] sm:$0xff]
    %v2191 = vld [vmem:[%s7 + $0x24] sm:$0xff]
    %v2192 = vld [vmem:[%s7 + $0x2c] sm:$0xff]
    %v2193 = vld [vmem:[%s7 + $0x34] sm:$0xf]
    %v2194 = vld [vmem:[%s7 + $0x38] sm:$0xff]
    %v2195 = vld [vmem:[%s7 + $0x40] sm:$0xff]
    %v2196 = vld [vmem:[%s7 + $0x48] sm:$0xff]
    %v2197 = vld [vmem:[%s7 + $0x50] sm:$0xf]
    %v2198 = vld [vmem:[%s7 + $0x54] sm:$0xff]
    %v2199 = vld [vmem:[%s7 + $0x5c] sm:$0xff]
    %v2200 = vld [vmem:[%s7 + $0x64] sm:$0xff]
    %v2201 = vld [vmem:[%s7 + $0x6c] sm:$0xf]
    %v2202 = vld [vmem:[%s7 + $0x70] sm:$0xff]
    %v2203 = vld [vmem:[%s7 + $0x78] sm:$0xff]
    %v2204 = vld [vmem:[%s7 + $0x80] sm:$0xff]
    %v2205 = vld [vmem:[%s7 + $0x88] sm:$0xf]
    %v2206 = vld [vmem:[%s7 + $0x8c] sm:$0xff]
    %v2207 = vld [vmem:[%s7 + $0x94] sm:$0xff]
    %v2208 = vld [vmem:[%s7 + $0x9c] sm:$0xff]
    %v2209 = vld [vmem:[%s7 + $0xa4] sm:$0xf]
    %v2210 = vld [vmem:[%s7 + $0xa8] sm:$0xff]
    %v2211 = vld [vmem:[%s7 + $0xb0] sm:$0xff]
    %v2212 = vld [vmem:[%s7 + $0xb8] sm:$0xff]
    %v2213 = vld [vmem:[%s7 + $0xc0] sm:$0xf]
    %v2214 = vld [vmem:[%s7 + $0xc4] sm:$0xff]
    %v2215 = vld [vmem:[%s7 + $0xcc] sm:$0xff]
    %v2216 = vld [vmem:[%s7 + $0xd4] sm:$0xff]
    %v2217 = vld [vmem:[%s7 + $0xdc] sm:$0xf]
    %v2218 = vld [vmem:[%s7 + $0xe0] sm:$0xff]
    %v2219 = vld [vmem:[%s7 + $0xe8] sm:$0xff]
    %v2220 = vld [vmem:[%s7 + $0xf0] sm:$0xff]
    %v2221 = vld [vmem:[%s7 + $0xf8] sm:$0xf]
    %v2222 = vld [vmem:[%s7 + $0xfc] sm:$0xff]
    %v2223 = vld [vmem:[%s7 + $0x104] sm:$0xff]
    %v2224 = vld [vmem:[%s7 + $0x10c] sm:$0xff]
    %v2225 = vld [vmem:[%s7 + $0x114] sm:$0xf]
    %v2226 = vld [vmem:[%s7 + $0x118] sm:$0xff]
    %v2227 = vld [vmem:[%s7 + $0x120] sm:$0xff]
    %v2228 = vld [vmem:[%s7 + $0x128] sm:$0xff]
    %v2229 = vld [vmem:[%s7 + $0x130] sm:$0xf]
    %v2230 = vld [vmem:[%s7 + $0x134] sm:$0xff]
    %v2231 = vld [vmem:[%s7 + $0x13c] sm:$0xff]
    %v2232 = vld [vmem:[%s7 + $0x144] sm:$0xff]
    %v2233 = vld [vmem:[%s7 + $0x14c] sm:$0xf]
    %v2234 = vld [vmem:[%s7 + $0x150] sm:$0xff]
    %v2235 = vld [vmem:[%s7 + $0x158] sm:$0xff]
    %v2236 = vld [vmem:[%s7 + $0x160] sm:$0xff]
    %v2237 = vld [vmem:[%s7 + $0x168] sm:$0xf]
    %v2238 = vld [vmem:[%s7 + $0x16c] sm:$0xff]
    %v2239 = vld [vmem:[%s7 + $0x174] sm:$0xff]
    %v2240 = vld [vmem:[%s7 + $0x17c] sm:$0xff]
    %v2241 = vld [vmem:[%s7 + $0x184] sm:$0xf]
    %v2242 = vld [vmem:[%s7 + $0x188] sm:$0xff]
    %v2243 = vld [vmem:[%s7 + $0x190] sm:$0xff]
    %v2244 = vld [vmem:[%s7 + $0x198] sm:$0xff]
    %v2245 = vld [vmem:[%s7 + $0x1a0] sm:$0xf]
    %v2246 = vld [vmem:[%s7 + $0x1a4] sm:$0xff]
    %v2247 = vld [vmem:[%s7 + $0x1ac] sm:$0xff]
    %v2248 = vld [vmem:[%s7 + $0x1b4] sm:$0xff]
    %v2249 = vld [vmem:[%s7 + $0x1bc] sm:$0xf]
    %v2250 = vld [vmem:[%s7 + $0x1c0] sm:$0xff]
    %v2251 = vld [vmem:[%s7 + $0x1c8] sm:$0xff]
    %v2252 = vld [vmem:[%s7 + $0x1d0] sm:$0xff]
    %v2253 = vld [vmem:[%s7 + $0x1d8] sm:$0xf]
    %v2254 = vld [vmem:[%s7 + $0x1dc] sm:$0xff]
    %v2255 = vld [vmem:[%s7 + $0x1e4] sm:$0xff]
    %v2256 = vld [vmem:[%s7 + $0x1ec] sm:$0xff]
    %v2257 = vld [vmem:[%s7 + $0x1f4] sm:$0xf]
    %v2258 = vld [vmem:[%s7 + $0x1f8] sm:$0xff]
    %v2259 = vld [vmem:[%s7 + $0x200] sm:$0xff]
    %v2260 = vld [vmem:[%s7 + $0x208] sm:$0xff]
    %v2261 = vld [vmem:[%s7 + $0x210] sm:$0xf]
    %v2262 = vld [vmem:[%s7 + $0x214] sm:$0xff]
    %v2263 = vld [vmem:[%s7 + $0x21c] sm:$0xff]
    %v2264 = vld [vmem:[%s7 + $0x224] sm:$0xff]
    %v2265 = vld [vmem:[%s7 + $0x22c] sm:$0xf]
    %v2266 = vld [vmem:[%s7 + $0x230] sm:$0xff]
    %v2267 = vld [vmem:[%s7 + $0x238] sm:$0xff]
    %v2268 = vld [vmem:[%s7 + $0x240] sm:$0xff]
    %v2269 = vld [vmem:[%s7 + $0x248] sm:$0xf]
    %v2270 = vld [vmem:[%s7 + $0x24c] sm:$0xff]
    %v2271 = vld [vmem:[%s7 + $0x254] sm:$0xff]
    %v2272 = vld [vmem:[%s7 + $0x25c] sm:$0xff]
    %v2273 = vld [vmem:[%s7 + $0x264] sm:$0xf]
    %v2274 = vld [vmem:[%s7 + $0x268] sm:$0xff]
    %v2275 = vld [vmem:[%s7 + $0x270] sm:$0xff]
    %v2276 = vld [vmem:[%s7 + $0x278] sm:$0xff]
    %v2277 = vld [vmem:[%s7 + $0x280] sm:$0xf]
    %v2278 = vld [vmem:[%s7 + $0x284] sm:$0xff]
    %v2279 = vld [vmem:[%s7 + $0x28c] sm:$0xff]
    %v2280 = vld [vmem:[%s7 + $0x294] sm:$0xff]
    %v2281 = vld [vmem:[%s7 + $0x29c] sm:$0xf]
    %v2282 = vld [vmem:[%s7 + $0x2a0] sm:$0xff]
    %v2283 = vld [vmem:[%s7 + $0x2a8] sm:$0xff]
    %v2284 = vld [vmem:[%s7 + $0x2b0] sm:$0xff]
    %v2285 = vld [vmem:[%s7 + $0x2b8] sm:$0xf]
    %v2286 = vld [vmem:[%s7 + $0x2bc] sm:$0xff]
    %v2287 = vld [vmem:[%s7 + $0x2c4] sm:$0xff]
    %v2288 = vld [vmem:[%s7 + $0x2cc] sm:$0xff]
    %v2289 = vld [vmem:[%s7 + $0x2d4] sm:$0xf]
    %v2290 = vld [vmem:[%s7 + $0x2d8] sm:$0xff]
    %v2291 = vld [vmem:[%s7 + $0x2e0] sm:$0xff]
    %v2292 = vld [vmem:[%s7 + $0x2e8] sm:$0xff]
    %v2293 = vld [vmem:[%s7 + $0x2f0] sm:$0xf]
    %v2294 = vld [vmem:[%s7 + $0x2f4] sm:$0xff]
    %v2295 = vld [vmem:[%s7 + $0x2fc] sm:$0xff]
    %v2296 = vld [vmem:[%s7 + $0x304] sm:$0xff]
    %v2297 = vld [vmem:[%s7 + $0x30c] sm:$0xf]
    %v2298 = vld [vmem:[%s7 + $0x310] sm:$0xff]
    %v2299 = vld [vmem:[%s7 + $0x318] sm:$0xff]
    %v2300 = vld [vmem:[%s7 + $0x320] sm:$0xff]
    %v2301 = vld [vmem:[%s7 + $0x328] sm:$0xf]
    %v2302 = vld [vmem:[%s7 + $0x32c] sm:$0xff]
    %v2303 = vld [vmem:[%s7 + $0x334] sm:$0xff]
    %v2304 = vld [vmem:[%s7 + $0x33c] sm:$0xff]
    %v2305 = vld [vmem:[%s7 + $0x344] sm:$0xf]
    %v2306 = vld [vmem:[%s7 + $0x348] sm:$0xff]
    %v2307 = vld [vmem:[%s7 + $0x350] sm:$0xff]
    %v2308 = vld [vmem:[%s7 + $0x358] sm:$0xff]
    %v2309 = vld [vmem:[%s7 + $0x360] sm:$0xf]
    %v2310 = vld [vmem:[%s7 + $0x364] sm:$0xff]
    %v2311 = vld [vmem:[%s7 + $0x36c] sm:$0xff]
    %v2312 = vld [vmem:[%s7 + $0x374] sm:$0xff]
    %v2313 = vld [vmem:[%s7 + $0x37c] sm:$0xf]
    %v2314 = vld [vmem:[%s7 + $0x380] sm:$0xff]
    %v2315 = vld [vmem:[%s7 + $0x388] sm:$0xff]
    %v2316 = vld [vmem:[%s7 + $0x390] sm:$0xff]
    %v2317 = vld [vmem:[%s7 + $0x398] sm:$0xf]
    %v2318 = vld [vmem:[%s7 + $0x39c] sm:$0xff]
    %v2319 = vld [vmem:[%s7 + $0x3a4] sm:$0xff]
    %v2320 = vld [vmem:[%s7 + $0x3ac] sm:$0xff]
    %v2321 = vld [vmem:[%s7 + $0x3b4] sm:$0xf]
    %v2322 = vld [vmem:[%s7 + $0x3b8] sm:$0xff]
    %v2323 = vld [vmem:[%s7 + $0x3c0] sm:$0xff]
    %v2324 = vld [vmem:[%s7 + $0x3c8] sm:$0xff]
    %v2325 = vld [vmem:[%s7 + $0x3d0] sm:$0xf]
    %v2326 = vld [vmem:[%s7 + $0x3d4] sm:$0xff]
    %v2327 = vld [vmem:[%s7 + $0x3dc] sm:$0xff]
    %v2328 = vld [vmem:[%s7 + $0x3e4] sm:$0xff]
    %v2329 = vld [vmem:[%s7 + $0x3ec] sm:$0xf]
    %v2330 = vld [vmem:[%s7 + $0x3f0] sm:$0xff]
    %v2331 = vld [vmem:[%s7 + $0x3f8] sm:$0xff]
    %v2332 = vld [vmem:[%s7 + $0x400] sm:$0xff]
    %v2333 = vld [vmem:[%s7 + $0x408] sm:$0xf]
    %v2334 = vld [vmem:[%s7 + $0x40c] sm:$0xff]
    %v2335 = vld [vmem:[%s7 + $0x414] sm:$0xff]
    %v2336 = vld [vmem:[%s7 + $0x41c] sm:$0xff]
    %v2337 = vld [vmem:[%s7 + $0x424] sm:$0xf]
    %v2338 = vld [vmem:[%s7 + $0x428] sm:$0xff]
    %v2339 = vld [vmem:[%s7 + $0x430] sm:$0xff]
    %v2340 = vld [vmem:[%s7 + $0x438] sm:$0xff]
    %v2341 = vld [vmem:[%s7 + $0x440] sm:$0xf]
    %v2342 = vld [vmem:[%s7 + $0x444] sm:$0xff]
    %v2343 = vld [vmem:[%s7 + $0x44c] sm:$0xff]
    %v2344 = vld [vmem:[%s7 + $0x454] sm:$0xff]
    %v2345 = vld [vmem:[%s7 + $0x45c] sm:$0xf]
    %v2346 = vld [vmem:[%s7 + $0x460] sm:$0xff]
    %v2347 = vld [vmem:[%s7 + $0x468] sm:$0xff]
    %v2348 = vld [vmem:[%s7 + $0x470] sm:$0xff]
    %v2349 = vld [vmem:[%s7 + $0x478] sm:$0xf]
    %v2350 = vld [vmem:[%s7 + $0x47c] sm:$0xff]
    %v2351 = vld [vmem:[%s7 + $0x484] sm:$0xff]
    %v2352 = vld [vmem:[%s7 + $0x48c] sm:$0xff]
    %v2353 = vld [vmem:[%s7 + $0x494] sm:$0xf]
    %v2354 = vld [vmem:[%s7 + $0x498] sm:$0xff]
    %v2355 = vld [vmem:[%s7 + $0x4a0] sm:$0xff]
    %v2356 = vld [vmem:[%s7 + $0x4a8] sm:$0xff]
    %v2357 = vld [vmem:[%s7 + $0x4b0] sm:$0xf]
    %v2358 = vld [vmem:[%s7 + $0x4b4] sm:$0xff]
    %v2359 = vld [vmem:[%s7 + $0x4bc] sm:$0xff]
    %v2360 = vld [vmem:[%s7 + $0x4c4] sm:$0xff]
    %v2361 = vld [vmem:[%s7 + $0x4cc] sm:$0xf]
    %v2362 = vld [vmem:[%s7 + $0x4d0] sm:$0xff]
    %v2363 = vld [vmem:[%s7 + $0x4d8] sm:$0xff]
    %v2364 = vld [vmem:[%s7 + $0x4e0] sm:$0xff]
    %v2365 = vld [vmem:[%s7 + $0x4e8] sm:$0xf]
    %v2366 = vld [vmem:[%s7 + $0x4ec] sm:$0xff]
    %v2367 = vld [vmem:[%s7 + $0x4f4] sm:$0xff]
    %v2368 = vld [vmem:[%s7 + $0x4fc] sm:$0xff]
    %v2369 = vld [vmem:[%s7 + $0x504] sm:$0xf]
    %v2370 = vld [vmem:[%s7 + $0x508] sm:$0xff]
    %v2371 = vld [vmem:[%s7 + $0x510] sm:$0xff]
    %v2372 = vld [vmem:[%s7 + $0x518] sm:$0xff]
    %v2373 = vld [vmem:[%s7 + $0x520] sm:$0xf]
    %v2374 = vld [vmem:[%s7 + $0x524] sm:$0xff]
    %v2375 = vld [vmem:[%s7 + $0x52c] sm:$0xff]
    %v2376 = vld [vmem:[%s7 + $0x534] sm:$0xff]
    %v2377 = vld [vmem:[%s7 + $0x53c] sm:$0xf]
    %v2378 = vld [vmem:[%s7 + $0x540] sm:$0xff]
    %v2379 = vld [vmem:[%s7 + $0x548] sm:$0xff]
    %v2380 = vld [vmem:[%s7 + $0x550] sm:$0xff]
    %v2381 = vld [vmem:[%s7 + $0x558] sm:$0xf]
    %v2382 = vld [vmem:[%s7 + $0x55c] sm:$0xff]
    %v2383 = vld [vmem:[%s7 + $0x564] sm:$0xff]
    %v2384 = vld [vmem:[%s7 + $0x56c] sm:$0xff]
    %v2385 = vld [vmem:[%s7 + $0x574] sm:$0xf]
    %v2386 = vld [vmem:[%s7 + $0x578] sm:$0xff]
    %v2387 = vld [vmem:[%s7 + $0x580] sm:$0xff]
    %v2388 = vld [vmem:[%s7 + $0x588] sm:$0xff]
    %v2389 = vld [vmem:[%s7 + $0x590] sm:$0xf]
    %v2390 = vld [vmem:[%s7 + $0x594] sm:$0xff]
    %v2391 = vld [vmem:[%s7 + $0x59c] sm:$0xff]
    %v2392 = vld [vmem:[%s7 + $0x5a4] sm:$0xff]
    %v2393 = vld [vmem:[%s7 + $0x5ac] sm:$0xf]
    %v2394 = vld [vmem:[%s7 + $0x5b0] sm:$0xff]
    %v2395 = vld [vmem:[%s7 + $0x5b8] sm:$0xff]
    %v2396 = vld [vmem:[%s7 + $0x5c0] sm:$0xff]
    %v2397 = vld [vmem:[%s7 + $0x5c8] sm:$0xf]
    %v2398 = vld [vmem:[%s7 + $0x5cc] sm:$0xff]
    %v2399 = vld [vmem:[%s7 + $0x5d4] sm:$0xff]
    %v2400 = vld [vmem:[%s7 + $0x5dc] sm:$0xff]
    %v2401 = vld [vmem:[%s7 + $0x5e4] sm:$0xf]
    %v2402 = vld [vmem:[%s7 + $0x5e8] sm:$0xff]
    %v2403 = vld [vmem:[%s7 + $0x5f0] sm:$0xff]
    %v2404 = vld [vmem:[%s7 + $0x5f8] sm:$0xff]
    %v2405 = vld [vmem:[%s7 + $0x600] sm:$0xf]
    %v2406 = vld [vmem:[%s7 + $0x604] sm:$0xff]
    %v2407 = vld [vmem:[%s7 + $0x60c] sm:$0xff]
    %v2408 = vld [vmem:[%s7 + $0x614] sm:$0xff]
    %v2409 = vld [vmem:[%s7 + $0x61c] sm:$0xf]
    %v2410 = vld [vmem:[%s7 + $0x620] sm:$0xff]
    %v2411 = vld [vmem:[%s7 + $0x628] sm:$0xff]
    %v2412 = vld [vmem:[%s7 + $0x630] sm:$0xff]
    %v2413 = vld [vmem:[%s7 + $0x638] sm:$0xf]
    %v2414 = vld [vmem:[%s7 + $0x63c] sm:$0xff]
    %v2415 = vld [vmem:[%s7 + $0x644] sm:$0xff]
    %v2416 = vld [vmem:[%s7 + $0x64c] sm:$0xff]
    %v2417 = vld [vmem:[%s7 + $0x654] sm:$0xf]
    %v2418 = vld [vmem:[%s7 + $0x658] sm:$0xff]
    %v2419 = vld [vmem:[%s7 + $0x660] sm:$0xff]
    %v2420 = vld [vmem:[%s7 + $0x668] sm:$0xff]
    %v2421 = vld [vmem:[%s7 + $0x670] sm:$0xf]
    %v2422 = vld [vmem:[%s7 + $0x674] sm:$0xff]
    %v2423 = vld [vmem:[%s7 + $0x67c] sm:$0xff]
    %v2424 = vld [vmem:[%s7 + $0x684] sm:$0xff]
    %v2425 = vld [vmem:[%s7 + $0x68c] sm:$0xf]
    %v2426 = vld [vmem:[%s7 + $0x690] sm:$0xff]
    %v2427 = vld [vmem:[%s7 + $0x698] sm:$0xff]
    %v2428 = vld [vmem:[%s7 + $0x6a0] sm:$0xff]
    %v2429 = vld [vmem:[%s7 + $0x6a8] sm:$0xf]
    %v2430 = vld [vmem:[%s7 + $0x6ac] sm:$0xff]
    %v2431 = vld [vmem:[%s7 + $0x6b4] sm:$0xff]
    %v2432 = vld [vmem:[%s7 + $0x6bc] sm:$0xff]
    %v2433 = vld [vmem:[%s7 + $0x6c4] sm:$0xf]
    %v2434 = vld [vmem:[%s7 + $0x6c8] sm:$0xff]
    %v2435 = vld [vmem:[%s7 + $0x6d0] sm:$0xff]
    %v2436 = vld [vmem:[%s7 + $0x6d8] sm:$0xff]
    %v2437 = vld [vmem:[%s7 + $0x6e0] sm:$0xf]
    %v2438 = vld [vmem:[%s7 + $0x6e4] sm:$0xff]
    %v2439 = vld [vmem:[%s7 + $0x6ec] sm:$0xff]
    %v2440 = vld [vmem:[%s7 + $0x6f4] sm:$0xff]
    %v2441 = vld [vmem:[%s7 + $0x6fc] sm:$0xf]
    %v2442 = vld [vmem:[%s8] sm:$0xff]
    %v2444 = vlaneseq
    %v2445 = vshrl.u32 %v2444, 7
    %v2446 = vsub.s32 0, %v2445
    %v2447 = vrot.slane %v2442, %v2446
    %v2448 = vlaneseq
    %v2449 = vshrl.u32 %v2448, 7
    %v2450 = vsub.s32 1, %v2449
    %v2451 = vrot.slane %v2442, %v2450
    %v2452 = vlaneseq
    %v2453 = vshrl.u32 %v2452, 7
    %v2454 = vsub.s32 2, %v2453
    %v2455 = vrot.slane %v2442, %v2454
    %v2456 = vlaneseq
    %v2457 = vshrl.u32 %v2456, 7
    %v2458 = vsub.s32 3, %v2457
    %v2459 = vrot.slane %v2442, %v2458
    %v2460 = vlaneseq
    %v2461 = vshrl.u32 %v2460, 7
    %v2462 = vsub.s32 4, %v2461
    %v2463 = vrot.slane %v2442, %v2462
    %v2464 = vlaneseq
    %v2465 = vshrl.u32 %v2464, 7
    %v2466 = vsub.s32 5, %v2465
    %v2467 = vrot.slane %v2442, %v2466
    %v2468 = vlaneseq
    %v2469 = vshrl.u32 %v2468, 7
    %v2470 = vsub.s32 6, %v2469
    %v2471 = vrot.slane %v2442, %v2470
    %v2735 = vunpack.c.l.b16 %v2186
    %v2736 = vunpack.c.h.b16 %v2186
    %v2737 = vunpack.c.l.b16 %v2187
    %v2738 = vunpack.c.h.b16 %v2187
    %v2739 = vunpack.c.l.b16 %v2188
    %v2740 = vunpack.c.h.b16 %v2188
    %v2741 = vunpack.c.l.b16 %v2189
    %v2742 = vunpack.c.l.b16 %v2190
    %v2743 = vunpack.c.h.b16 %v2190
    %v2744 = vunpack.c.l.b16 %v2191
    %v2745 = vunpack.c.h.b16 %v2191
    %v2746 = vunpack.c.l.b16 %v2192
    %v2747 = vunpack.c.h.b16 %v2192
    %v2748 = vunpack.c.l.b16 %v2193
    %v2749 = vunpack.c.l.b16 %v2194
    %v2750 = vunpack.c.h.b16 %v2194
    %v2751 = vunpack.c.l.b16 %v2195
    %v2752 = vunpack.c.h.b16 %v2195
    %v2753 = vunpack.c.l.b16 %v2196
    %v2754 = vunpack.c.h.b16 %v2196
    %v2755 = vunpack.c.l.b16 %v2197
    %v2756 = vunpack.c.l.b16 %v2198
    %v2757 = vunpack.c.h.b16 %v2198
    %v2758 = vunpack.c.l.b16 %v2199
    %v2759 = vunpack.c.h.b16 %v2199
    %v2760 = vunpack.c.l.b16 %v2200
    %v2761 = vunpack.c.h.b16 %v2200
    %v2762 = vunpack.c.l.b16 %v2201
    %v2763 = vunpack.c.l.b16 %v2202
    %v2764 = vunpack.c.h.b16 %v2202
    %v2765 = vunpack.c.l.b16 %v2203
    %v2766 = vunpack.c.h.b16 %v2203
    %v2767 = vunpack.c.l.b16 %v2204
    %v2768 = vunpack.c.h.b16 %v2204
    %v2769 = vunpack.c.l.b16 %v2205
    %v2770 = vunpack.c.l.b16 %v2206
    %v2771 = vunpack.c.h.b16 %v2206
    %v2772 = vunpack.c.l.b16 %v2207
    %v2773 = vunpack.c.h.b16 %v2207
    %v2774 = vunpack.c.l.b16 %v2208
    %v2775 = vunpack.c.h.b16 %v2208
    %v2776 = vunpack.c.l.b16 %v2209
    %v2777 = vunpack.c.l.b16 %v2210
    %v2778 = vunpack.c.h.b16 %v2210
    %v2779 = vunpack.c.l.b16 %v2211
    %v2780 = vunpack.c.h.b16 %v2211
    %v2781 = vunpack.c.l.b16 %v2212
    %v2782 = vunpack.c.h.b16 %v2212
    %v2783 = vunpack.c.l.b16 %v2213
    %v2784 = vunpack.c.l.b16 %v2214
    %v2785 = vunpack.c.h.b16 %v2214
    %v2786 = vunpack.c.l.b16 %v2215
    %v2787 = vunpack.c.h.b16 %v2215
    %v2788 = vunpack.c.l.b16 %v2216
    %v2789 = vunpack.c.h.b16 %v2216
    %v2790 = vunpack.c.l.b16 %v2217
    %v2791 = vunpack.c.l.b16 %v2218
    %v2792 = vunpack.c.h.b16 %v2218
    %v2793 = vunpack.c.l.b16 %v2219
    %v2794 = vunpack.c.h.b16 %v2219
    %v2795 = vunpack.c.l.b16 %v2220
    %v2796 = vunpack.c.h.b16 %v2220
    %v2797 = vunpack.c.l.b16 %v2221
    %v2798 = vunpack.c.l.b16 %v2222
    %v2799 = vunpack.c.h.b16 %v2222
    %v2800 = vunpack.c.l.b16 %v2223
    %v2801 = vunpack.c.h.b16 %v2223
    %v2802 = vunpack.c.l.b16 %v2224
    %v2803 = vunpack.c.h.b16 %v2224
    %v2804 = vunpack.c.l.b16 %v2225
    %v2805 = vunpack.c.l.b16 %v2226
    %v2806 = vunpack.c.h.b16 %v2226
    %v2807 = vunpack.c.l.b16 %v2227
    %v2808 = vunpack.c.h.b16 %v2227
    %v2809 = vunpack.c.l.b16 %v2228
    %v2810 = vunpack.c.h.b16 %v2228
    %v2811 = vunpack.c.l.b16 %v2229
    %v2812 = vunpack.c.l.b16 %v2230
    %v2813 = vunpack.c.h.b16 %v2230
    %v2814 = vunpack.c.l.b16 %v2231
    %v2815 = vunpack.c.h.b16 %v2231
    %v2816 = vunpack.c.l.b16 %v2232
    %v2817 = vunpack.c.h.b16 %v2232
    %v2818 = vunpack.c.l.b16 %v2233
    %v2819 = vunpack.c.l.b16 %v2234
    %v2820 = vunpack.c.h.b16 %v2234
    %v2821 = vunpack.c.l.b16 %v2235
    %v2822 = vunpack.c.h.b16 %v2235
    %v2823 = vunpack.c.l.b16 %v2236
    %v2824 = vunpack.c.h.b16 %v2236
    %v2825 = vunpack.c.l.b16 %v2237
    %v2826 = vunpack.c.l.b16 %v2238
    %v2827 = vunpack.c.h.b16 %v2238
    %v2828 = vunpack.c.l.b16 %v2239
    %v2829 = vunpack.c.h.b16 %v2239
    %v2830 = vunpack.c.l.b16 %v2240
    %v2831 = vunpack.c.h.b16 %v2240
    %v2832 = vunpack.c.l.b16 %v2241
    %v2833 = vunpack.c.l.b16 %v2242
    %v2834 = vunpack.c.h.b16 %v2242
    %v2835 = vunpack.c.l.b16 %v2243
    %v2836 = vunpack.c.h.b16 %v2243
    %v2837 = vunpack.c.l.b16 %v2244
    %v2838 = vunpack.c.h.b16 %v2244
    %v2839 = vunpack.c.l.b16 %v2245
    %v2840 = vunpack.c.l.b16 %v2246
    %v2841 = vunpack.c.h.b16 %v2246
    %v2842 = vunpack.c.l.b16 %v2247
    %v2843 = vunpack.c.h.b16 %v2247
    %v2844 = vunpack.c.l.b16 %v2248
    %v2845 = vunpack.c.h.b16 %v2248
    %v2846 = vunpack.c.l.b16 %v2249
    %v2847 = vunpack.c.l.b16 %v2250
    %v2848 = vunpack.c.h.b16 %v2250
    %v2849 = vunpack.c.l.b16 %v2251
    %v2850 = vunpack.c.h.b16 %v2251
    %v2851 = vunpack.c.l.b16 %v2252
    %v2852 = vunpack.c.h.b16 %v2252
    %v2853 = vunpack.c.l.b16 %v2253
    %v2854 = vunpack.c.l.b16 %v2254
    %v2855 = vunpack.c.h.b16 %v2254
    %v2856 = vunpack.c.l.b16 %v2255
    %v2857 = vunpack.c.h.b16 %v2255
    %v2858 = vunpack.c.l.b16 %v2256
    %v2859 = vunpack.c.h.b16 %v2256
    %v2860 = vunpack.c.l.b16 %v2257
    %v2861 = vunpack.c.l.b16 %v2258
    %v2862 = vunpack.c.h.b16 %v2258
    %v2863 = vunpack.c.l.b16 %v2259
    %v2864 = vunpack.c.h.b16 %v2259
    %v2865 = vunpack.c.l.b16 %v2260
    %v2866 = vunpack.c.h.b16 %v2260
    %v2867 = vunpack.c.l.b16 %v2261
    %v2868 = vunpack.c.l.b16 %v2262
    %v2869 = vunpack.c.h.b16 %v2262
    %v2870 = vunpack.c.l.b16 %v2263
    %v2871 = vunpack.c.h.b16 %v2263
    %v2872 = vunpack.c.l.b16 %v2264
    %v2873 = vunpack.c.h.b16 %v2264
    %v2874 = vunpack.c.l.b16 %v2265
    %v2875 = vunpack.c.l.b16 %v2266
    %v2876 = vunpack.c.h.b16 %v2266
    %v2877 = vunpack.c.l.b16 %v2267
    %v2878 = vunpack.c.h.b16 %v2267
    %v2879 = vunpack.c.l.b16 %v2268
    %v2880 = vunpack.c.h.b16 %v2268
    %v2881 = vunpack.c.l.b16 %v2269
    %v2882 = vunpack.c.l.b16 %v2270
    %v2883 = vunpack.c.h.b16 %v2270
    %v2884 = vunpack.c.l.b16 %v2271
    %v2885 = vunpack.c.h.b16 %v2271
    %v2886 = vunpack.c.l.b16 %v2272
    %v2887 = vunpack.c.h.b16 %v2272
    %v2888 = vunpack.c.l.b16 %v2273
    %v2889 = vunpack.c.l.b16 %v2274
    %v2890 = vunpack.c.h.b16 %v2274
    %v2891 = vunpack.c.l.b16 %v2275
    %v2892 = vunpack.c.h.b16 %v2275
    %v2893 = vunpack.c.l.b16 %v2276
    %v2894 = vunpack.c.h.b16 %v2276
    %v2895 = vunpack.c.l.b16 %v2277
    %v2896 = vunpack.c.l.b16 %v2278
    %v2897 = vunpack.c.h.b16 %v2278
    %v2898 = vunpack.c.l.b16 %v2279
    %v2899 = vunpack.c.h.b16 %v2279
    %v2900 = vunpack.c.l.b16 %v2280
    %v2901 = vunpack.c.h.b16 %v2280
    %v2902 = vunpack.c.l.b16 %v2281
    %v2903 = vunpack.c.l.b16 %v2282
    %v2904 = vunpack.c.h.b16 %v2282
    %v2905 = vunpack.c.l.b16 %v2283
    %v2906 = vunpack.c.h.b16 %v2283
    %v2907 = vunpack.c.l.b16 %v2284
    %v2908 = vunpack.c.h.b16 %v2284
    %v2909 = vunpack.c.l.b16 %v2285
    %v2910 = vunpack.c.l.b16 %v2286
    %v2911 = vunpack.c.h.b16 %v2286
    %v2912 = vunpack.c.l.b16 %v2287
    %v2913 = vunpack.c.h.b16 %v2287
    %v2914 = vunpack.c.l.b16 %v2288
    %v2915 = vunpack.c.h.b16 %v2288
    %v2916 = vunpack.c.l.b16 %v2289
    %v2917 = vunpack.c.l.b16 %v2290
    %v2918 = vunpack.c.h.b16 %v2290
    %v2919 = vunpack.c.l.b16 %v2291
    %v2920 = vunpack.c.h.b16 %v2291
    %v2921 = vunpack.c.l.b16 %v2292
    %v2922 = vunpack.c.h.b16 %v2292
    %v2923 = vunpack.c.l.b16 %v2293
    %v2924 = vunpack.c.l.b16 %v2294
    %v2925 = vunpack.c.h.b16 %v2294
    %v2926 = vunpack.c.l.b16 %v2295
    %v2927 = vunpack.c.h.b16 %v2295
    %v2928 = vunpack.c.l.b16 %v2296
    %v2929 = vunpack.c.h.b16 %v2296
    %v2930 = vunpack.c.l.b16 %v2297
    %v2931 = vunpack.c.l.b16 %v2298
    %v2932 = vunpack.c.h.b16 %v2298
    %v2933 = vunpack.c.l.b16 %v2299
    %v2934 = vunpack.c.h.b16 %v2299
    %v2935 = vunpack.c.l.b16 %v2300
    %v2936 = vunpack.c.h.b16 %v2300
    %v2937 = vunpack.c.l.b16 %v2301
    %v2938 = vunpack.c.l.b16 %v2302
    %v2939 = vunpack.c.h.b16 %v2302
    %v2940 = vunpack.c.l.b16 %v2303
    %v2941 = vunpack.c.h.b16 %v2303
    %v2942 = vunpack.c.l.b16 %v2304
    %v2943 = vunpack.c.h.b16 %v2304
    %v2944 = vunpack.c.l.b16 %v2305
    %v2945 = vunpack.c.l.b16 %v2306
    %v2946 = vunpack.c.h.b16 %v2306
    %v2947 = vunpack.c.l.b16 %v2307
    %v2948 = vunpack.c.h.b16 %v2307
    %v2949 = vunpack.c.l.b16 %v2308
    %v2950 = vunpack.c.h.b16 %v2308
    %v2951 = vunpack.c.l.b16 %v2309
    %v2952 = vunpack.c.l.b16 %v2310
    %v2953 = vunpack.c.h.b16 %v2310
    %v2954 = vunpack.c.l.b16 %v2311
    %v2955 = vunpack.c.h.b16 %v2311
    %v2956 = vunpack.c.l.b16 %v2312
    %v2957 = vunpack.c.h.b16 %v2312
    %v2958 = vunpack.c.l.b16 %v2313
    %v2959 = vunpack.c.l.b16 %v2314
    %v2960 = vunpack.c.h.b16 %v2314
    %v2961 = vunpack.c.l.b16 %v2315
    %v2962 = vunpack.c.h.b16 %v2315
    %v2963 = vunpack.c.l.b16 %v2316
    %v2964 = vunpack.c.h.b16 %v2316
    %v2965 = vunpack.c.l.b16 %v2317
    %v2966 = vunpack.c.l.b16 %v2318
    %v2967 = vunpack.c.h.b16 %v2318
    %v2968 = vunpack.c.l.b16 %v2319
    %v2969 = vunpack.c.h.b16 %v2319
    %v2970 = vunpack.c.l.b16 %v2320
    %v2971 = vunpack.c.h.b16 %v2320
    %v2972 = vunpack.c.l.b16 %v2321
    %v2973 = vunpack.c.l.b16 %v2322
    %v2974 = vunpack.c.h.b16 %v2322
    %v2975 = vunpack.c.l.b16 %v2323
    %v2976 = vunpack.c.h.b16 %v2323
    %v2977 = vunpack.c.l.b16 %v2324
    %v2978 = vunpack.c.h.b16 %v2324
    %v2979 = vunpack.c.l.b16 %v2325
    %v2980 = vunpack.c.l.b16 %v2326
    %v2981 = vunpack.c.h.b16 %v2326
    %v2982 = vunpack.c.l.b16 %v2327
    %v2983 = vunpack.c.h.b16 %v2327
    %v2984 = vunpack.c.l.b16 %v2328
    %v2985 = vunpack.c.h.b16 %v2328
    %v2986 = vunpack.c.l.b16 %v2329
    %v2987 = vunpack.c.l.b16 %v2330
    %v2988 = vunpack.c.h.b16 %v2330
    %v2989 = vunpack.c.l.b16 %v2331
    %v2990 = vunpack.c.h.b16 %v2331
    %v2991 = vunpack.c.l.b16 %v2332
    %v2992 = vunpack.c.h.b16 %v2332
    %v2993 = vunpack.c.l.b16 %v2333
    %v2994 = vunpack.c.l.b16 %v2334
    %v2995 = vunpack.c.h.b16 %v2334
    %v2996 = vunpack.c.l.b16 %v2335
    %v2997 = vunpack.c.h.b16 %v2335
    %v2998 = vunpack.c.l.b16 %v2336
    %v2999 = vunpack.c.h.b16 %v2336
    %v3000 = vunpack.c.l.b16 %v2337
    %v3001 = vunpack.c.l.b16 %v2338
    %v3002 = vunpack.c.h.b16 %v2338
    %v3003 = vunpack.c.l.b16 %v2339
    %v3004 = vunpack.c.h.b16 %v2339
    %v3005 = vunpack.c.l.b16 %v2340
    %v3006 = vunpack.c.h.b16 %v2340
    %v3007 = vunpack.c.l.b16 %v2341
    %v3008 = vunpack.c.l.b16 %v2342
    %v3009 = vunpack.c.h.b16 %v2342
    %v3010 = vunpack.c.l.b16 %v2343
    %v3011 = vunpack.c.h.b16 %v2343
    %v3012 = vunpack.c.l.b16 %v2344
    %v3013 = vunpack.c.h.b16 %v2344
    %v3014 = vunpack.c.l.b16 %v2345
    %v3015 = vunpack.c.l.b16 %v2346
    %v3016 = vunpack.c.h.b16 %v2346
    %v3017 = vunpack.c.l.b16 %v2347
    %v3018 = vunpack.c.h.b16 %v2347
    %v3019 = vunpack.c.l.b16 %v2348
    %v3020 = vunpack.c.h.b16 %v2348
    %v3021 = vunpack.c.l.b16 %v2349
    %v3022 = vunpack.c.l.b16 %v2350
    %v3023 = vunpack.c.h.b16 %v2350
    %v3024 = vunpack.c.l.b16 %v2351
    %v3025 = vunpack.c.h.b16 %v2351
    %v3026 = vunpack.c.l.b16 %v2352
    %v3027 = vunpack.c.h.b16 %v2352
    %v3028 = vunpack.c.l.b16 %v2353
    %v3029 = vunpack.c.l.b16 %v2354
    %v3030 = vunpack.c.h.b16 %v2354
    %v3031 = vunpack.c.l.b16 %v2355
    %v3032 = vunpack.c.h.b16 %v2355
    %v3033 = vunpack.c.l.b16 %v2356
    %v3034 = vunpack.c.h.b16 %v2356
    %v3035 = vunpack.c.l.b16 %v2357
    %v3036 = vunpack.c.l.b16 %v2358
    %v3037 = vunpack.c.h.b16 %v2358
    %v3038 = vunpack.c.l.b16 %v2359
    %v3039 = vunpack.c.h.b16 %v2359
    %v3040 = vunpack.c.l.b16 %v2360
    %v3041 = vunpack.c.h.b16 %v2360
    %v3042 = vunpack.c.l.b16 %v2361
    %v3043 = vunpack.c.l.b16 %v2362
    %v3044 = vunpack.c.h.b16 %v2362
    %v3045 = vunpack.c.l.b16 %v2363
    %v3046 = vunpack.c.h.b16 %v2363
    %v3047 = vunpack.c.l.b16 %v2364
    %v3048 = vunpack.c.h.b16 %v2364
    %v3049 = vunpack.c.l.b16 %v2365
    %v3050 = vunpack.c.l.b16 %v2366
    %v3051 = vunpack.c.h.b16 %v2366
    %v3052 = vunpack.c.l.b16 %v2367
    %v3053 = vunpack.c.h.b16 %v2367
    %v3054 = vunpack.c.l.b16 %v2368
    %v3055 = vunpack.c.h.b16 %v2368
    %v3056 = vunpack.c.l.b16 %v2369
    %v3057 = vunpack.c.l.b16 %v2370
    %v3058 = vunpack.c.h.b16 %v2370
    %v3059 = vunpack.c.l.b16 %v2371
    %v3060 = vunpack.c.h.b16 %v2371
    %v3061 = vunpack.c.l.b16 %v2372
    %v3062 = vunpack.c.h.b16 %v2372
    %v3063 = vunpack.c.l.b16 %v2373
    %v3064 = vunpack.c.l.b16 %v2374
    %v3065 = vunpack.c.h.b16 %v2374
    %v3066 = vunpack.c.l.b16 %v2375
    %v3067 = vunpack.c.h.b16 %v2375
    %v3068 = vunpack.c.l.b16 %v2376
    %v3069 = vunpack.c.h.b16 %v2376
    %v3070 = vunpack.c.l.b16 %v2377
    %v3071 = vunpack.c.l.b16 %v2378
    %v3072 = vunpack.c.h.b16 %v2378
    %v3073 = vunpack.c.l.b16 %v2379
    %v3074 = vunpack.c.h.b16 %v2379
    %v3075 = vunpack.c.l.b16 %v2380
    %v3076 = vunpack.c.h.b16 %v2380
    %v3077 = vunpack.c.l.b16 %v2381
    %v3078 = vunpack.c.l.b16 %v2382
    %v3079 = vunpack.c.h.b16 %v2382
    %v3080 = vunpack.c.l.b16 %v2383
    %v3081 = vunpack.c.h.b16 %v2383
    %v3082 = vunpack.c.l.b16 %v2384
    %v3083 = vunpack.c.h.b16 %v2384
    %v3084 = vunpack.c.l.b16 %v2385
    %v3085 = vunpack.c.l.b16 %v2386
    %v3086 = vunpack.c.h.b16 %v2386
    %v3087 = vunpack.c.l.b16 %v2387
    %v3088 = vunpack.c.h.b16 %v2387
    %v3089 = vunpack.c.l.b16 %v2388
    %v3090 = vunpack.c.h.b16 %v2388
    %v3091 = vunpack.c.l.b16 %v2389
    %v3092 = vunpack.c.l.b16 %v2390
    %v3093 = vunpack.c.h.b16 %v2390
    %v3094 = vunpack.c.l.b16 %v2391
    %v3095 = vunpack.c.h.b16 %v2391
    %v3096 = vunpack.c.l.b16 %v2392
    %v3097 = vunpack.c.h.b16 %v2392
    %v3098 = vunpack.c.l.b16 %v2393
    %v3099 = vunpack.c.l.b16 %v2394
    %v3100 = vunpack.c.h.b16 %v2394
    %v3101 = vunpack.c.l.b16 %v2395
    %v3102 = vunpack.c.h.b16 %v2395
    %v3103 = vunpack.c.l.b16 %v2396
    %v3104 = vunpack.c.h.b16 %v2396
    %v3105 = vunpack.c.l.b16 %v2397
    %v3106 = vunpack.c.l.b16 %v2398
    %v3107 = vunpack.c.h.b16 %v2398
    %v3108 = vunpack.c.l.b16 %v2399
    %v3109 = vunpack.c.h.b16 %v2399
    %v3110 = vunpack.c.l.b16 %v2400
    %v3111 = vunpack.c.h.b16 %v2400
    %v3112 = vunpack.c.l.b16 %v2401
    %v3113 = vunpack.c.l.b16 %v2402
    %v3114 = vunpack.c.h.b16 %v2402
    %v3115 = vunpack.c.l.b16 %v2403
    %v3116 = vunpack.c.h.b16 %v2403
    %v3117 = vunpack.c.l.b16 %v2404
    %v3118 = vunpack.c.h.b16 %v2404
    %v3119 = vunpack.c.l.b16 %v2405
    %v3120 = vunpack.c.l.b16 %v2406
    %v3121 = vunpack.c.h.b16 %v2406
    %v3122 = vunpack.c.l.b16 %v2407
    %v3123 = vunpack.c.h.b16 %v2407
    %v3124 = vunpack.c.l.b16 %v2408
    %v3125 = vunpack.c.h.b16 %v2408
    %v3126 = vunpack.c.l.b16 %v2409
    %v3127 = vunpack.c.l.b16 %v2410
    %v3128 = vunpack.c.h.b16 %v2410
    %v3129 = vunpack.c.l.b16 %v2411
    %v3130 = vunpack.c.h.b16 %v2411
    %v3131 = vunpack.c.l.b16 %v2412
    %v3132 = vunpack.c.h.b16 %v2412
    %v3133 = vunpack.c.l.b16 %v2413
    %v3134 = vunpack.c.l.b16 %v2414
    %v3135 = vunpack.c.h.b16 %v2414
    %v3136 = vunpack.c.l.b16 %v2415
    %v3137 = vunpack.c.h.b16 %v2415
    %v3138 = vunpack.c.l.b16 %v2416
    %v3139 = vunpack.c.h.b16 %v2416
    %v3140 = vunpack.c.l.b16 %v2417
    %v3141 = vunpack.c.l.b16 %v2418
    %v3142 = vunpack.c.h.b16 %v2418
    %v3143 = vunpack.c.l.b16 %v2419
    %v3144 = vunpack.c.h.b16 %v2419
    %v3145 = vunpack.c.l.b16 %v2420
    %v3146 = vunpack.c.h.b16 %v2420
    %v3147 = vunpack.c.l.b16 %v2421
    %v3148 = vunpack.c.l.b16 %v2422
    %v3149 = vunpack.c.h.b16 %v2422
    %v3150 = vunpack.c.l.b16 %v2423
    %v3151 = vunpack.c.h.b16 %v2423
    %v3152 = vunpack.c.l.b16 %v2424
    %v3153 = vunpack.c.h.b16 %v2424
    %v3154 = vunpack.c.l.b16 %v2425
    %v3155 = vunpack.c.l.b16 %v2426
    %v3156 = vunpack.c.h.b16 %v2426
    %v3157 = vunpack.c.l.b16 %v2427
    %v3158 = vunpack.c.h.b16 %v2427
    %v3159 = vunpack.c.l.b16 %v2428
    %v3160 = vunpack.c.h.b16 %v2428
    %v3161 = vunpack.c.l.b16 %v2429
    %v3162 = vunpack.c.l.b16 %v2430
    %v3163 = vunpack.c.h.b16 %v2430
    %v3164 = vunpack.c.l.b16 %v2431
    %v3165 = vunpack.c.h.b16 %v2431
    %v3166 = vunpack.c.l.b16 %v2432
    %v3167 = vunpack.c.h.b16 %v2432
    %v3168 = vunpack.c.l.b16 %v2433
    %v3169 = vunpack.c.l.b16 %v2434
    %v3170 = vunpack.c.h.b16 %v2434
    %v3171 = vunpack.c.l.b16 %v2435
    %v3172 = vunpack.c.h.b16 %v2435
    %v3173 = vunpack.c.l.b16 %v2436
    %v3174 = vunpack.c.h.b16 %v2436
    %v3175 = vunpack.c.l.b16 %v2437
    %v3176 = vunpack.c.l.b16 %v2438
    %v3177 = vunpack.c.h.b16 %v2438
    %v3178 = vunpack.c.l.b16 %v2439
    %v3179 = vunpack.c.h.b16 %v2439
    %v3180 = vunpack.c.l.b16 %v2440
    %v3181 = vunpack.c.h.b16 %v2440
    %v3182 = vunpack.c.l.b16 %v2441
    %v3183 = vpack.c.b16 %v2742, %v2735
    %v3184 = vpack.c.b16 %v2743, %v2736
    %v3185 = vpack.c.b16 %v2744, %v2737
    %v3186 = vpack.c.b16 %v2745, %v2738
    %v3187 = vpack.c.b16 %v2746, %v2739
    %v3188 = vpack.c.b16 %v2747, %v2740
    %v3189 = vpack.c.b16 %v2748, %v2741
    %v3190 = vpack.c.b16 %v2756, %v2749
    %v3191 = vpack.c.b16 %v2757, %v2750
    %v3192 = vpack.c.b16 %v2758, %v2751
    %v3193 = vpack.c.b16 %v2759, %v2752
    %v3194 = vpack.c.b16 %v2760, %v2753
    %v3195 = vpack.c.b16 %v2761, %v2754
    %v3196 = vpack.c.b16 %v2762, %v2755
    %v3197 = vpack.c.b16 %v2770, %v2763
    %v3198 = vpack.c.b16 %v2771, %v2764
    %v3199 = vpack.c.b16 %v2772, %v2765
    %v3200 = vpack.c.b16 %v2773, %v2766
    %v3201 = vpack.c.b16 %v2774, %v2767
    %v3202 = vpack.c.b16 %v2775, %v2768
    %v3203 = vpack.c.b16 %v2776, %v2769
    %v3204 = vpack.c.b16 %v2784, %v2777
    %v3205 = vpack.c.b16 %v2785, %v2778
    %v3206 = vpack.c.b16 %v2786, %v2779
    %v3207 = vpack.c.b16 %v2787, %v2780
    %v3208 = vpack.c.b16 %v2788, %v2781
    %v3209 = vpack.c.b16 %v2789, %v2782
    %v3210 = vpack.c.b16 %v2790, %v2783
    %v3211 = vpack.c.b16 %v2798, %v2791
    %v3212 = vpack.c.b16 %v2799, %v2792
    %v3213 = vpack.c.b16 %v2800, %v2793
    %v3214 = vpack.c.b16 %v2801, %v2794
    %v3215 = vpack.c.b16 %v2802, %v2795
    %v3216 = vpack.c.b16 %v2803, %v2796
    %v3217 = vpack.c.b16 %v2804, %v2797
    %v3218 = vpack.c.b16 %v2812, %v2805
    %v3219 = vpack.c.b16 %v2813, %v2806
    %v3220 = vpack.c.b16 %v2814, %v2807
    %v3221 = vpack.c.b16 %v2815, %v2808
    %v3222 = vpack.c.b16 %v2816, %v2809
    %v3223 = vpack.c.b16 %v2817, %v2810
    %v3224 = vpack.c.b16 %v2818, %v2811
    %v3225 = vpack.c.b16 %v2826, %v2819
    %v3226 = vpack.c.b16 %v2827, %v2820
    %v3227 = vpack.c.b16 %v2828, %v2821
    %v3228 = vpack.c.b16 %v2829, %v2822
    %v3229 = vpack.c.b16 %v2830, %v2823
    %v3230 = vpack.c.b16 %v2831, %v2824
    %v3231 = vpack.c.b16 %v2832, %v2825
    %v3232 = vpack.c.b16 %v2840, %v2833
    %v3233 = vpack.c.b16 %v2841, %v2834
    %v3234 = vpack.c.b16 %v2842, %v2835
    %v3235 = vpack.c.b16 %v2843, %v2836
    %v3236 = vpack.c.b16 %v2844, %v2837
    %v3237 = vpack.c.b16 %v2845, %v2838
    %v3238 = vpack.c.b16 %v2846, %v2839
    %v3239 = vpack.c.b16 %v2854, %v2847
    %v3240 = vpack.c.b16 %v2855, %v2848
    %v3241 = vpack.c.b16 %v2856, %v2849
    %v3242 = vpack.c.b16 %v2857, %v2850
    %v3243 = vpack.c.b16 %v2858, %v2851
    %v3244 = vpack.c.b16 %v2859, %v2852
    %v3245 = vpack.c.b16 %v2860, %v2853
    %v3246 = vpack.c.b16 %v2868, %v2861
    %v3247 = vpack.c.b16 %v2869, %v2862
    %v3248 = vpack.c.b16 %v2870, %v2863
    %v3249 = vpack.c.b16 %v2871, %v2864
    %v3250 = vpack.c.b16 %v2872, %v2865
    %v3251 = vpack.c.b16 %v2873, %v2866
    %v3252 = vpack.c.b16 %v2874, %v2867
    %v3253 = vpack.c.b16 %v2882, %v2875
    %v3254 = vpack.c.b16 %v2883, %v2876
    %v3255 = vpack.c.b16 %v2884, %v2877
    %v3256 = vpack.c.b16 %v2885, %v2878
    %v3257 = vpack.c.b16 %v2886, %v2879
    %v3258 = vpack.c.b16 %v2887, %v2880
    %v3259 = vpack.c.b16 %v2888, %v2881
    %v3260 = vpack.c.b16 %v2896, %v2889
    %v3261 = vpack.c.b16 %v2897, %v2890
    %v3262 = vpack.c.b16 %v2898, %v2891
    %v3263 = vpack.c.b16 %v2899, %v2892
    %v3264 = vpack.c.b16 %v2900, %v2893
    %v3265 = vpack.c.b16 %v2901, %v2894
    %v3266 = vpack.c.b16 %v2902, %v2895
    %v3267 = vpack.c.b16 %v2910, %v2903
    %v3268 = vpack.c.b16 %v2911, %v2904
    %v3269 = vpack.c.b16 %v2912, %v2905
    %v3270 = vpack.c.b16 %v2913, %v2906
    %v3271 = vpack.c.b16 %v2914, %v2907
    %v3272 = vpack.c.b16 %v2915, %v2908
    %v3273 = vpack.c.b16 %v2916, %v2909
    %v3274 = vpack.c.b16 %v2924, %v2917
    %v3275 = vpack.c.b16 %v2925, %v2918
    %v3276 = vpack.c.b16 %v2926, %v2919
    %v3277 = vpack.c.b16 %v2927, %v2920
    %v3278 = vpack.c.b16 %v2928, %v2921
    %v3279 = vpack.c.b16 %v2929, %v2922
    %v3280 = vpack.c.b16 %v2930, %v2923
    %v3281 = vpack.c.b16 %v2938, %v2931
    %v3282 = vpack.c.b16 %v2939, %v2932
    %v3283 = vpack.c.b16 %v2940, %v2933
    %v3284 = vpack.c.b16 %v2941, %v2934
    %v3285 = vpack.c.b16 %v2942, %v2935
    %v3286 = vpack.c.b16 %v2943, %v2936
    %v3287 = vpack.c.b16 %v2944, %v2937
    %v3288 = vpack.c.b16 %v2952, %v2945
    %v3289 = vpack.c.b16 %v2953, %v2946
    %v3290 = vpack.c.b16 %v2954, %v2947
    %v3291 = vpack.c.b16 %v2955, %v2948
    %v3292 = vpack.c.b16 %v2956, %v2949
    %v3293 = vpack.c.b16 %v2957, %v2950
    %v3294 = vpack.c.b16 %v2958, %v2951
    %v3295 = vpack.c.b16 %v2966, %v2959
    %v3296 = vpack.c.b16 %v2967, %v2960
    %v3297 = vpack.c.b16 %v2968, %v2961
    %v3298 = vpack.c.b16 %v2969, %v2962
    %v3299 = vpack.c.b16 %v2970, %v2963
    %v3300 = vpack.c.b16 %v2971, %v2964
    %v3301 = vpack.c.b16 %v2972, %v2965
    %v3302 = vpack.c.b16 %v2980, %v2973
    %v3303 = vpack.c.b16 %v2981, %v2974
    %v3304 = vpack.c.b16 %v2982, %v2975
    %v3305 = vpack.c.b16 %v2983, %v2976
    %v3306 = vpack.c.b16 %v2984, %v2977
    %v3307 = vpack.c.b16 %v2985, %v2978
    %v3308 = vpack.c.b16 %v2986, %v2979
    %v3309 = vpack.c.b16 %v2994, %v2987
    %v3310 = vpack.c.b16 %v2995, %v2988
    %v3311 = vpack.c.b16 %v2996, %v2989
    %v3312 = vpack.c.b16 %v2997, %v2990
    %v3313 = vpack.c.b16 %v2998, %v2991
    %v3314 = vpack.c.b16 %v2999, %v2992
    %v3315 = vpack.c.b16 %v3000, %v2993
    %v3316 = vpack.c.b16 %v3008, %v3001
    %v3317 = vpack.c.b16 %v3009, %v3002
    %v3318 = vpack.c.b16 %v3010, %v3003
    %v3319 = vpack.c.b16 %v3011, %v3004
    %v3320 = vpack.c.b16 %v3012, %v3005
    %v3321 = vpack.c.b16 %v3013, %v3006
    %v3322 = vpack.c.b16 %v3014, %v3007
    %v3323 = vpack.c.b16 %v3022, %v3015
    %v3324 = vpack.c.b16 %v3023, %v3016
    %v3325 = vpack.c.b16 %v3024, %v3017
    %v3326 = vpack.c.b16 %v3025, %v3018
    %v3327 = vpack.c.b16 %v3026, %v3019
    %v3328 = vpack.c.b16 %v3027, %v3020
    %v3329 = vpack.c.b16 %v3028, %v3021
    %v3330 = vpack.c.b16 %v3036, %v3029
    %v3331 = vpack.c.b16 %v3037, %v3030
    %v3332 = vpack.c.b16 %v3038, %v3031
    %v3333 = vpack.c.b16 %v3039, %v3032
    %v3334 = vpack.c.b16 %v3040, %v3033
    %v3335 = vpack.c.b16 %v3041, %v3034
    %v3336 = vpack.c.b16 %v3042, %v3035
    %v3337 = vpack.c.b16 %v3050, %v3043
    %v3338 = vpack.c.b16 %v3051, %v3044
    %v3339 = vpack.c.b16 %v3052, %v3045
    %v3340 = vpack.c.b16 %v3053, %v3046
    %v3341 = vpack.c.b16 %v3054, %v3047
    %v3342 = vpack.c.b16 %v3055, %v3048
    %v3343 = vpack.c.b16 %v3056, %v3049
    %v3344 = vpack.c.b16 %v3064, %v3057
    %v3345 = vpack.c.b16 %v3065, %v3058
    %v3346 = vpack.c.b16 %v3066, %v3059
    %v3347 = vpack.c.b16 %v3067, %v3060
    %v3348 = vpack.c.b16 %v3068, %v3061
    %v3349 = vpack.c.b16 %v3069, %v3062
    %v3350 = vpack.c.b16 %v3070, %v3063
    %v3351 = vpack.c.b16 %v3078, %v3071
    %v3352 = vpack.c.b16 %v3079, %v3072
    %v3353 = vpack.c.b16 %v3080, %v3073
    %v3354 = vpack.c.b16 %v3081, %v3074
    %v3355 = vpack.c.b16 %v3082, %v3075
    %v3356 = vpack.c.b16 %v3083, %v3076
    %v3357 = vpack.c.b16 %v3084, %v3077
    %v3358 = vpack.c.b16 %v3092, %v3085
    %v3359 = vpack.c.b16 %v3093, %v3086
    %v3360 = vpack.c.b16 %v3094, %v3087
    %v3361 = vpack.c.b16 %v3095, %v3088
    %v3362 = vpack.c.b16 %v3096, %v3089
    %v3363 = vpack.c.b16 %v3097, %v3090
    %v3364 = vpack.c.b16 %v3098, %v3091
    %v3365 = vpack.c.b16 %v3106, %v3099
    %v3366 = vpack.c.b16 %v3107, %v3100
    %v3367 = vpack.c.b16 %v3108, %v3101
    %v3368 = vpack.c.b16 %v3109, %v3102
    %v3369 = vpack.c.b16 %v3110, %v3103
    %v3370 = vpack.c.b16 %v3111, %v3104
    %v3371 = vpack.c.b16 %v3112, %v3105
    %v3372 = vpack.c.b16 %v3120, %v3113
    %v3373 = vpack.c.b16 %v3121, %v3114
    %v3374 = vpack.c.b16 %v3122, %v3115
    %v3375 = vpack.c.b16 %v3123, %v3116
    %v3376 = vpack.c.b16 %v3124, %v3117
    %v3377 = vpack.c.b16 %v3125, %v3118
    %v3378 = vpack.c.b16 %v3126, %v3119
    %v3379 = vpack.c.b16 %v3134, %v3127
    %v3380 = vpack.c.b16 %v3135, %v3128
    %v3381 = vpack.c.b16 %v3136, %v3129
    %v3382 = vpack.c.b16 %v3137, %v3130
    %v3383 = vpack.c.b16 %v3138, %v3131
    %v3384 = vpack.c.b16 %v3139, %v3132
    %v3385 = vpack.c.b16 %v3140, %v3133
    %v3386 = vpack.c.b16 %v3148, %v3141
    %v3387 = vpack.c.b16 %v3149, %v3142
    %v3388 = vpack.c.b16 %v3150, %v3143
    %v3389 = vpack.c.b16 %v3151, %v3144
    %v3390 = vpack.c.b16 %v3152, %v3145
    %v3391 = vpack.c.b16 %v3153, %v3146
    %v3392 = vpack.c.b16 %v3154, %v3147
    %v3393 = vpack.c.b16 %v3162, %v3155
    %v3394 = vpack.c.b16 %v3163, %v3156
    %v3395 = vpack.c.b16 %v3164, %v3157
    %v3396 = vpack.c.b16 %v3165, %v3158
    %v3397 = vpack.c.b16 %v3166, %v3159
    %v3398 = vpack.c.b16 %v3167, %v3160
    %v3399 = vpack.c.b16 %v3168, %v3161
    %v3400 = vpack.c.b16 %v3176, %v3169
    %v3401 = vpack.c.b16 %v3177, %v3170
    %v3402 = vpack.c.b16 %v3178, %v3171
    %v3403 = vpack.c.b16 %v3179, %v3172
    %v3404 = vpack.c.b16 %v3180, %v3173
    %v3405 = vpack.c.b16 %v3181, %v3174
    %v3406 = vpack.c.b16 %v3182, %v3175
    %3631 = vmatprep.subr.bf16.mxu0 %v3184
    %3632 = vmatpush1.bf16.msra.mxu0 %v3183
    %3633 = vmatprep.subr.bf16.mxu0 %v3191
    %3634 = vmatpush1.bf16.msra.mxu0 %v3190
    %3635 = vmatprep.subr.bf16.mxu0 %v3198
    %3636 = vmatpush1.bf16.msra.mxu0 %v3197
    %3637 = vmatprep.subr.bf16.mxu0 %v3205
    %3638 = vmatpush1.bf16.msra.mxu0 %v3204
    %3639 = vmatprep.subr.bf16.mxu0 %v3212
    %3640 = vmatpush1.bf16.msra.mxu0 %v3211
    %3641 = vmatprep.subr.bf16.mxu0 %v3219
    %3642 = vmatpush1.bf16.msra.mxu0 %v3218
    %3643 = vmatprep.subr.bf16.mxu0 %v3226
    %3644 = vmatpush1.bf16.msra.mxu0 %v3225
    %3645 = vmatprep.subr.bf16.mxu0 %v3233
    %3646 = vmatpush1.bf16.msra.mxu0 %v3232
    %3647 = vmatprep.subr.bf16.mxu0 %v3240
    %3648 = vmatpush1.bf16.msra.mxu0 %v3239
    %3649 = vmatprep.subr.bf16.mxu0 %v3247
    %3650 = vmatpush1.bf16.msra.mxu0 %v3246
    %3651 = vmatprep.subr.bf16.mxu0 %v3254
    %3652 = vmatpush1.bf16.msra.mxu0 %v3253
    %3653 = vmatprep.subr.bf16.mxu0 %v3261
    %3654 = vmatpush1.bf16.msra.mxu0 %v3260
    %3655 = vmatprep.subr.bf16.mxu0 %v3268
    %3656 = vmatpush1.bf16.msra.mxu0 %v3267
    %3657 = vmatprep.subr.bf16.mxu0 %v3275
    %3658 = vmatpush1.bf16.msra.mxu0 %v3274
    %3659 = vmatprep.subr.bf16.mxu0 %v3282
    %3660 = vmatpush1.bf16.msra.mxu0 %v3281
    %3661 = vmatprep.subr.bf16.mxu0 %v3289
    %3662 = vmatpush1.bf16.msra.mxu0 %v3288
    %3663 = vmatprep.mubr.bf16.mxu0 %v2183
    %3664 = vmatmul.mubr.bf16.gmra.mrb[0].mxu0 %v2182
    %v3665 = vpop.f32.mrb[0].mxu0
    %v3666 = vadd.f32 %v2447, %v3665
    %v3667 = vpop.f32.mrb[0].mxu0
    %v3668 = vadd.f32 %v2451, %v3667
    %v3669 = vpop.f32.mrb[0].mxu0
    %v3670 = vpop.f32.mrb[0].mxu0
    %3671 = vdwg.mxu0
    %3672 = vmatprep.subr.bf16.mxu0 %v3296
    %3673 = vmatpush1.bf16.msra.mxu0 %v3295
    %3674 = vmatprep.subr.bf16.mxu0 %v3303
    %3675 = vmatpush1.bf16.msra.mxu0 %v3302
    %3676 = vmatprep.subr.bf16.mxu0 %v3310
    %3677 = vmatpush1.bf16.msra.mxu0 %v3309
    %3678 = vmatprep.subr.bf16.mxu0 %v3317
    %3679 = vmatpush1.bf16.msra.mxu0 %v3316
    %3680 = vmatprep.subr.bf16.mxu0 %v3324
    %3681 = vmatpush1.bf16.msra.mxu0 %v3323
    %3682 = vmatprep.subr.bf16.mxu0 %v3331
    %3683 = vmatpush1.bf16.msra.mxu0 %v3330
    %3684 = vmatprep.subr.bf16.mxu0 %v3338
    %3685 = vmatpush1.bf16.msra.mxu0 %v3337
    %3686 = vmatprep.subr.bf16.mxu0 %v3345
    %3687 = vmatpush1.bf16.msra.mxu0 %v3344
    %3688 = vmatprep.subr.bf16.mxu0 %v3352
    %3689 = vmatpush1.bf16.msra.mxu0 %v3351
    %3690 = vmatprep.subr.bf16.mxu0 %v3359
    %3691 = vmatpush1.bf16.msra.mxu0 %v3358
    %3692 = vmatprep.subr.bf16.mxu0 %v3366
    %3693 = vmatpush1.bf16.msra.mxu0 %v3365
    %3694 = vmatprep.subr.bf16.mxu0 %v3373
    %3695 = vmatpush1.bf16.msra.mxu0 %v3372
    %3696 = vmatprep.subr.bf16.mxu0 %v3380
    %3697 = vmatpush1.bf16.msra.mxu0 %v3379
    %3698 = vmatprep.subr.bf16.mxu0 %v3387
    %3699 = vmatpush1.bf16.msra.mxu0 %v3386
    %3700 = vmatprep.subr.bf16.mxu0 %v3394
    %3701 = vmatpush1.bf16.msra.mxu0 %v3393
    %3702 = vmatprep.subr.bf16.mxu0 %v3401
    %3703 = vmatpush1.bf16.msra.mxu0 %v3400
    %3704 = vmatprep.mubr.bf16.mxu0 %v2185
    %3705 = vmatmul.mubr.bf16.gmra.mrb[0].mxu0 %v2184
    %v3706 = vpop.f32.mrb[0].mxu0
    %v3707 = vadd.f32 %v3666, %v3706
    %v3708 = vpop.f32.mrb[0].mxu0
    %v3709 = vadd.f32 %v3668, %v3708
    %v3710 = vpop.f32.mrb[0].mxu0
    %v3711 = vpop.f32.mrb[0].mxu0
    %3712 = vdwg.mxu0
    %3713 = vmatprep.subr.bf16.mxu0 %v3186
    %3714 = vmatpush1.bf16.msra.mxu0 %v3185
    %3715 = vmatprep.subr.bf16.mxu0 %v3193
    %3716 = vmatpush1.bf16.msra.mxu0 %v3192
    %3717 = vmatprep.subr.bf16.mxu0 %v3200
    %3718 = vmatpush1.bf16.msra.mxu0 %v3199
    %3719 = vmatprep.subr.bf16.mxu0 %v3207
    %3720 = vmatpush1.bf16.msra.mxu0 %v3206
    %3721 = vmatprep.subr.bf16.mxu0 %v3214
    %3722 = vmatpush1.bf16.msra.mxu0 %v3213
    %3723 = vmatprep.subr.bf16.mxu0 %v3221
    %3724 = vmatpush1.bf16.msra.mxu0 %v3220
    %3725 = vmatprep.subr.bf16.mxu0 %v3228
    %3726 = vmatpush1.bf16.msra.mxu0 %v3227
    %3727 = vmatprep.subr.bf16.mxu0 %v3235
    %3728 = vmatpush1.bf16.msra.mxu0 %v3234
    %3729 = vmatprep.subr.bf16.mxu0 %v3242
    %3730 = vmatpush1.bf16.msra.mxu0 %v3241
    %3731 = vmatprep.subr.bf16.mxu0 %v3249
    %3732 = vmatpush1.bf16.msra.mxu0 %v3248
    %3733 = vmatprep.subr.bf16.mxu0 %v3256
    %3734 = vmatpush1.bf16.msra.mxu0 %v3255
    %3735 = vmatprep.subr.bf16.mxu0 %v3263
    %3736 = vmatpush1.bf16.msra.mxu0 %v3262
    %3737 = vmatprep.subr.bf16.mxu0 %v3270
    %3738 = vmatpush1.bf16.msra.mxu0 %v3269
    %3739 = vmatprep.subr.bf16.mxu0 %v3277
    %3740 = vmatpush1.bf16.msra.mxu0 %v3276
    %3741 = vmatprep.subr.bf16.mxu0 %v3284
    %3742 = vmatpush1.bf16.msra.mxu0 %v3283
    %3743 = vmatprep.subr.bf16.mxu0 %v3291
    %3744 = vmatpush1.bf16.msra.mxu0 %v3290
    %3745 = vmatprep.mubr.bf16.mxu0 %v2183
    %3746 = vmatmul.mubr.bf16.gmra.mrb[0].mxu0 %v2182
    %v3747 = vpop.f32.mrb[0].mxu0
    %v3748 = vadd.f32 %v2455, %v3747
    %v3749 = vpop.f32.mrb[0].mxu0
    %v3750 = vadd.f32 %v2459, %v3749
    %v3751 = vpop.f32.mrb[0].mxu0
    %v3752 = vpop.f32.mrb[0].mxu0
    %3753 = vdwg.mxu0
    %3754 = vmatprep.subr.bf16.mxu0 %v3298
    %3755 = vmatpush1.bf16.msra.mxu0 %v3297
    %3756 = vmatprep.subr.bf16.mxu0 %v3305
    %3757 = vmatpush1.bf16.msra.mxu0 %v3304
    %3758 = vmatprep.subr.bf16.mxu0 %v3312
    %3759 = vmatpush1.bf16.msra.mxu0 %v3311
    %3760 = vmatprep.subr.bf16.mxu0 %v3319
    %3761 = vmatpush1.bf16.msra.mxu0 %v3318
    %3762 = vmatprep.subr.bf16.mxu0 %v3326
    %3763 = vmatpush1.bf16.msra.mxu0 %v3325
    %3764 = vmatprep.subr.bf16.mxu0 %v3333
    %3765 = vmatpush1.bf16.msra.mxu0 %v3332
    %3766 = vmatprep.subr.bf16.mxu0 %v3340
    %3767 = vmatpush1.bf16.msra.mxu0 %v3339
    %3768 = vmatprep.subr.bf16.mxu0 %v3347
    %3769 = vmatpush1.bf16.msra.mxu0 %v3346
    %3770 = vmatprep.subr.bf16.mxu0 %v3354
    %3771 = vmatpush1.bf16.msra.mxu0 %v3353
    %3772 = vmatprep.subr.bf16.mxu0 %v3361
    %3773 = vmatpush1.bf16.msra.mxu0 %v3360
    %3774 = vmatprep.subr.bf16.mxu0 %v3368
    %3775 = vmatpush1.bf16.msra.mxu0 %v3367
    %3776 = vmatprep.subr.bf16.mxu0 %v3375
    %3777 = vmatpush1.bf16.msra.mxu0 %v3374
    %3778 = vmatprep.subr.bf16.mxu0 %v3382
    %3779 = vmatpush1.bf16.msra.mxu0 %v3381
    %3780 = vmatprep.subr.bf16.mxu0 %v3389
    %3781 = vmatpush1.bf16.msra.mxu0 %v3388
    %3782 = vmatprep.subr.bf16.mxu0 %v3396
    %3783 = vmatpush1.bf16.msra.mxu0 %v3395
    %3784 = vmatprep.subr.bf16.mxu0 %v3403
    %3785 = vmatpush1.bf16.msra.mxu0 %v3402
    %3786 = vmatprep.mubr.bf16.mxu0 %v2185
    %3787 = vmatmul.mubr.bf16.gmra.mrb[0].mxu0 %v2184
    %v3788 = vpop.f32.mrb[0].mxu0
    %v3789 = vadd.f32 %v3748, %v3788
    %v3790 = vpop.f32.mrb[0].mxu0
    %v3791 = vadd.f32 %v3750, %v3790
    %v3792 = vpop.f32.mrb[0].mxu0
    %v3793 = vpop.f32.mrb[0].mxu0
    %3794 = vdwg.mxu0
    %3795 = vmatprep.subr.bf16.mxu0 %v3188
    %3796 = vmatpush1.bf16.msra.mxu0 %v3187
    %3797 = vmatprep.subr.bf16.mxu0 %v3195
    %3798 = vmatpush1.bf16.msra.mxu0 %v3194
    %3799 = vmatprep.subr.bf16.mxu0 %v3202
    %3800 = vmatpush1.bf16.msra.mxu0 %v3201
    %3801 = vmatprep.subr.bf16.mxu0 %v3209
    %3802 = vmatpush1.bf16.msra.mxu0 %v3208
    %3803 = vmatprep.subr.bf16.mxu0 %v3216
    %3804 = vmatpush1.bf16.msra.mxu0 %v3215
    %3805 = vmatprep.subr.bf16.mxu0 %v3223
    %3806 = vmatpush1.bf16.msra.mxu0 %v3222
    %3807 = vmatprep.subr.bf16.mxu0 %v3230
    %3808 = vmatpush1.bf16.msra.mxu0 %v3229
    %3809 = vmatprep.subr.bf16.mxu0 %v3237
    %3810 = vmatpush1.bf16.msra.mxu0 %v3236
    %3811 = vmatprep.subr.bf16.mxu0 %v3244
    %3812 = vmatpush1.bf16.msra.mxu0 %v3243
    %3813 = vmatprep.subr.bf16.mxu0 %v3251
    %3814 = vmatpush1.bf16.msra.mxu0 %v3250
    %3815 = vmatprep.subr.bf16.mxu0 %v3258
    %3816 = vmatpush1.bf16.msra.mxu0 %v3257
    %3817 = vmatprep.subr.bf16.mxu0 %v3265
    %3818 = vmatpush1.bf16.msra.mxu0 %v3264
    %3819 = vmatprep.subr.bf16.mxu0 %v3272
    %3820 = vmatpush1.bf16.msra.mxu0 %v3271
    %3821 = vmatprep.subr.bf16.mxu0 %v3279
    %3822 = vmatpush1.bf16.msra.mxu0 %v3278
    %3823 = vmatprep.subr.bf16.mxu0 %v3286
    %3824 = vmatpush1.bf16.msra.mxu0 %v3285
    %3825 = vmatprep.subr.bf16.mxu0 %v3293
    %3826 = vmatpush1.bf16.msra.mxu0 %v3292
    %3827 = vmatprep.mubr.bf16.mxu0 %v2183
    %3828 = vmatmul.mubr.bf16.gmra.mrb[0].mxu0 %v2182
    %v3829 = vpop.f32.mrb[0].mxu0
    %v3830 = vadd.f32 %v2463, %v3829
    %v3831 = vpop.f32.mrb[0].mxu0
    %v3832 = vadd.f32 %v2467, %v3831
    %v3833 = vpop.f32.mrb[0].mxu0
    %v3834 = vpop.f32.mrb[0].mxu0
    %3835 = vdwg.mxu0
    %3836 = vmatprep.subr.bf16.mxu0 %v3300
    %3837 = vmatpush1.bf16.msra.mxu0 %v3299
    %3838 = vmatprep.subr.bf16.mxu0 %v3307
    %3839 = vmatpush1.bf16.msra.mxu0 %v3306
    %3840 = vmatprep.subr.bf16.mxu0 %v3314
    %3841 = vmatpush1.bf16.msra.mxu0 %v3313
    %3842 = vmatprep.subr.bf16.mxu0 %v3321
    %3843 = vmatpush1.bf16.msra.mxu0 %v3320
    %3844 = vmatprep.subr.bf16.mxu0 %v3328
    %3845 = vmatpush1.bf16.msra.mxu0 %v3327
    %3846 = vmatprep.subr.bf16.mxu0 %v3335
    %3847 = vmatpush1.bf16.msra.mxu0 %v3334
    %3848 = vmatprep.subr.bf16.mxu0 %v3342
    %3849 = vmatpush1.bf16.msra.mxu0 %v3341
    %3850 = vmatprep.subr.bf16.mxu0 %v3349
    %3851 = vmatpush1.bf16.msra.mxu0 %v3348
    %3852 = vmatprep.subr.bf16.mxu0 %v3356
    %3853 = vmatpush1.bf16.msra.mxu0 %v3355
    %3854 = vmatprep.subr.bf16.mxu0 %v3363
    %3855 = vmatpush1.bf16.msra.mxu0 %v3362
    %3856 = vmatprep.subr.bf16.mxu0 %v3370
    %3857 = vmatpush1.bf16.msra.mxu0 %v3369
    %3858 = vmatprep.subr.bf16.mxu0 %v3377
    %3859 = vmatpush1.bf16.msra.mxu0 %v3376
    %3860 = vmatprep.subr.bf16.mxu0 %v3384
    %3861 = vmatpush1.bf16.msra.mxu0 %v3383
    %3862 = vmatprep.subr.bf16.mxu0 %v3391
    %3863 = vmatpush1.bf16.msra.mxu0 %v3390
    %3864 = vmatprep.subr.bf16.mxu0 %v3398
    %3865 = vmatpush1.bf16.msra.mxu0 %v3397
    %3866 = vmatprep.subr.bf16.mxu0 %v3405
    %3867 = vmatpush1.bf16.msra.mxu0 %v3404
    %3868 = vmatprep.mubr.bf16.mxu0 %v2185
    %3869 = vmatmul.mubr.bf16.gmra.mrb[0].mxu0 %v2184
    %v3870 = vpop.f32.mrb[0].mxu0
    %v3871 = vadd.f32 %v3830, %v3870
    %v3872 = vpop.f32.mrb[0].mxu0
    %v3873 = vadd.f32 %v3832, %v3872
    %v3874 = vpop.f32.mrb[0].mxu0
    %v3875 = vpop.f32.mrb[0].mxu0
    %3876 = vdwg.mxu0
    %3877 = vmatprep.subr.bf16.mxu0 0
    %3878 = vmatpush1.bf16.msra.mxu0 %v3189
    %3879 = vmatprep.subr.bf16.mxu0 0
    %3880 = vmatpush1.bf16.msra.mxu0 %v3196
    %3881 = vmatprep.subr.bf16.mxu0 0
    %3882 = vmatpush1.bf16.msra.mxu0 %v3203
    %3883 = vmatprep.subr.bf16.mxu0 0
    %3884 = vmatpush1.bf16.msra.mxu0 %v3210
    %3885 = vmatprep.subr.bf16.mxu0 0
    %3886 = vmatpush1.bf16.msra.mxu0 %v3217
    %3887 = vmatprep.subr.bf16.mxu0 0
    %3888 = vmatpush1.bf16.msra.mxu0 %v3224
    %3889 = vmatprep.subr.bf16.mxu0 0
    %3890 = vmatpush1.bf16.msra.mxu0 %v3231
    %3891 = vmatprep.subr.bf16.mxu0 0
    %3892 = vmatpush1.bf16.msra.mxu0 %v3238
    %3893 = vmatprep.subr.bf16.mxu0 0
    %3894 = vmatpush1.bf16.msra.mxu0 %v3245
    %3895 = vmatprep.subr.bf16.mxu0 0
    %3896 = vmatpush1.bf16.msra.mxu0 %v3252
    %3897 = vmatprep.subr.bf16.mxu0 0
    %3898 = vmatpush1.bf16.msra.mxu0 %v3259
    %3899 = vmatprep.subr.bf16.mxu0 0
    %3900 = vmatpush1.bf16.msra.mxu0 %v3266
    %3901 = vmatprep.subr.bf16.mxu0 0
    %3902 = vmatpush1.bf16.msra.mxu0 %v3273
    %3903 = vmatprep.subr.bf16.mxu0 0
    %3904 = vmatpush1.bf16.msra.mxu0 %v3280
    %3905 = vmatprep.subr.bf16.mxu0 0
    %3906 = vmatpush1.bf16.msra.mxu0 %v3287
    %3907 = vmatprep.subr.bf16.mxu0 0
    %3908 = vmatpush1.bf16.msra.mxu0 %v3294
    %3909 = vmatprep.mubr.bf16.mxu0 %v2183
    %3910 = vmatmul.mubr.bf16.gmra.mrb[0].mxu0 %v2182
    %v3911 = vpop.f32.mrb[0].mxu0
    %v3912 = vadd.f32 %v2471, %v3911
    %v3913 = vpop.f32.mrb[0].mxu0
    %v3914 = vpop.f32.mrb[0].mxu0
    %v3915 = vpop.f32.mrb[0].mxu0
    %3916 = vdwg.mxu0
    %3917 = vmatprep.subr.bf16.mxu0 0
    %3918 = vmatpush1.bf16.msra.mxu0 %v3301
    %3919 = vmatprep.subr.bf16.mxu0 0
    %3920 = vmatpush1.bf16.msra.mxu0 %v3308
    %3921 = vmatprep.subr.bf16.mxu0 0
    %3922 = vmatpush1.bf16.msra.mxu0 %v3315
    %3923 = vmatprep.subr.bf16.mxu0 0
    %3924 = vmatpush1.bf16.msra.mxu0 %v3322
    %3925 = vmatprep.subr.bf16.mxu0 0
    %3926 = vmatpush1.bf16.msra.mxu0 %v3329
    %3927 = vmatprep.subr.bf16.mxu0 0
    %3928 = vmatpush1.bf16.msra.mxu0 %v3336
    %3929 = vmatprep.subr.bf16.mxu0 0
    %3930 = vmatpush1.bf16.msra.mxu0 %v3343
    %3931 = vmatprep.subr.bf16.mxu0 0
    %3932 = vmatpush1.bf16.msra.mxu0 %v3350
    %3933 = vmatprep.subr.bf16.mxu0 0
    %3934 = vmatpush1.bf16.msra.mxu0 %v3357
    %3935 = vmatprep.subr.bf16.mxu0 0
    %3936 = vmatpush1.bf16.msra.mxu0 %v3364
    %3937 = vmatprep.subr.bf16.mxu0 0
    %3938 = vmatpush1.bf16.msra.mxu0 %v3371
    %3939 = vmatprep.subr.bf16.mxu0 0
    %3940 = vmatpush1.bf16.msra.mxu0 %v3378
    %3941 = vmatprep.subr.bf16.mxu0 0
    %3942 = vmatpush1.bf16.msra.mxu0 %v3385
    %3943 = vmatprep.subr.bf16.mxu0 0
    %3944 = vmatpush1.bf16.msra.mxu0 %v3392
    %3945 = vmatprep.subr.bf16.mxu0 0
    %3946 = vmatpush1.bf16.msra.mxu0 %v3399
    %3947 = vmatprep.subr.bf16.mxu0 0
    %3948 = vmatpush1.bf16.msra.mxu0 %v3406
    %3949 = vmatprep.mubr.bf16.mxu0 %v2185
    %3950 = vmatmul.mubr.bf16.gmra.mrb[0].mxu0 %v2184
    %v3951 = vpop.f32.mrb[0].mxu0
    %v3952 = vadd.f32 %v3912, %v3951
    %v3953 = vpop.f32.mrb[0].mxu0
    %v3954 = vpop.f32.mrb[0].mxu0
    %v3955 = vpop.f32.mrb[0].mxu0
    %3956 = vdwg.mxu0
    %3957 = vst [vmem:[#allocation2] sm:$0xff] %v3707
    %3958 = vst [vmem:[#allocation2 + $0x8] sm:$0xff] %v3709
    %3959 = vst [vmem:[#allocation2 + $0x10] sm:$0xff] %v3789
    %3960 = vst [vmem:[#allocation2 + $0x18] sm:$0xff] %v3791
    %3961 = vst [vmem:[#allocation2 + $0x20] sm:$0xff] %v3871
    %3962 = vst [vmem:[#allocation2 + $0x28] sm:$0xff] %v3873
    %3963 = vst [vmem:[#allocation2 + $0x30] sm:$0xff] %v3952
    // Predicated region
    $region38: #{mlp_forward.1} parent=1 // pred_check
      _
    $region39: #{mlp_forward.1} parent=1 // pred_check_branch
      %3965 = sbr.rel (0) target = $region41
    $region40: #{mlp_forward.1} parent=1 // pred_region
      %s3967 = ssub.s32 896, 896
      %3968 = vsyncadd [#allocation3], %s3967
      %s3970 = sshll.u32 [#allocation2], 4
      %s3971 = int_to_ptr.vmem [resolvable:$true] %s3970
      %3973 = dma.vmem_to_hbm [thread:$0]  %s3971, 896, %s9, [#allocation3]
    $region41: #{mlp_forward.1} parent=1 // pred_fallthru
      _
    // Predicated region
    $region42: #{mlp_forward.1} parent=1 // pred_check
      _
    $region43: #{mlp_forward.1} parent=1 // pred_check_branch
      %3975 = sbr.rel (0) target = $region45
    $region44: #{mlp_forward.1} parent=1 // pred_region
      %3976 = dma.done [#allocation3], 896
    $region45: #{mlp_forward.1} parent=1 // pred_fallthru
      _
    %3977 = vsyncpa [#allocation3], 1

</llo_original>
